<compile_context>
chip_gen: v5e
topology: v5e:2x2
jax: 0.10.0
libtpu: 0.0.40
codegen_flags: <defaults>
</compile_context>

<pallas_src>
import jax
import jax.numpy as jnp
from jax import lax
from jax.experimental import pallas as pl
from jax.experimental.pallas import tpu as pltpu

CIN, COUT, K, STRIDE, PAD = 3, 3, 3, 2, 1


def _sigmoid(v):
    # v >= 0 here (post-ReLU), so d in (1, 2]: exp -> EUP, approx vrcp -> EUP,
    # one Newton step restores ~f32 accuracy with 2 cheap VALU ops.
    d = 1.0 + jnp.exp(-v)
    r = pl.reciprocal(d, approx=True)
    return r * (2.0 - d * r)


def _convt_relu_sigmoid_kernel(x_ref, w_ref, b_ref, o_ref):
    """Whole batch in a single invocation (no grid).

    x_ref: (N*Cin, H, W) f32 VMEM            -- raw (dense) input planes
    w_ref: (Cin*Cout*K*K,) f32 SMEM          -- ConvTranspose2d weight, natural
                                                (Cin, Cout, kh, kw) order, flat
    b_ref: (Cout,) f32 SMEM
    o_ref: (N*Cout*4, H, W) f32 VMEM         -- 4 = output parity phase
                                                (py*2 + px); odd phases only
                                                fill their valid (H-1 / W-1)
                                                region, the rest is cropped by
                                                the wrapper.
    """
    _, h, w = o_ref.shape
    n_img = x_ref.shape[0] // CIN

    # Deterministic output (unused strips of the odd phases get cropped anyway).
    o_ref[...] = jnp.zeros(o_ref.shape, o_ref.dtype)

    def wgt(ic, oc, kh, kw):
        return w_ref[((ic * COUT + oc) * K + kh) * K + kw]

    for n in range(n_img):
        # Phase accumulators (COUT each), initialised with the bias.
        acc_ee = [jnp.full((h, w), b_ref[oc], jnp.float32) for oc in range(COUT)]
        acc_eo = [jnp.full((h, w - 1), b_ref[oc], jnp.float32) for oc in range(COUT)]
        acc_oe = [jnp.full((h - 1, w), b_ref[oc], jnp.float32) for oc in range(COUT)]
        acc_oo = [jnp.full((h - 1, w - 1), b_ref[oc], jnp.float32) for oc in range(COUT)]

        for ic in range(CIN):
            x00 = x_ref[n * CIN + ic]          # x[qy,   qx  ]   (h,   w)
            xl = x00[:, 1:]                    # x[qy,   qx+1]   (h,   w-1)
            xu = x00[1:, :]                    # x[qy+1, qx  ]   (h-1, w)
            xul = x00[1:, 1:]                  # x[qy+1, qx+1]   (h-1, w-1)
            xc = x00[:, :w - 1]
            xr = x00[:h - 1, :]
            xrc = x00[:h - 1, :w - 1]
            xuc = x00[1:, :w - 1]
            xlr = x00[:h - 1, 1:]

            for oc in range(COUT):
                # out[2qy,   2qx  ] += x[qy,qx] * w[1,1]
                acc_ee[oc] = acc_ee[oc] + wgt(ic, oc, 1, 1) * x00
                # out[2qy,   2qx+1] += x[qy,qx+1]*w[1,0] + x[qy,qx]*w[1,2]
                acc_eo[oc] = (acc_eo[oc]
                              + wgt(ic, oc, 1, 0) * xl
                              + wgt(ic, oc, 1, 2) * xc)
                # out[2qy+1, 2qx  ] += x[qy+1,qx]*w[0,1] + x[qy,qx]*w[2,1]
                acc_oe[oc] = (acc_oe[oc]
                              + wgt(ic, oc, 0, 1) * xu
                              + wgt(ic, oc, 2, 1) * xr)
                # out[2qy+1, 2qx+1] += x[qy+1,qx+1]*w[0,0] + x[qy+1,qx]*w[0,2]
                #                     + x[qy,  qx+1]*w[2,0] + x[qy,  qx]*w[2,2]
                acc_oo[oc] = (acc_oo[oc]
                              + wgt(ic, oc, 0, 0) * xul
                              + wgt(ic, oc, 0, 2) * xuc
                              + wgt(ic, oc, 2, 0) * xlr
                              + wgt(ic, oc, 2, 2) * xrc)

        for oc in range(COUT):
            base = (n * COUT + oc) * 4
            o_ref[base + 0] = _sigmoid(jnp.maximum(acc_ee[oc], 0.0))
            o_ref[base + 1, :, :w - 1] = _sigmoid(jnp.maximum(acc_eo[oc], 0.0))
            o_ref[base + 2, :h - 1, :] = _sigmoid(jnp.maximum(acc_oe[oc], 0.0))
            o_ref[base + 3, :h - 1, :w - 1] = _sigmoid(jnp.maximum(acc_oo[oc], 0.0))


@jax.jit
def conv_transpose_relu_sigmoid(x, weight, bias):
    """x: (N, Cin, H, W); weight: (Cin, Cout, K, K) (PyTorch ConvTranspose2d
    layout); bias: (Cout,).  Returns sigmoid(relu(conv_transpose2d(x)))."""
    n, cin, h, w = x.shape
    cout = weight.shape[1]
    hout = (h - 1) * STRIDE - 2 * PAD + K     # = 2h - 1
    wout = (w - 1) * STRIDE - 2 * PAD + K     # = 2w - 1

    x3 = x.astype(jnp.float32).reshape(n * cin, h, w)        # free reshape
    wflat = weight.astype(jnp.float32).reshape(-1)           # natural order
    bflat = bias.astype(jnp.float32)

    out_ph = pl.pallas_call(
        _convt_relu_sigmoid_kernel,
        out_shape=jax.ShapeDtypeStruct((n * cout * 4, h, w), jnp.float32),
        in_specs=[
            pl.BlockSpec(memory_space=pltpu.MemorySpace.VMEM),
            pl.BlockSpec(memory_space=pltpu.MemorySpace.SMEM),
            pl.BlockSpec(memory_space=pltpu.MemorySpace.SMEM),
        ],
        out_specs=pl.BlockSpec(memory_space=pltpu.MemorySpace.VMEM),
    )(x3, wflat, bflat)

    # Interleave the 4 parity phases back into the (Hout, Wout) grid and crop
    # the (always-unused) last odd row/column.  Pure layout plumbing (~24 KB),
    # fused under jit.
    out_ph = out_ph.reshape(n, cout, 2, 2, h, w)
    out_full = jnp.transpose(out_ph, (0, 1, 4, 2, 5, 3)).reshape(
        n, cout, 2 * h, 2 * w)
    return out_full[:, :, :hout, :wout]


if __name__ == "__main__":
    key = jax.random.PRNGKey(0)
    kx, kw, kb = jax.random.split(key, 3)

    # Module fixes Cin=Cout=3, K=3; spatial per spec is 16x16; batch=2 to
    # exercise the batched (single-invocation) kernel.
    N, H, W = 2, 16, 16
    x = jax.random.normal(kx, (N, CIN, H, W), jnp.float32)
    weight = jax.random.normal(kw, (CIN, COUT, K, K), jnp.float32) * 0.1
    bias = jax.random.normal(kb, (COUT,), jnp.float32) * 0.1

    out = jax.block_until_ready(conv_transpose_relu_sigmoid(x, weight, bias))

    # Reference: transposed conv via lax.conv_general_dilated, then relu+sigmoid.
    wf = jnp.transpose(jnp.flip(weight, (2, 3)), (1, 0, 2, 3))
    pp = K - 1 - PAD
    ref = lax.conv_general_dilated(
        x, wf, window_strides=(1, 1),
        padding=((pp, pp), (pp, pp)),
        lhs_dilation=(STRIDE, STRIDE),
        dimension_numbers=('NCHW', 'OIHW', 'NCHW'))
    ref = jax.nn.sigmoid(jnp.maximum(ref + bias[None, :, None, None], 0.0))

    assert out.shape == (N, COUT, 31, 31), out.shape
    err = float(jnp.max(jnp.abs(out - ref)))
    assert jnp.allclose(out, ref, atol=1e-5), err
    print("KERNEL_OK")
</pallas_src>

<mosaic_0001>
module attributes {stable_mosaic.version = 11 : i64} {
  func.func @_convt_relu_sigmoid_kernel(%arg0: memref<6x16x16xf32, #tpu.memory_space<vmem>>, %arg1: memref<81xf32, #tpu.memory_space<smem>>, %arg2: memref<3xf32, #tpu.memory_space<smem>>, %arg3: memref<24x16x16xf32, #tpu.memory_space<vmem>>) attributes {dimension_semantics = [], scalar_prefetch = 0 : i64, scratch_operands = 0 : i64, tpu.core_type = #tpu.core_type<tc>} {
    %cst = arith.constant 0.000000e+00 : f32
    %0 = vector.broadcast %cst : f32 to vector<24x16x16xf32>
    %c0 = arith.constant 0 : index
    %c0_0 = arith.constant 0 : index
    %c0_1 = arith.constant 0 : index
    %1 = vector.load %arg3[%c0, %c0_0, %c0_1] : memref<24x16x16xf32, #tpu.memory_space<vmem>>, vector<24x16x16xf32>
    tpu.vector_store %arg3[%c0, %c0_0, %c0_1], %0 {strides = array<i32>} : memref<24x16x16xf32, #tpu.memory_space<vmem>>, vector<24x16x16xf32>,
    %c0_2 = arith.constant 0 : index
    %2 = memref.load %arg2[%c0_2] : memref<3xf32, #tpu.memory_space<smem>>
    %3 = vector.broadcast %2 : f32 to vector<16x16xf32>
    %c1 = arith.constant 1 : index
    %4 = memref.load %arg2[%c1] : memref<3xf32, #tpu.memory_space<smem>>
    %5 = vector.broadcast %4 : f32 to vector<16x16xf32>
    %c2 = arith.constant 2 : index
    %6 = memref.load %arg2[%c2] : memref<3xf32, #tpu.memory_space<smem>>
    %7 = vector.broadcast %6 : f32 to vector<16x16xf32>
    %c0_3 = arith.constant 0 : index
    %8 = memref.load %arg2[%c0_3] : memref<3xf32, #tpu.memory_space<smem>>
    %9 = vector.broadcast %8 : f32 to vector<16x15xf32>
    %c1_4 = arith.constant 1 : index
    %10 = memref.load %arg2[%c1_4] : memref<3xf32, #tpu.memory_space<smem>>
    %11 = vector.broadcast %10 : f32 to vector<16x15xf32>
    %c2_5 = arith.constant 2 : index
    %12 = memref.load %arg2[%c2_5] : memref<3xf32, #tpu.memory_space<smem>>
    %13 = vector.broadcast %12 : f32 to vector<16x15xf32>
    %c0_6 = arith.constant 0 : index
    %14 = memref.load %arg2[%c0_6] : memref<3xf32, #tpu.memory_space<smem>>
    %15 = vector.broadcast %14 : f32 to vector<15x16xf32>
    %c1_7 = arith.constant 1 : index
    %16 = memref.load %arg2[%c1_7] : memref<3xf32, #tpu.memory_space<smem>>
    %17 = vector.broadcast %16 : f32 to vector<15x16xf32>
    %c2_8 = arith.constant 2 : index
    %18 = memref.load %arg2[%c2_8] : memref<3xf32, #tpu.memory_space<smem>>
    %19 = vector.broadcast %18 : f32 to vector<15x16xf32>
    %c0_9 = arith.constant 0 : index
    %20 = memref.load %arg2[%c0_9] : memref<3xf32, #tpu.memory_space<smem>>
    %21 = vector.broadcast %20 : f32 to vector<15x15xf32>
    %c1_10 = arith.constant 1 : index
    %22 = memref.load %arg2[%c1_10] : memref<3xf32, #tpu.memory_space<smem>>
    %23 = vector.broadcast %22 : f32 to vector<15x15xf32>
    %c2_11 = arith.constant 2 : index
    %24 = memref.load %arg2[%c2_11] : memref<3xf32, #tpu.memory_space<smem>>
    %25 = vector.broadcast %24 : f32 to vector<15x15xf32>
    %c0_12 = arith.constant 0 : index
    %c0_13 = arith.constant 0 : index
    %c0_14 = arith.constant 0 : index
    %26 = vector.load %arg0[%c0_12, %c0_13, %c0_14] : memref<6x16x16xf32, #tpu.memory_space<vmem>>, vector<1x16x16xf32>
    %27 = vector.shape_cast %26 : vector<1x16x16xf32> to vector<16x16xf32>
    %28 = vector.extract_strided_slice %27 {offsets = [0, 1], sizes = [16, 15], strides = [1, 1]} : vector<16x16xf32> to vector<16x15xf32>
    %29 = vector.extract_strided_slice %27 {offsets = [1, 0], sizes = [15, 16], strides = [1, 1]} : vector<16x16xf32> to vector<15x16xf32>
    %30 = vector.extract_strided_slice %27 {offsets = [1, 1], sizes = [15, 15], strides = [1, 1]} : vector<16x16xf32> to vector<15x15xf32>
    %31 = vector.extract_strided_slice %27 {offsets = [0, 0], sizes = [16, 15], strides = [1, 1]} : vector<16x16xf32> to vector<16x15xf32>
    %32 = vector.extract_strided_slice %27 {offsets = [0, 0], sizes = [15, 16], strides = [1, 1]} : vector<16x16xf32> to vector<15x16xf32>
    %33 = vector.extract_strided_slice %27 {offsets = [0, 0], sizes = [15, 15], strides = [1, 1]} : vector<16x16xf32> to vector<15x15xf32>
    %34 = vector.extract_strided_slice %27 {offsets = [1, 0], sizes = [15, 15], strides = [1, 1]} : vector<16x16xf32> to vector<15x15xf32>
    %35 = vector.extract_strided_slice %27 {offsets = [0, 1], sizes = [15, 15], strides = [1, 1]} : vector<16x16xf32> to vector<15x15xf32>
    %c4 = arith.constant 4 : index
    %36 = memref.load %arg1[%c4] : memref<81xf32, #tpu.memory_space<smem>>
    %37 = vector.broadcast %36 : f32 to vector<16x16xf32>
    %38 = arith.mulf %37, %27 : vector<16x16xf32>
    %39 = arith.addf %3, %38 : vector<16x16xf32>
    %c3 = arith.constant 3 : index
    %40 = memref.load %arg1[%c3] : memref<81xf32, #tpu.memory_space<smem>>
    %41 = vector.broadcast %40 : f32 to vector<16x15xf32>
    %42 = arith.mulf %41, %28 : vector<16x15xf32>
    %43 = arith.addf %9, %42 : vector<16x15xf32>
    %c5 = arith.constant 5 : index
    %44 = memref.load %arg1[%c5] : memref<81xf32, #tpu.memory_space<smem>>
    %45 = vector.broadcast %44 : f32 to vector<16x15xf32>
    %46 = arith.mulf %45, %31 : vector<16x15xf32>
    %47 = arith.addf %43, %46 : vector<16x15xf32>
    %c1_15 = arith.constant 1 : index
    %48 = memref.load %arg1[%c1_15] : memref<81xf32, #tpu.memory_space<smem>>
    %49 = vector.broadcast %48 : f32 to vector<15x16xf32>
    %50 = arith.mulf %49, %29 : vector<15x16xf32>
    %51 = arith.addf %15, %50 : vector<15x16xf32>
    %c7 = arith.constant 7 : index
    %52 = memref.load %arg1[%c7] : memref<81xf32, #tpu.memory_space<smem>>
    %53 = vector.broadcast %52 : f32 to vector<15x16xf32>
    %54 = arith.mulf %53, %32 : vector<15x16xf32>
    %55 = arith.addf %51, %54 : vector<15x16xf32>
    %c0_16 = arith.constant 0 : index
    %56 = memref.load %arg1[%c0_16] : memref<81xf32, #tpu.memory_space<smem>>
    %57 = vector.broadcast %56 : f32 to vector<15x15xf32>
    %58 = arith.mulf %57, %30 : vector<15x15xf32>
    %59 = arith.addf %21, %58 : vector<15x15xf32>
    %c2_17 = arith.constant 2 : index
    %60 = memref.load %arg1[%c2_17] : memref<81xf32, #tpu.memory_space<smem>>
    %61 = vector.broadcast %60 : f32 to vector<15x15xf32>
    %62 = arith.mulf %61, %34 : vector<15x15xf32>
    %63 = arith.addf %59, %62 : vector<15x15xf32>
    %c6 = arith.constant 6 : index
    %64 = memref.load %arg1[%c6] : memref<81xf32, #tpu.memory_space<smem>>
    %65 = vector.broadcast %64 : f32 to vector<15x15xf32>
    %66 = arith.mulf %65, %35 : vector<15x15xf32>
    %67 = arith.addf %63, %66 : vector<15x15xf32>
    %c8 = arith.constant 8 : index
    %68 = memref.load %arg1[%c8] : memref<81xf32, #tpu.memory_space<smem>>
    %69 = vector.broadcast %68 : f32 to vector<15x15xf32>
    %70 = arith.mulf %69, %33 : vector<15x15xf32>
    %71 = arith.addf %67, %70 : vector<15x15xf32>
    %c13 = arith.constant 13 : index
    %72 = memref.load %arg1[%c13] : memref<81xf32, #tpu.memory_space<smem>>
    %73 = vector.broadcast %72 : f32 to vector<16x16xf32>
    %74 = arith.mulf %73, %27 : vector<16x16xf32>
    %75 = arith.addf %5, %74 : vector<16x16xf32>
    %c12 = arith.constant 12 : index
    %76 = memref.load %arg1[%c12] : memref<81xf32, #tpu.memory_space<smem>>
    %77 = vector.broadcast %76 : f32 to vector<16x15xf32>
    %78 = arith.mulf %77, %28 : vector<16x15xf32>
    %79 = arith.addf %11, %78 : vector<16x15xf32>
    %c14 = arith.constant 14 : index
    %80 = memref.load %arg1[%c14] : memref<81xf32, #tpu.memory_space<smem>>
    %81 = vector.broadcast %80 : f32 to vector<16x15xf32>
    %82 = arith.mulf %81, %31 : vector<16x15xf32>
    %83 = arith.addf %79, %82 : vector<16x15xf32>
    %c10 = arith.constant 10 : index
    %84 = memref.load %arg1[%c10] : memref<81xf32, #tpu.memory_space<smem>>
    %85 = vector.broadcast %84 : f32 to vector<15x16xf32>
    %86 = arith.mulf %85, %29 : vector<15x16xf32>
    %87 = arith.addf %17, %86 : vector<15x16xf32>
    %c16 = arith.constant 16 : index
    %88 = memref.load %arg1[%c16] : memref<81xf32, #tpu.memory_space<smem>>
    %89 = vector.broadcast %88 : f32 to vector<15x16xf32>
    %90 = arith.mulf %89, %32 : vector<15x16xf32>
    %91 = arith.addf %87, %90 : vector<15x16xf32>
    %c9 = arith.constant 9 : index
    %92 = memref.load %arg1[%c9] : memref<81xf32, #tpu.memory_space<smem>>
    %93 = vector.broadcast %92 : f32 to vector<15x15xf32>
    %94 = arith.mulf %93, %30 : vector<15x15xf32>
    %95 = arith.addf %23, %94 : vector<15x15xf32>
    %c11 = arith.constant 11 : index
    %96 = memref.load %arg1[%c11] : memref<81xf32, #tpu.memory_space<smem>>
    %97 = vector.broadcast %96 : f32 to vector<15x15xf32>
    %98 = arith.mulf %97, %34 : vector<15x15xf32>
    %99 = arith.addf %95, %98 : vector<15x15xf32>
    %c15 = arith.constant 15 : index
    %100 = memref.load %arg1[%c15] : memref<81xf32, #tpu.memory_space<smem>>
    %101 = vector.broadcast %100 : f32 to vector<15x15xf32>
    %102 = arith.mulf %101, %35 : vector<15x15xf32>
    %103 = arith.addf %99, %102 : vector<15x15xf32>
    %c17 = arith.constant 17 : index
    %104 = memref.load %arg1[%c17] : memref<81xf32, #tpu.memory_space<smem>>
    %105 = vector.broadcast %104 : f32 to vector<15x15xf32>
    %106 = arith.mulf %105, %33 : vector<15x15xf32>
    %107 = arith.addf %103, %106 : vector<15x15xf32>
    %c22 = arith.constant 22 : index
    %108 = memref.load %arg1[%c22] : memref<81xf32, #tpu.memory_space<smem>>
    %109 = vector.broadcast %108 : f32 to vector<16x16xf32>
    %110 = arith.mulf %109, %27 : vector<16x16xf32>
    %111 = arith.addf %7, %110 : vector<16x16xf32>
    %c21 = arith.constant 21 : index
    %112 = memref.load %arg1[%c21] : memref<81xf32, #tpu.memory_space<smem>>
    %113 = vector.broadcast %112 : f32 to vector<16x15xf32>
    %114 = arith.mulf %113, %28 : vector<16x15xf32>
    %115 = arith.addf %13, %114 : vector<16x15xf32>
    %c23 = arith.constant 23 : index
    %116 = memref.load %arg1[%c23] : memref<81xf32, #tpu.memory_space<smem>>
    %117 = vector.broadcast %116 : f32 to vector<16x15xf32>
    %118 = arith.mulf %117, %31 : vector<16x15xf32>
    %119 = arith.addf %115, %118 : vector<16x15xf32>
    %c19 = arith.constant 19 : index
    %120 = memref.load %arg1[%c19] : memref<81xf32, #tpu.memory_space<smem>>
    %121 = vector.broadcast %120 : f32 to vector<15x16xf32>
    %122 = arith.mulf %121, %29 : vector<15x16xf32>
    %123 = arith.addf %19, %122 : vector<15x16xf32>
    %c25 = arith.constant 25 : index
    %124 = memref.load %arg1[%c25] : memref<81xf32, #tpu.memory_space<smem>>
    %125 = vector.broadcast %124 : f32 to vector<15x16xf32>
    %126 = arith.mulf %125, %32 : vector<15x16xf32>
    %127 = arith.addf %123, %126 : vector<15x16xf32>
    %c18 = arith.constant 18 : index
    %128 = memref.load %arg1[%c18] : memref<81xf32, #tpu.memory_space<smem>>
    %129 = vector.broadcast %128 : f32 to vector<15x15xf32>
    %130 = arith.mulf %129, %30 : vector<15x15xf32>
    %131 = arith.addf %25, %130 : vector<15x15xf32>
    %c20 = arith.constant 20 : index
    %132 = memref.load %arg1[%c20] : memref<81xf32, #tpu.memory_space<smem>>
    %133 = vector.broadcast %132 : f32 to vector<15x15xf32>
    %134 = arith.mulf %133, %34 : vector<15x15xf32>
    %135 = arith.addf %131, %134 : vector<15x15xf32>
    %c24 = arith.constant 24 : index
    %136 = memref.load %arg1[%c24] : memref<81xf32, #tpu.memory_space<smem>>
    %137 = vector.broadcast %136 : f32 to vector<15x15xf32>
    %138 = arith.mulf %137, %35 : vector<15x15xf32>
    %139 = arith.addf %135, %138 : vector<15x15xf32>
    %c26 = arith.constant 26 : index
    %140 = memref.load %arg1[%c26] : memref<81xf32, #tpu.memory_space<smem>>
    %141 = vector.broadcast %140 : f32 to vector<15x15xf32>
    %142 = arith.mulf %141, %33 : vector<15x15xf32>
    %143 = arith.addf %139, %142 : vector<15x15xf32>
    %c1_18 = arith.constant 1 : index
    %c0_19 = arith.constant 0 : index
    %c0_20 = arith.constant 0 : index
    %144 = vector.load %arg0[%c1_18, %c0_19, %c0_20] : memref<6x16x16xf32, #tpu.memory_space<vmem>>, vector<1x16x16xf32>
    %145 = vector.shape_cast %144 : vector<1x16x16xf32> to vector<16x16xf32>
    %146 = vector.extract_strided_slice %145 {offsets = [0, 1], sizes = [16, 15], strides = [1, 1]} : vector<16x16xf32> to vector<16x15xf32>
    %147 = vector.extract_strided_slice %145 {offsets = [1, 0], sizes = [15, 16], strides = [1, 1]} : vector<16x16xf32> to vector<15x16xf32>
    %148 = vector.extract_strided_slice %145 {offsets = [1, 1], sizes = [15, 15], strides = [1, 1]} : vector<16x16xf32> to vector<15x15xf32>
    %149 = vector.extract_strided_slice %145 {offsets = [0, 0], sizes = [16, 15], strides = [1, 1]} : vector<16x16xf32> to vector<16x15xf32>
    %150 = vector.extract_strided_slice %145 {offsets = [0, 0], sizes = [15, 16], strides = [1, 1]} : vector<16x16xf32> to vector<15x16xf32>
    %151 = vector.extract_strided_slice %145 {offsets = [0, 0], sizes = [15, 15], strides = [1, 1]} : vector<16x16xf32> to vector<15x15xf32>
    %152 = vector.extract_strided_slice %145 {offsets = [1, 0], sizes = [15, 15], strides = [1, 1]} : vector<16x16xf32> to vector<15x15xf32>
    %153 = vector.extract_strided_slice %145 {offsets = [0, 1], sizes = [15, 15], strides = [1, 1]} : vector<16x16xf32> to vector<15x15xf32>
    %c31 = arith.constant 31 : index
    %154 = memref.load %arg1[%c31] : memref<81xf32, #tpu.memory_space<smem>>
    %155 = vector.broadcast %154 : f32 to vector<16x16xf32>
    %156 = arith.mulf %155, %145 : vector<16x16xf32>
    %157 = arith.addf %39, %156 : vector<16x16xf32>
    %c30 = arith.constant 30 : index
    %158 = memref.load %arg1[%c30] : memref<81xf32, #tpu.memory_space<smem>>
    %159 = vector.broadcast %158 : f32 to vector<16x15xf32>
    %160 = arith.mulf %159, %146 : vector<16x15xf32>
    %161 = arith.addf %47, %160 : vector<16x15xf32>
    %c32 = arith.constant 32 : index
    %162 = memref.load %arg1[%c32] : memref<81xf32, #tpu.memory_space<smem>>
    %163 = vector.broadcast %162 : f32 to vector<16x15xf32>
    %164 = arith.mulf %163, %149 : vector<16x15xf32>
    %165 = arith.addf %161, %164 : vector<16x15xf32>
    %c28 = arith.constant 28 : index
    %166 = memref.load %arg1[%c28] : memref<81xf32, #tpu.memory_space<smem>>
    %167 = vector.broadcast %166 : f32 to vector<15x16xf32>
    %168 = arith.mulf %167, %147 : vector<15x16xf32>
    %169 = arith.addf %55, %168 : vector<15x16xf32>
    %c34 = arith.constant 34 : index
    %170 = memref.load %arg1[%c34] : memref<81xf32, #tpu.memory_space<smem>>
    %171 = vector.broadcast %170 : f32 to vector<15x16xf32>
    %172 = arith.mulf %171, %150 : vector<15x16xf32>
    %173 = arith.addf %169, %172 : vector<15x16xf32>
    %c27 = arith.constant 27 : index
    %174 = memref.load %arg1[%c27] : memref<81xf32, #tpu.memory_space<smem>>
    %175 = vector.broadcast %174 : f32 to vector<15x15xf32>
    %176 = arith.mulf %175, %148 : vector<15x15xf32>
    %177 = arith.addf %71, %176 : vector<15x15xf32>
    %c29 = arith.constant 29 : index
    %178 = memref.load %arg1[%c29] : memref<81xf32, #tpu.memory_space<smem>>
    %179 = vector.broadcast %178 : f32 to vector<15x15xf32>
    %180 = arith.mulf %179, %152 : vector<15x15xf32>
    %181 = arith.addf %177, %180 : vector<15x15xf32>
    %c33 = arith.constant 33 : index
    %182 = memref.load %arg1[%c33] : memref<81xf32, #tpu.memory_space<smem>>
    %183 = vector.broadcast %182 : f32 to vector<15x15xf32>
    %184 = arith.mulf %183, %153 : vector<15x15xf32>
    %185 = arith.addf %181, %184 : vector<15x15xf32>
    %c35 = arith.constant 35 : index
    %186 = memref.load %arg1[%c35] : memref<81xf32, #tpu.memory_space<smem>>
    %187 = vector.broadcast %186 : f32 to vector<15x15xf32>
    %188 = arith.mulf %187, %151 : vector<15x15xf32>
    %189 = arith.addf %185, %188 : vector<15x15xf32>
    %c40 = arith.constant 40 : index
    %190 = memref.load %arg1[%c40] : memref<81xf32, #tpu.memory_space<smem>>
    %191 = vector.broadcast %190 : f32 to vector<16x16xf32>
    %192 = arith.mulf %191, %145 : vector<16x16xf32>
    %193 = arith.addf %75, %192 : vector<16x16xf32>
    %c39 = arith.constant 39 : index
    %194 = memref.load %arg1[%c39] : memref<81xf32, #tpu.memory_space<smem>>
    %195 = vector.broadcast %194 : f32 to vector<16x15xf32>
    %196 = arith.mulf %195, %146 : vector<16x15xf32>
    %197 = arith.addf %83, %196 : vector<16x15xf32>
    %c41 = arith.constant 41 : index
    %198 = memref.load %arg1[%c41] : memref<81xf32, #tpu.memory_space<smem>>
    %199 = vector.broadcast %198 : f32 to vector<16x15xf32>
    %200 = arith.mulf %199, %149 : vector<16x15xf32>
    %201 = arith.addf %197, %200 : vector<16x15xf32>
    %c37 = arith.constant 37 : index
    %202 = memref.load %arg1[%c37] : memref<81xf32, #tpu.memory_space<smem>>
    %203 = vector.broadcast %202 : f32 to vector<15x16xf32>
    %204 = arith.mulf %203, %147 : vector<15x16xf32>
    %205 = arith.addf %91, %204 : vector<15x16xf32>
    %c43 = arith.constant 43 : index
    %206 = memref.load %arg1[%c43] : memref<81xf32, #tpu.memory_space<smem>>
    %207 = vector.broadcast %206 : f32 to vector<15x16xf32>
    %208 = arith.mulf %207, %150 : vector<15x16xf32>
    %209 = arith.addf %205, %208 : vector<15x16xf32>
    %c36 = arith.constant 36 : index
    %210 = memref.load %arg1[%c36] : memref<81xf32, #tpu.memory_space<smem>>
    %211 = vector.broadcast %210 : f32 to vector<15x15xf32>
    %212 = arith.mulf %211, %148 : vector<15x15xf32>
    %213 = arith.addf %107, %212 : vector<15x15xf32>
    %c38 = arith.constant 38 : index
    %214 = memref.load %arg1[%c38] : memref<81xf32, #tpu.memory_space<smem>>
    %215 = vector.broadcast %214 : f32 to vector<15x15xf32>
    %216 = arith.mulf %215, %152 : vector<15x15xf32>
    %217 = arith.addf %213, %216 : vector<15x15xf32>
    %c42 = arith.constant 42 : index
    %218 = memref.load %arg1[%c42] : memref<81xf32, #tpu.memory_space<smem>>
    %219 = vector.broadcast %218 : f32 to vector<15x15xf32>
    %220 = arith.mulf %219, %153 : vector<15x15xf32>
    %221 = arith.addf %217, %220 : vector<15x15xf32>
    %c44 = arith.constant 44 : index
    %222 = memref.load %arg1[%c44] : memref<81xf32, #tpu.memory_space<smem>>
    %223 = vector.broadcast %222 : f32 to vector<15x15xf32>
    %224 = arith.mulf %223, %151 : vector<15x15xf32>
    %225 = arith.addf %221, %224 : vector<15x15xf32>
    %c49 = arith.constant 49 : index
    %226 = memref.load %arg1[%c49] : memref<81xf32, #tpu.memory_space<smem>>
    %227 = vector.broadcast %226 : f32 to vector<16x16xf32>
    %228 = arith.mulf %227, %145 : vector<16x16xf32>
    %229 = arith.addf %111, %228 : vector<16x16xf32>
    %c48 = arith.constant 48 : index
    %230 = memref.load %arg1[%c48] : memref<81xf32, #tpu.memory_space<smem>>
    %231 = vector.broadcast %230 : f32 to vector<16x15xf32>
    %232 = arith.mulf %231, %146 : vector<16x15xf32>
    %233 = arith.addf %119, %232 : vector<16x15xf32>
    %c50 = arith.constant 50 : index
    %234 = memref.load %arg1[%c50] : memref<81xf32, #tpu.memory_space<smem>>
    %235 = vector.broadcast %234 : f32 to vector<16x15xf32>
    %236 = arith.mulf %235, %149 : vector<16x15xf32>
    %237 = arith.addf %233, %236 : vector<16x15xf32>
    %c46 = arith.constant 46 : index
    %238 = memref.load %arg1[%c46] : memref<81xf32, #tpu.memory_space<smem>>
    %239 = vector.broadcast %238 : f32 to vector<15x16xf32>
    %240 = arith.mulf %239, %147 : vector<15x16xf32>
    %241 = arith.addf %127, %240 : vector<15x16xf32>
    %c52 = arith.constant 52 : index
    %242 = memref.load %arg1[%c52] : memref<81xf32, #tpu.memory_space<smem>>
    %243 = vector.broadcast %242 : f32 to vector<15x16xf32>
    %244 = arith.mulf %243, %150 : vector<15x16xf32>
    %245 = arith.addf %241, %244 : vector<15x16xf32>
    %c45 = arith.constant 45 : index
    %246 = memref.load %arg1[%c45] : memref<81xf32, #tpu.memory_space<smem>>
    %247 = vector.broadcast %246 : f32 to vector<15x15xf32>
    %248 = arith.mulf %247, %148 : vector<15x15xf32>
    %249 = arith.addf %143, %248 : vector<15x15xf32>
    %c47 = arith.constant 47 : index
    %250 = memref.load %arg1[%c47] : memref<81xf32, #tpu.memory_space<smem>>
    %251 = vector.broadcast %250 : f32 to vector<15x15xf32>
    %252 = arith.mulf %251, %152 : vector<15x15xf32>
    %253 = arith.addf %249, %252 : vector<15x15xf32>
    %c51 = arith.constant 51 : index
    %254 = memref.load %arg1[%c51] : memref<81xf32, #tpu.memory_space<smem>>
    %255 = vector.broadcast %254 : f32 to vector<15x15xf32>
    %256 = arith.mulf %255, %153 : vector<15x15xf32>
    %257 = arith.addf %253, %256 : vector<15x15xf32>
    %c53 = arith.constant 53 : index
    %258 = memref.load %arg1[%c53] : memref<81xf32, #tpu.memory_space<smem>>
    %259 = vector.broadcast %258 : f32 to vector<15x15xf32>
    %260 = arith.mulf %259, %151 : vector<15x15xf32>
    %261 = arith.addf %257, %260 : vector<15x15xf32>
    %c2_21 = arith.constant 2 : index
    %c0_22 = arith.constant 0 : index
    %c0_23 = arith.constant 0 : index
    %262 = vector.load %arg0[%c2_21, %c0_22, %c0_23] : memref<6x16x16xf32, #tpu.memory_space<vmem>>, vector<1x16x16xf32>
    %263 = vector.shape_cast %262 : vector<1x16x16xf32> to vector<16x16xf32>
    %264 = vector.extract_strided_slice %263 {offsets = [0, 1], sizes = [16, 15], strides = [1, 1]} : vector<16x16xf32> to vector<16x15xf32>
    %265 = vector.extract_strided_slice %263 {offsets = [1, 0], sizes = [15, 16], strides = [1, 1]} : vector<16x16xf32> to vector<15x16xf32>
    %266 = vector.extract_strided_slice %263 {offsets = [1, 1], sizes = [15, 15], strides = [1, 1]} : vector<16x16xf32> to vector<15x15xf32>
    %267 = vector.extract_strided_slice %263 {offsets = [0, 0], sizes = [16, 15], strides = [1, 1]} : vector<16x16xf32> to vector<16x15xf32>
    %268 = vector.extract_strided_slice %263 {offsets = [0, 0], sizes = [15, 16], strides = [1, 1]} : vector<16x16xf32> to vector<15x16xf32>
    %269 = vector.extract_strided_slice %263 {offsets = [0, 0], sizes = [15, 15], strides = [1, 1]} : vector<16x16xf32> to vector<15x15xf32>
    %270 = vector.extract_strided_slice %263 {offsets = [1, 0], sizes = [15, 15], strides = [1, 1]} : vector<16x16xf32> to vector<15x15xf32>
    %271 = vector.extract_strided_slice %263 {offsets = [0, 1], sizes = [15, 15], strides = [1, 1]} : vector<16x16xf32> to vector<15x15xf32>
    %c58 = arith.constant 58 : index
    %272 = memref.load %arg1[%c58] : memref<81xf32, #tpu.memory_space<smem>>
    %273 = vector.broadcast %272 : f32 to vector<16x16xf32>
    %274 = arith.mulf %273, %263 : vector<16x16xf32>
    %275 = arith.addf %157, %274 : vector<16x16xf32>
    %c57 = arith.constant 57 : index
    %276 = memref.load %arg1[%c57] : memref<81xf32, #tpu.memory_space<smem>>
    %277 = vector.broadcast %276 : f32 to vector<16x15xf32>
    %278 = arith.mulf %277, %264 : vector<16x15xf32>
    %279 = arith.addf %165, %278 : vector<16x15xf32>
    %c59 = arith.constant 59 : index
    %280 = memref.load %arg1[%c59] : memref<81xf32, #tpu.memory_space<smem>>
    %281 = vector.broadcast %280 : f32 to vector<16x15xf32>
    %282 = arith.mulf %281, %267 : vector<16x15xf32>
    %283 = arith.addf %279, %282 : vector<16x15xf32>
    %c55 = arith.constant 55 : index
    %284 = memref.load %arg1[%c55] : memref<81xf32, #tpu.memory_space<smem>>
    %285 = vector.broadcast %284 : f32 to vector<15x16xf32>
    %286 = arith.mulf %285, %265 : vector<15x16xf32>
    %287 = arith.addf %173, %286 : vector<15x16xf32>
    %c61 = arith.constant 61 : index
    %288 = memref.load %arg1[%c61] : memref<81xf32, #tpu.memory_space<smem>>
    %289 = vector.broadcast %288 : f32 to vector<15x16xf32>
    %290 = arith.mulf %289, %268 : vector<15x16xf32>
    %291 = arith.addf %287, %290 : vector<15x16xf32>
    %c54 = arith.constant 54 : index
    %292 = memref.load %arg1[%c54] : memref<81xf32, #tpu.memory_space<smem>>
    %293 = vector.broadcast %292 : f32 to vector<15x15xf32>
    %294 = arith.mulf %293, %266 : vector<15x15xf32>
    %295 = arith.addf %189, %294 : vector<15x15xf32>
    %c56 = arith.constant 56 : index
    %296 = memref.load %arg1[%c56] : memref<81xf32, #tpu.memory_space<smem>>
    %297 = vector.broadcast %296 : f32 to vector<15x15xf32>
    %298 = arith.mulf %297, %270 : vector<15x15xf32>
    %299 = arith.addf %295, %298 : vector<15x15xf32>
    %c60 = arith.constant 60 : index
    %300 = memref.load %arg1[%c60] : memref<81xf32, #tpu.memory_space<smem>>
    %301 = vector.broadcast %300 : f32 to vector<15x15xf32>
    %302 = arith.mulf %301, %271 : vector<15x15xf32>
    %303 = arith.addf %299, %302 : vector<15x15xf32>
    %c62 = arith.constant 62 : index
    %304 = memref.load %arg1[%c62] : memref<81xf32, #tpu.memory_space<smem>>
    %305 = vector.broadcast %304 : f32 to vector<15x15xf32>
    %306 = arith.mulf %305, %269 : vector<15x15xf32>
    %307 = arith.addf %303, %306 : vector<15x15xf32>
    %c67 = arith.constant 67 : index
    %308 = memref.load %arg1[%c67] : memref<81xf32, #tpu.memory_space<smem>>
    %309 = vector.broadcast %308 : f32 to vector<16x16xf32>
    %310 = arith.mulf %309, %263 : vector<16x16xf32>
    %311 = arith.addf %193, %310 : vector<16x16xf32>
    %c66 = arith.constant 66 : index
    %312 = memref.load %arg1[%c66] : memref<81xf32, #tpu.memory_space<smem>>
    %313 = vector.broadcast %312 : f32 to vector<16x15xf32>
    %314 = arith.mulf %313, %264 : vector<16x15xf32>
    %315 = arith.addf %201, %314 : vector<16x15xf32>
    %c68 = arith.constant 68 : index
    %316 = memref.load %arg1[%c68] : memref<81xf32, #tpu.memory_space<smem>>
    %317 = vector.broadcast %316 : f32 to vector<16x15xf32>
    %318 = arith.mulf %317, %267 : vector<16x15xf32>
    %319 = arith.addf %315, %318 : vector<16x15xf32>
    %c64 = arith.constant 64 : index
    %320 = memref.load %arg1[%c64] : memref<81xf32, #tpu.memory_space<smem>>
    %321 = vector.broadcast %320 : f32 to vector<15x16xf32>
    %322 = arith.mulf %321, %265 : vector<15x16xf32>
    %323 = arith.addf %209, %322 : vector<15x16xf32>
    %c70 = arith.constant 70 : index
    %324 = memref.load %arg1[%c70] : memref<81xf32, #tpu.memory_space<smem>>
    %325 = vector.broadcast %324 : f32 to vector<15x16xf32>
    %326 = arith.mulf %325, %268 : vector<15x16xf32>
    %327 = arith.addf %323, %326 : vector<15x16xf32>
    %c63 = arith.constant 63 : index
    %328 = memref.load %arg1[%c63] : memref<81xf32, #tpu.memory_space<smem>>
    %329 = vector.broadcast %328 : f32 to vector<15x15xf32>
    %330 = arith.mulf %329, %266 : vector<15x15xf32>
    %331 = arith.addf %225, %330 : vector<15x15xf32>
    %c65 = arith.constant 65 : index
    %332 = memref.load %arg1[%c65] : memref<81xf32, #tpu.memory_space<smem>>
    %333 = vector.broadcast %332 : f32 to vector<15x15xf32>
    %334 = arith.mulf %333, %270 : vector<15x15xf32>
    %335 = arith.addf %331, %334 : vector<15x15xf32>
    %c69 = arith.constant 69 : index
    %336 = memref.load %arg1[%c69] : memref<81xf32, #tpu.memory_space<smem>>
    %337 = vector.broadcast %336 : f32 to vector<15x15xf32>
    %338 = arith.mulf %337, %271 : vector<15x15xf32>
    %339 = arith.addf %335, %338 : vector<15x15xf32>
    %c71 = arith.constant 71 : index
    %340 = memref.load %arg1[%c71] : memref<81xf32, #tpu.memory_space<smem>>
    %341 = vector.broadcast %340 : f32 to vector<15x15xf32>
    %342 = arith.mulf %341, %269 : vector<15x15xf32>
    %343 = arith.addf %339, %342 : vector<15x15xf32>
    %c76 = arith.constant 76 : index
    %344 = memref.load %arg1[%c76] : memref<81xf32, #tpu.memory_space<smem>>
    %345 = vector.broadcast %344 : f32 to vector<16x16xf32>
    %346 = arith.mulf %345, %263 : vector<16x16xf32>
    %347 = arith.addf %229, %346 : vector<16x16xf32>
    %c75 = arith.constant 75 : index
    %348 = memref.load %arg1[%c75] : memref<81xf32, #tpu.memory_space<smem>>
    %349 = vector.broadcast %348 : f32 to vector<16x15xf32>
    %350 = arith.mulf %349, %264 : vector<16x15xf32>
    %351 = arith.addf %237, %350 : vector<16x15xf32>
    %c77 = arith.constant 77 : index
    %352 = memref.load %arg1[%c77] : memref<81xf32, #tpu.memory_space<smem>>
    %353 = vector.broadcast %352 : f32 to vector<16x15xf32>
    %354 = arith.mulf %353, %267 : vector<16x15xf32>
    %355 = arith.addf %351, %354 : vector<16x15xf32>
    %c73 = arith.constant 73 : index
    %356 = memref.load %arg1[%c73] : memref<81xf32, #tpu.memory_space<smem>>
    %357 = vector.broadcast %356 : f32 to vector<15x16xf32>
    %358 = arith.mulf %357, %265 : vector<15x16xf32>
    %359 = arith.addf %245, %358 : vector<15x16xf32>
    %c79 = arith.constant 79 : index
    %360 = memref.load %arg1[%c79] : memref<81xf32, #tpu.memory_space<smem>>
    %361 = vector.broadcast %360 : f32 to vector<15x16xf32>
    %362 = arith.mulf %361, %268 : vector<15x16xf32>
    %363 = arith.addf %359, %362 : vector<15x16xf32>
    %c72 = arith.constant 72 : index
    %364 = memref.load %arg1[%c72] : memref<81xf32, #tpu.memory_space<smem>>
    %365 = vector.broadcast %364 : f32 to vector<15x15xf32>
    %366 = arith.mulf %365, %266 : vector<15x15xf32>
    %367 = arith.addf %261, %366 : vector<15x15xf32>
    %c74 = arith.constant 74 : index
    %368 = memref.load %arg1[%c74] : memref<81xf32, #tpu.memory_space<smem>>
    %369 = vector.broadcast %368 : f32 to vector<15x15xf32>
    %370 = arith.mulf %369, %270 : vector<15x15xf32>
    %371 = arith.addf %367, %370 : vector<15x15xf32>
    %c78 = arith.constant 78 : index
    %372 = memref.load %arg1[%c78] : memref<81xf32, #tpu.memory_space<smem>>
    %373 = vector.broadcast %372 : f32 to vector<15x15xf32>
    %374 = arith.mulf %373, %271 : vector<15x15xf32>
    %375 = arith.addf %371, %374 : vector<15x15xf32>
    %c80 = arith.constant 80 : index
    %376 = memref.load %arg1[%c80] : memref<81xf32, #tpu.memory_space<smem>>
    %377 = vector.broadcast %376 : f32 to vector<15x15xf32>
    %378 = arith.mulf %377, %269 : vector<15x15xf32>
    %379 = arith.addf %375, %378 : vector<15x15xf32>
    %cst_24 = arith.constant 0.000000e+00 : f32
    %380 = vector.broadcast %cst_24 : f32 to vector<16x16xf32>
    %381 = arith.maximumf %275, %380 : vector<16x16xf32>
    %cst_25 = arith.constant 0.000000e+00 : f32
    %382 = vector.broadcast %cst_25 : f32 to vector<16x16xf32>
    %383 = arith.subf %382, %381 : vector<16x16xf32>
    %384 = math.exp %383 : vector<16x16xf32>
    %cst_26 = arith.constant 1.000000e+00 : f32
    %385 = vector.broadcast %cst_26 : f32 to vector<16x16xf32>
    %386 = arith.addf %385, %384 : vector<16x16xf32>
    %387 = tpu.reciprocal %386 {approx = true} : vector<16x16xf32> -> vector<16x16xf32>
    %388 = arith.mulf %386, %387 : vector<16x16xf32>
    %cst_27 = arith.constant 2.000000e+00 : f32
    %389 = vector.broadcast %cst_27 : f32 to vector<16x16xf32>
    %390 = arith.subf %389, %388 : vector<16x16xf32>
    %391 = arith.mulf %387, %390 : vector<16x16xf32>
    %c0_28 = arith.constant 0 : index
    %c0_29 = arith.constant 0 : index
    %c0_30 = arith.constant 0 : index
    %392 = vector.load %arg3[%c0_28, %c0_29, %c0_30] : memref<24x16x16xf32, #tpu.memory_space<vmem>>, vector<1x16x16xf32>
    %393 = vector.shape_cast %392 : vector<1x16x16xf32> to vector<16x16xf32>
    %394 = vector.shape_cast %391 : vector<16x16xf32> to vector<1x16x16xf32>
    tpu.vector_store %arg3[%c0_28, %c0_29, %c0_30], %394 {strides = array<i32>} : memref<24x16x16xf32, #tpu.memory_space<vmem>>, vector<1x16x16xf32>,
    %cst_31 = arith.constant 0.000000e+00 : f32
    %395 = vector.broadcast %cst_31 : f32 to vector<16x15xf32>
    %396 = arith.maximumf %283, %395 : vector<16x15xf32>
    %cst_32 = arith.constant 0.000000e+00 : f32
    %397 = vector.broadcast %cst_32 : f32 to vector<16x15xf32>
    %398 = arith.subf %397, %396 : vector<16x15xf32>
    %399 = math.exp %398 : vector<16x15xf32>
    %cst_33 = arith.constant 1.000000e+00 : f32
    %400 = vector.broadcast %cst_33 : f32 to vector<16x15xf32>
    %401 = arith.addf %400, %399 : vector<16x15xf32>
    %402 = tpu.reciprocal %401 {approx = true} : vector<16x15xf32> -> vector<16x15xf32>
    %403 = arith.mulf %401, %402 : vector<16x15xf32>
    %cst_34 = arith.constant 2.000000e+00 : f32
    %404 = vector.broadcast %cst_34 : f32 to vector<16x15xf32>
    %405 = arith.subf %404, %403 : vector<16x15xf32>
    %406 = arith.mulf %402, %405 : vector<16x15xf32>
    %c1_35 = arith.constant 1 : index
    %c0_36 = arith.constant 0 : index
    %c0_37 = arith.constant 0 : index
    %407 = vector.load %arg3[%c1_35, %c0_36, %c0_37] : memref<24x16x16xf32, #tpu.memory_space<vmem>>, vector<1x16x15xf32>
    %408 = vector.shape_cast %407 : vector<1x16x15xf32> to vector<16x15xf32>
    %409 = vector.shape_cast %406 : vector<16x15xf32> to vector<1x16x15xf32>
    tpu.vector_store %arg3[%c1_35, %c0_36, %c0_37], %409 {strides = array<i32>} : memref<24x16x16xf32, #tpu.memory_space<vmem>>, vector<1x16x15xf32>,
    %cst_38 = arith.constant 0.000000e+00 : f32
    %410 = vector.broadcast %cst_38 : f32 to vector<15x16xf32>
    %411 = arith.maximumf %291, %410 : vector<15x16xf32>
    %cst_39 = arith.constant 0.000000e+00 : f32
    %412 = vector.broadcast %cst_39 : f32 to vector<15x16xf32>
    %413 = arith.subf %412, %411 : vector<15x16xf32>
    %414 = math.exp %413 : vector<15x16xf32>
    %cst_40 = arith.constant 1.000000e+00 : f32
    %415 = vector.broadcast %cst_40 : f32 to vector<15x16xf32>
    %416 = arith.addf %415, %414 : vector<15x16xf32>
    %417 = tpu.reciprocal %416 {approx = true} : vector<15x16xf32> -> vector<15x16xf32>
    %418 = arith.mulf %416, %417 : vector<15x16xf32>
    %cst_41 = arith.constant 2.000000e+00 : f32
    %419 = vector.broadcast %cst_41 : f32 to vector<15x16xf32>
    %420 = arith.subf %419, %418 : vector<15x16xf32>
    %421 = arith.mulf %417, %420 : vector<15x16xf32>
    %c2_42 = arith.constant 2 : index
    %c0_43 = arith.constant 0 : index
    %c0_44 = arith.constant 0 : index
    %422 = vector.load %arg3[%c2_42, %c0_43, %c0_44] : memref<24x16x16xf32, #tpu.memory_space<vmem>>, vector<1x15x16xf32>
    %423 = vector.shape_cast %422 : vector<1x15x16xf32> to vector<15x16xf32>
    %424 = vector.shape_cast %421 : vector<15x16xf32> to vector<1x15x16xf32>
    tpu.vector_store %arg3[%c2_42, %c0_43, %c0_44], %424 {strides = array<i32>} : memref<24x16x16xf32, #tpu.memory_space<vmem>>, vector<1x15x16xf32>,
    %cst_45 = arith.constant 0.000000e+00 : f32
    %425 = vector.broadcast %cst_45 : f32 to vector<15x15xf32>
    %426 = arith.maximumf %307, %425 : vector<15x15xf32>
    %cst_46 = arith.constant 0.000000e+00 : f32
    %427 = vector.broadcast %cst_46 : f32 to vector<15x15xf32>
    %428 = arith.subf %427, %426 : vector<15x15xf32>
    %429 = math.exp %428 : vector<15x15xf32>
    %cst_47 = arith.constant 1.000000e+00 : f32
    %430 = vector.broadcast %cst_47 : f32 to vector<15x15xf32>
    %431 = arith.addf %430, %429 : vector<15x15xf32>
    %432 = tpu.reciprocal %431 {approx = true} : vector<15x15xf32> -> vector<15x15xf32>
    %433 = arith.mulf %431, %432 : vector<15x15xf32>
    %cst_48 = arith.constant 2.000000e+00 : f32
    %434 = vector.broadcast %cst_48 : f32 to vector<15x15xf32>
    %435 = arith.subf %434, %433 : vector<15x15xf32>
    %436 = arith.mulf %432, %435 : vector<15x15xf32>
    %c3_49 = arith.constant 3 : index
    %c0_50 = arith.constant 0 : index
    %c0_51 = arith.constant 0 : index
    %437 = vector.load %arg3[%c3_49, %c0_50, %c0_51] : memref<24x16x16xf32, #tpu.memory_space<vmem>>, vector<1x15x15xf32>
    %438 = vector.shape_cast %437 : vector<1x15x15xf32> to vector<15x15xf32>
    %439 = vector.shape_cast %436 : vector<15x15xf32> to vector<1x15x15xf32>
    tpu.vector_store %arg3[%c3_49, %c0_50, %c0_51], %439 {strides = array<i32>} : memref<24x16x16xf32, #tpu.memory_space<vmem>>, vector<1x15x15xf32>,
    %cst_52 = arith.constant 0.000000e+00 : f32
    %440 = vector.broadcast %cst_52 : f32 to vector<16x16xf32>
    %441 = arith.maximumf %311, %440 : vector<16x16xf32>
    %cst_53 = arith.constant 0.000000e+00 : f32
    %442 = vector.broadcast %cst_53 : f32 to vector<16x16xf32>
    %443 = arith.subf %442, %441 : vector<16x16xf32>
    %444 = math.exp %443 : vector<16x16xf32>
    %cst_54 = arith.constant 1.000000e+00 : f32
    %445 = vector.broadcast %cst_54 : f32 to vector<16x16xf32>
    %446 = arith.addf %445, %444 : vector<16x16xf32>
    %447 = tpu.reciprocal %446 {approx = true} : vector<16x16xf32> -> vector<16x16xf32>
    %448 = arith.mulf %446, %447 : vector<16x16xf32>
    %cst_55 = arith.constant 2.000000e+00 : f32
    %449 = vector.broadcast %cst_55 : f32 to vector<16x16xf32>
    %450 = arith.subf %449, %448 : vector<16x16xf32>
    %451 = arith.mulf %447, %450 : vector<16x16xf32>
    %c4_56 = arith.constant 4 : index
    %c0_57 = arith.constant 0 : index
    %c0_58 = arith.constant 0 : index
    %452 = vector.load %arg3[%c4_56, %c0_57, %c0_58] : memref<24x16x16xf32, #tpu.memory_space<vmem>>, vector<1x16x16xf32>
    %453 = vector.shape_cast %452 : vector<1x16x16xf32> to vector<16x16xf32>
    %454 = vector.shape_cast %451 : vector<16x16xf32> to vector<1x16x16xf32>
    tpu.vector_store %arg3[%c4_56, %c0_57, %c0_58], %454 {strides = array<i32>} : memref<24x16x16xf32, #tpu.memory_space<vmem>>, vector<1x16x16xf32>,
    %cst_59 = arith.constant 0.000000e+00 : f32
    %455 = vector.broadcast %cst_59 : f32 to vector<16x15xf32>
    %456 = arith.maximumf %319, %455 : vector<16x15xf32>
    %cst_60 = arith.constant 0.000000e+00 : f32
    %457 = vector.broadcast %cst_60 : f32 to vector<16x15xf32>
    %458 = arith.subf %457, %456 : vector<16x15xf32>
    %459 = math.exp %458 : vector<16x15xf32>
    %cst_61 = arith.constant 1.000000e+00 : f32
    %460 = vector.broadcast %cst_61 : f32 to vector<16x15xf32>
    %461 = arith.addf %460, %459 : vector<16x15xf32>
    %462 = tpu.reciprocal %461 {approx = true} : vector<16x15xf32> -> vector<16x15xf32>
    %463 = arith.mulf %461, %462 : vector<16x15xf32>
    %cst_62 = arith.constant 2.000000e+00 : f32
    %464 = vector.broadcast %cst_62 : f32 to vector<16x15xf32>
    %465 = arith.subf %464, %463 : vector<16x15xf32>
    %466 = arith.mulf %462, %465 : vector<16x15xf32>
    %c5_63 = arith.constant 5 : index
    %c0_64 = arith.constant 0 : index
    %c0_65 = arith.constant 0 : index
    %467 = vector.load %arg3[%c5_63, %c0_64, %c0_65] : memref<24x16x16xf32, #tpu.memory_space<vmem>>, vector<1x16x15xf32>
    %468 = vector.shape_cast %467 : vector<1x16x15xf32> to vector<16x15xf32>
    %469 = vector.shape_cast %466 : vector<16x15xf32> to vector<1x16x15xf32>
    tpu.vector_store %arg3[%c5_63, %c0_64, %c0_65], %469 {strides = array<i32>} : memref<24x16x16xf32, #tpu.memory_space<vmem>>, vector<1x16x15xf32>,
    %cst_66 = arith.constant 0.000000e+00 : f32
    %470 = vector.broadcast %cst_66 : f32 to vector<15x16xf32>
    %471 = arith.maximumf %327, %470 : vector<15x16xf32>
    %cst_67 = arith.constant 0.000000e+00 : f32
    %472 = vector.broadcast %cst_67 : f32 to vector<15x16xf32>
    %473 = arith.subf %472, %471 : vector<15x16xf32>
    %474 = math.exp %473 : vector<15x16xf32>
    %cst_68 = arith.constant 1.000000e+00 : f32
    %475 = vector.broadcast %cst_68 : f32 to vector<15x16xf32>
    %476 = arith.addf %475, %474 : vector<15x16xf32>
    %477 = tpu.reciprocal %476 {approx = true} : vector<15x16xf32> -> vector<15x16xf32>
    %478 = arith.mulf %476, %477 : vector<15x16xf32>
    %cst_69 = arith.constant 2.000000e+00 : f32
    %479 = vector.broadcast %cst_69 : f32 to vector<15x16xf32>
    %480 = arith.subf %479, %478 : vector<15x16xf32>
    %481 = arith.mulf %477, %480 : vector<15x16xf32>
    %c6_70 = arith.constant 6 : index
    %c0_71 = arith.constant 0 : index
    %c0_72 = arith.constant 0 : index
    %482 = vector.load %arg3[%c6_70, %c0_71, %c0_72] : memref<24x16x16xf32, #tpu.memory_space<vmem>>, vector<1x15x16xf32>
    %483 = vector.shape_cast %482 : vector<1x15x16xf32> to vector<15x16xf32>
    %484 = vector.shape_cast %481 : vector<15x16xf32> to vector<1x15x16xf32>
    tpu.vector_store %arg3[%c6_70, %c0_71, %c0_72], %484 {strides = array<i32>} : memref<24x16x16xf32, #tpu.memory_space<vmem>>, vector<1x15x16xf32>,
    %cst_73 = arith.constant 0.000000e+00 : f32
    %485 = vector.broadcast %cst_73 : f32 to vector<15x15xf32>
    %486 = arith.maximumf %343, %485 : vector<15x15xf32>
    %cst_74 = arith.constant 0.000000e+00 : f32
    %487 = vector.broadcast %cst_74 : f32 to vector<15x15xf32>
    %488 = arith.subf %487, %486 : vector<15x15xf32>
    %489 = math.exp %488 : vector<15x15xf32>
    %cst_75 = arith.constant 1.000000e+00 : f32
    %490 = vector.broadcast %cst_75 : f32 to vector<15x15xf32>
    %491 = arith.addf %490, %489 : vector<15x15xf32>
    %492 = tpu.reciprocal %491 {approx = true} : vector<15x15xf32> -> vector<15x15xf32>
    %493 = arith.mulf %491, %492 : vector<15x15xf32>
    %cst_76 = arith.constant 2.000000e+00 : f32
    %494 = vector.broadcast %cst_76 : f32 to vector<15x15xf32>
    %495 = arith.subf %494, %493 : vector<15x15xf32>
    %496 = arith.mulf %492, %495 : vector<15x15xf32>
    %c7_77 = arith.constant 7 : index
    %c0_78 = arith.constant 0 : index
    %c0_79 = arith.constant 0 : index
    %497 = vector.load %arg3[%c7_77, %c0_78, %c0_79] : memref<24x16x16xf32, #tpu.memory_space<vmem>>, vector<1x15x15xf32>
    %498 = vector.shape_cast %497 : vector<1x15x15xf32> to vector<15x15xf32>
    %499 = vector.shape_cast %496 : vector<15x15xf32> to vector<1x15x15xf32>
    tpu.vector_store %arg3[%c7_77, %c0_78, %c0_79], %499 {strides = array<i32>} : memref<24x16x16xf32, #tpu.memory_space<vmem>>, vector<1x15x15xf32>,
    %cst_80 = arith.constant 0.000000e+00 : f32
    %500 = vector.broadcast %cst_80 : f32 to vector<16x16xf32>
    %501 = arith.maximumf %347, %500 : vector<16x16xf32>
    %cst_81 = arith.constant 0.000000e+00 : f32
    %502 = vector.broadcast %cst_81 : f32 to vector<16x16xf32>
    %503 = arith.subf %502, %501 : vector<16x16xf32>
    %504 = math.exp %503 : vector<16x16xf32>
    %cst_82 = arith.constant 1.000000e+00 : f32
    %505 = vector.broadcast %cst_82 : f32 to vector<16x16xf32>
    %506 = arith.addf %505, %504 : vector<16x16xf32>
    %507 = tpu.reciprocal %506 {approx = true} : vector<16x16xf32> -> vector<16x16xf32>
    %508 = arith.mulf %506, %507 : vector<16x16xf32>
    %cst_83 = arith.constant 2.000000e+00 : f32
    %509 = vector.broadcast %cst_83 : f32 to vector<16x16xf32>
    %510 = arith.subf %509, %508 : vector<16x16xf32>
    %511 = arith.mulf %507, %510 : vector<16x16xf32>
    %c8_84 = arith.constant 8 : index
    %c0_85 = arith.constant 0 : index
    %c0_86 = arith.constant 0 : index
    %512 = vector.load %arg3[%c8_84, %c0_85, %c0_86] : memref<24x16x16xf32, #tpu.memory_space<vmem>>, vector<1x16x16xf32>
    %513 = vector.shape_cast %512 : vector<1x16x16xf32> to vector<16x16xf32>
    %514 = vector.shape_cast %511 : vector<16x16xf32> to vector<1x16x16xf32>
    tpu.vector_store %arg3[%c8_84, %c0_85, %c0_86], %514 {strides = array<i32>} : memref<24x16x16xf32, #tpu.memory_space<vmem>>, vector<1x16x16xf32>,
    %cst_87 = arith.constant 0.000000e+00 : f32
    %515 = vector.broadcast %cst_87 : f32 to vector<16x15xf32>
    %516 = arith.maximumf %355, %515 : vector<16x15xf32>
    %cst_88 = arith.constant 0.000000e+00 : f32
    %517 = vector.broadcast %cst_88 : f32 to vector<16x15xf32>
    %518 = arith.subf %517, %516 : vector<16x15xf32>
    %519 = math.exp %518 : vector<16x15xf32>
    %cst_89 = arith.constant 1.000000e+00 : f32
    %520 = vector.broadcast %cst_89 : f32 to vector<16x15xf32>
    %521 = arith.addf %520, %519 : vector<16x15xf32>
    %522 = tpu.reciprocal %521 {approx = true} : vector<16x15xf32> -> vector<16x15xf32>
    %523 = arith.mulf %521, %522 : vector<16x15xf32>
    %cst_90 = arith.constant 2.000000e+00 : f32
    %524 = vector.broadcast %cst_90 : f32 to vector<16x15xf32>
    %525 = arith.subf %524, %523 : vector<16x15xf32>
    %526 = arith.mulf %522, %525 : vector<16x15xf32>
    %c9_91 = arith.constant 9 : index
    %c0_92 = arith.constant 0 : index
    %c0_93 = arith.constant 0 : index
    %527 = vector.load %arg3[%c9_91, %c0_92, %c0_93] : memref<24x16x16xf32, #tpu.memory_space<vmem>>, vector<1x16x15xf32>
    %528 = vector.shape_cast %527 : vector<1x16x15xf32> to vector<16x15xf32>
    %529 = vector.shape_cast %526 : vector<16x15xf32> to vector<1x16x15xf32>
    tpu.vector_store %arg3[%c9_91, %c0_92, %c0_93], %529 {strides = array<i32>} : memref<24x16x16xf32, #tpu.memory_space<vmem>>, vector<1x16x15xf32>,
    %cst_94 = arith.constant 0.000000e+00 : f32
    %530 = vector.broadcast %cst_94 : f32 to vector<15x16xf32>
    %531 = arith.maximumf %363, %530 : vector<15x16xf32>
    %cst_95 = arith.constant 0.000000e+00 : f32
    %532 = vector.broadcast %cst_95 : f32 to vector<15x16xf32>
    %533 = arith.subf %532, %531 : vector<15x16xf32>
    %534 = math.exp %533 : vector<15x16xf32>
    %cst_96 = arith.constant 1.000000e+00 : f32
    %535 = vector.broadcast %cst_96 : f32 to vector<15x16xf32>
    %536 = arith.addf %535, %534 : vector<15x16xf32>
    %537 = tpu.reciprocal %536 {approx = true} : vector<15x16xf32> -> vector<15x16xf32>
    %538 = arith.mulf %536, %537 : vector<15x16xf32>
    %cst_97 = arith.constant 2.000000e+00 : f32
    %539 = vector.broadcast %cst_97 : f32 to vector<15x16xf32>
    %540 = arith.subf %539, %538 : vector<15x16xf32>
    %541 = arith.mulf %537, %540 : vector<15x16xf32>
    %c10_98 = arith.constant 10 : index
    %c0_99 = arith.constant 0 : index
    %c0_100 = arith.constant 0 : index
    %542 = vector.load %arg3[%c10_98, %c0_99, %c0_100] : memref<24x16x16xf32, #tpu.memory_space<vmem>>, vector<1x15x16xf32>
    %543 = vector.shape_cast %542 : vector<1x15x16xf32> to vector<15x16xf32>
    %544 = vector.shape_cast %541 : vector<15x16xf32> to vector<1x15x16xf32>
    tpu.vector_store %arg3[%c10_98, %c0_99, %c0_100], %544 {strides = array<i32>} : memref<24x16x16xf32, #tpu.memory_space<vmem>>, vector<1x15x16xf32>,
    %cst_101 = arith.constant 0.000000e+00 : f32
    %545 = vector.broadcast %cst_101 : f32 to vector<15x15xf32>
    %546 = arith.maximumf %379, %545 : vector<15x15xf32>
    %cst_102 = arith.constant 0.000000e+00 : f32
    %547 = vector.broadcast %cst_102 : f32 to vector<15x15xf32>
    %548 = arith.subf %547, %546 : vector<15x15xf32>
    %549 = math.exp %548 : vector<15x15xf32>
    %cst_103 = arith.constant 1.000000e+00 : f32
    %550 = vector.broadcast %cst_103 : f32 to vector<15x15xf32>
    %551 = arith.addf %550, %549 : vector<15x15xf32>
    %552 = tpu.reciprocal %551 {approx = true} : vector<15x15xf32> -> vector<15x15xf32>
    %553 = arith.mulf %551, %552 : vector<15x15xf32>
    %cst_104 = arith.constant 2.000000e+00 : f32
    %554 = vector.broadcast %cst_104 : f32 to vector<15x15xf32>
    %555 = arith.subf %554, %553 : vector<15x15xf32>
    %556 = arith.mulf %552, %555 : vector<15x15xf32>
    %c11_105 = arith.constant 11 : index
    %c0_106 = arith.constant 0 : index
    %c0_107 = arith.constant 0 : index
    %557 = vector.load %arg3[%c11_105, %c0_106, %c0_107] : memref<24x16x16xf32, #tpu.memory_space<vmem>>, vector<1x15x15xf32>
    %558 = vector.shape_cast %557 : vector<1x15x15xf32> to vector<15x15xf32>
    %559 = vector.shape_cast %556 : vector<15x15xf32> to vector<1x15x15xf32>
    tpu.vector_store %arg3[%c11_105, %c0_106, %c0_107], %559 {strides = array<i32>} : memref<24x16x16xf32, #tpu.memory_space<vmem>>, vector<1x15x15xf32>,
    %c0_108 = arith.constant 0 : index
    %560 = memref.load %arg2[%c0_108] : memref<3xf32, #tpu.memory_space<smem>>
    %561 = vector.broadcast %560 : f32 to vector<16x16xf32>
    %c1_109 = arith.constant 1 : index
    %562 = memref.load %arg2[%c1_109] : memref<3xf32, #tpu.memory_space<smem>>
    %563 = vector.broadcast %562 : f32 to vector<16x16xf32>
    %c2_110 = arith.constant 2 : index
    %564 = memref.load %arg2[%c2_110] : memref<3xf32, #tpu.memory_space<smem>>
    %565 = vector.broadcast %564 : f32 to vector<16x16xf32>
    %c0_111 = arith.constant 0 : index
    %566 = memref.load %arg2[%c0_111] : memref<3xf32, #tpu.memory_space<smem>>
    %567 = vector.broadcast %566 : f32 to vector<16x15xf32>
    %c1_112 = arith.constant 1 : index
    %568 = memref.load %arg2[%c1_112] : memref<3xf32, #tpu.memory_space<smem>>
    %569 = vector.broadcast %568 : f32 to vector<16x15xf32>
    %c2_113 = arith.constant 2 : index
    %570 = memref.load %arg2[%c2_113] : memref<3xf32, #tpu.memory_space<smem>>
    %571 = vector.broadcast %570 : f32 to vector<16x15xf32>
    %c0_114 = arith.constant 0 : index
    %572 = memref.load %arg2[%c0_114] : memref<3xf32, #tpu.memory_space<smem>>
    %573 = vector.broadcast %572 : f32 to vector<15x16xf32>
    %c1_115 = arith.constant 1 : index
    %574 = memref.load %arg2[%c1_115] : memref<3xf32, #tpu.memory_space<smem>>
    %575 = vector.broadcast %574 : f32 to vector<15x16xf32>
    %c2_116 = arith.constant 2 : index
    %576 = memref.load %arg2[%c2_116] : memref<3xf32, #tpu.memory_space<smem>>
    %577 = vector.broadcast %576 : f32 to vector<15x16xf32>
    %c0_117 = arith.constant 0 : index
    %578 = memref.load %arg2[%c0_117] : memref<3xf32, #tpu.memory_space<smem>>
    %579 = vector.broadcast %578 : f32 to vector<15x15xf32>
    %c1_118 = arith.constant 1 : index
    %580 = memref.load %arg2[%c1_118] : memref<3xf32, #tpu.memory_space<smem>>
    %581 = vector.broadcast %580 : f32 to vector<15x15xf32>
    %c2_119 = arith.constant 2 : index
    %582 = memref.load %arg2[%c2_119] : memref<3xf32, #tpu.memory_space<smem>>
    %583 = vector.broadcast %582 : f32 to vector<15x15xf32>
    %c3_120 = arith.constant 3 : index
    %c0_121 = arith.constant 0 : index
    %c0_122 = arith.constant 0 : index
    %584 = vector.load %arg0[%c3_120, %c0_121, %c0_122] : memref<6x16x16xf32, #tpu.memory_space<vmem>>, vector<1x16x16xf32>
    %585 = vector.shape_cast %584 : vector<1x16x16xf32> to vector<16x16xf32>
    %586 = vector.extract_strided_slice %585 {offsets = [0, 1], sizes = [16, 15], strides = [1, 1]} : vector<16x16xf32> to vector<16x15xf32>
    %587 = vector.extract_strided_slice %585 {offsets = [1, 0], sizes = [15, 16], strides = [1, 1]} : vector<16x16xf32> to vector<15x16xf32>
    %588 = vector.extract_strided_slice %585 {offsets = [1, 1], sizes = [15, 15], strides = [1, 1]} : vector<16x16xf32> to vector<15x15xf32>
    %589 = vector.extract_strided_slice %585 {offsets = [0, 0], sizes = [16, 15], strides = [1, 1]} : vector<16x16xf32> to vector<16x15xf32>
    %590 = vector.extract_strided_slice %585 {offsets = [0, 0], sizes = [15, 16], strides = [1, 1]} : vector<16x16xf32> to vector<15x16xf32>
    %591 = vector.extract_strided_slice %585 {offsets = [0, 0], sizes = [15, 15], strides = [1, 1]} : vector<16x16xf32> to vector<15x15xf32>
    %592 = vector.extract_strided_slice %585 {offsets = [1, 0], sizes = [15, 15], strides = [1, 1]} : vector<16x16xf32> to vector<15x15xf32>
    %593 = vector.extract_strided_slice %585 {offsets = [0, 1], sizes = [15, 15], strides = [1, 1]} : vector<16x16xf32> to vector<15x15xf32>
    %c4_123 = arith.constant 4 : index
    %594 = memref.load %arg1[%c4_123] : memref<81xf32, #tpu.memory_space<smem>>
    %595 = vector.broadcast %594 : f32 to vector<16x16xf32>
    %596 = arith.mulf %595, %585 : vector<16x16xf32>
    %597 = arith.addf %561, %596 : vector<16x16xf32>
    %c3_124 = arith.constant 3 : index
    %598 = memref.load %arg1[%c3_124] : memref<81xf32, #tpu.memory_space<smem>>
    %599 = vector.broadcast %598 : f32 to vector<16x15xf32>
    %600 = arith.mulf %599, %586 : vector<16x15xf32>
    %601 = arith.addf %567, %600 : vector<16x15xf32>
    %c5_125 = arith.constant 5 : index
    %602 = memref.load %arg1[%c5_125] : memref<81xf32, #tpu.memory_space<smem>>
    %603 = vector.broadcast %602 : f32 to vector<16x15xf32>
    %604 = arith.mulf %603, %589 : vector<16x15xf32>
    %605 = arith.addf %601, %604 : vector<16x15xf32>
    %c1_126 = arith.constant 1 : index
    %606 = memref.load %arg1[%c1_126] : memref<81xf32, #tpu.memory_space<smem>>
    %607 = vector.broadcast %606 : f32 to vector<15x16xf32>
    %608 = arith.mulf %607, %587 : vector<15x16xf32>
    %609 = arith.addf %573, %608 : vector<15x16xf32>
    %c7_127 = arith.constant 7 : index
    %610 = memref.load %arg1[%c7_127] : memref<81xf32, #tpu.memory_space<smem>>
    %611 = vector.broadcast %610 : f32 to vector<15x16xf32>
    %612 = arith.mulf %611, %590 : vector<15x16xf32>
    %613 = arith.addf %609, %612 : vector<15x16xf32>
    %c0_128 = arith.constant 0 : index
    %614 = memref.load %arg1[%c0_128] : memref<81xf32, #tpu.memory_space<smem>>
    %615 = vector.broadcast %614 : f32 to vector<15x15xf32>
    %616 = arith.mulf %615, %588 : vector<15x15xf32>
    %617 = arith.addf %579, %616 : vector<15x15xf32>
    %c2_129 = arith.constant 2 : index
    %618 = memref.load %arg1[%c2_129] : memref<81xf32, #tpu.memory_space<smem>>
    %619 = vector.broadcast %618 : f32 to vector<15x15xf32>
    %620 = arith.mulf %619, %592 : vector<15x15xf32>
    %621 = arith.addf %617, %620 : vector<15x15xf32>
    %c6_130 = arith.constant 6 : index
    %622 = memref.load %arg1[%c6_130] : memref<81xf32, #tpu.memory_space<smem>>
    %623 = vector.broadcast %622 : f32 to vector<15x15xf32>
    %624 = arith.mulf %623, %593 : vector<15x15xf32>
    %625 = arith.addf %621, %624 : vector<15x15xf32>
    %c8_131 = arith.constant 8 : index
    %626 = memref.load %arg1[%c8_131] : memref<81xf32, #tpu.memory_space<smem>>
    %627 = vector.broadcast %626 : f32 to vector<15x15xf32>
    %628 = arith.mulf %627, %591 : vector<15x15xf32>
    %629 = arith.addf %625, %628 : vector<15x15xf32>
    %c13_132 = arith.constant 13 : index
    %630 = memref.load %arg1[%c13_132] : memref<81xf32, #tpu.memory_space<smem>>
    %631 = vector.broadcast %630 : f32 to vector<16x16xf32>
    %632 = arith.mulf %631, %585 : vector<16x16xf32>
    %633 = arith.addf %563, %632 : vector<16x16xf32>
    %c12_133 = arith.constant 12 : index
    %634 = memref.load %arg1[%c12_133] : memref<81xf32, #tpu.memory_space<smem>>
    %635 = vector.broadcast %634 : f32 to vector<16x15xf32>
    %636 = arith.mulf %635, %586 : vector<16x15xf32>
    %637 = arith.addf %569, %636 : vector<16x15xf32>
    %c14_134 = arith.constant 14 : index
    %638 = memref.load %arg1[%c14_134] : memref<81xf32, #tpu.memory_space<smem>>
    %639 = vector.broadcast %638 : f32 to vector<16x15xf32>
    %640 = arith.mulf %639, %589 : vector<16x15xf32>
    %641 = arith.addf %637, %640 : vector<16x15xf32>
    %c10_135 = arith.constant 10 : index
    %642 = memref.load %arg1[%c10_135] : memref<81xf32, #tpu.memory_space<smem>>
    %643 = vector.broadcast %642 : f32 to vector<15x16xf32>
    %644 = arith.mulf %643, %587 : vector<15x16xf32>
    %645 = arith.addf %575, %644 : vector<15x16xf32>
    %c16_136 = arith.constant 16 : index
    %646 = memref.load %arg1[%c16_136] : memref<81xf32, #tpu.memory_space<smem>>
    %647 = vector.broadcast %646 : f32 to vector<15x16xf32>
    %648 = arith.mulf %647, %590 : vector<15x16xf32>
    %649 = arith.addf %645, %648 : vector<15x16xf32>
    %c9_137 = arith.constant 9 : index
    %650 = memref.load %arg1[%c9_137] : memref<81xf32, #tpu.memory_space<smem>>
    %651 = vector.broadcast %650 : f32 to vector<15x15xf32>
    %652 = arith.mulf %651, %588 : vector<15x15xf32>
    %653 = arith.addf %581, %652 : vector<15x15xf32>
    %c11_138 = arith.constant 11 : index
    %654 = memref.load %arg1[%c11_138] : memref<81xf32, #tpu.memory_space<smem>>
    %655 = vector.broadcast %654 : f32 to vector<15x15xf32>
    %656 = arith.mulf %655, %592 : vector<15x15xf32>
    %657 = arith.addf %653, %656 : vector<15x15xf32>
    %c15_139 = arith.constant 15 : index
    %658 = memref.load %arg1[%c15_139] : memref<81xf32, #tpu.memory_space<smem>>
    %659 = vector.broadcast %658 : f32 to vector<15x15xf32>
    %660 = arith.mulf %659, %593 : vector<15x15xf32>
    %661 = arith.addf %657, %660 : vector<15x15xf32>
    %c17_140 = arith.constant 17 : index
    %662 = memref.load %arg1[%c17_140] : memref<81xf32, #tpu.memory_space<smem>>
    %663 = vector.broadcast %662 : f32 to vector<15x15xf32>
    %664 = arith.mulf %663, %591 : vector<15x15xf32>
    %665 = arith.addf %661, %664 : vector<15x15xf32>
    %c22_141 = arith.constant 22 : index
    %666 = memref.load %arg1[%c22_141] : memref<81xf32, #tpu.memory_space<smem>>
    %667 = vector.broadcast %666 : f32 to vector<16x16xf32>
    %668 = arith.mulf %667, %585 : vector<16x16xf32>
    %669 = arith.addf %565, %668 : vector<16x16xf32>
    %c21_142 = arith.constant 21 : index
    %670 = memref.load %arg1[%c21_142] : memref<81xf32, #tpu.memory_space<smem>>
    %671 = vector.broadcast %670 : f32 to vector<16x15xf32>
    %672 = arith.mulf %671, %586 : vector<16x15xf32>
    %673 = arith.addf %571, %672 : vector<16x15xf32>
    %c23_143 = arith.constant 23 : index
    %674 = memref.load %arg1[%c23_143] : memref<81xf32, #tpu.memory_space<smem>>
    %675 = vector.broadcast %674 : f32 to vector<16x15xf32>
    %676 = arith.mulf %675, %589 : vector<16x15xf32>
    %677 = arith.addf %673, %676 : vector<16x15xf32>
    %c19_144 = arith.constant 19 : index
    %678 = memref.load %arg1[%c19_144] : memref<81xf32, #tpu.memory_space<smem>>
    %679 = vector.broadcast %678 : f32 to vector<15x16xf32>
    %680 = arith.mulf %679, %587 : vector<15x16xf32>
    %681 = arith.addf %577, %680 : vector<15x16xf32>
    %c25_145 = arith.constant 25 : index
    %682 = memref.load %arg1[%c25_145] : memref<81xf32, #tpu.memory_space<smem>>
    %683 = vector.broadcast %682 : f32 to vector<15x16xf32>
    %684 = arith.mulf %683, %590 : vector<15x16xf32>
    %685 = arith.addf %681, %684 : vector<15x16xf32>
    %c18_146 = arith.constant 18 : index
    %686 = memref.load %arg1[%c18_146] : memref<81xf32, #tpu.memory_space<smem>>
    %687 = vector.broadcast %686 : f32 to vector<15x15xf32>
    %688 = arith.mulf %687, %588 : vector<15x15xf32>
    %689 = arith.addf %583, %688 : vector<15x15xf32>
    %c20_147 = arith.constant 20 : index
    %690 = memref.load %arg1[%c20_147] : memref<81xf32, #tpu.memory_space<smem>>
    %691 = vector.broadcast %690 : f32 to vector<15x15xf32>
    %692 = arith.mulf %691, %592 : vector<15x15xf32>
    %693 = arith.addf %689, %692 : vector<15x15xf32>
    %c24_148 = arith.constant 24 : index
    %694 = memref.load %arg1[%c24_148] : memref<81xf32, #tpu.memory_space<smem>>
    %695 = vector.broadcast %694 : f32 to vector<15x15xf32>
    %696 = arith.mulf %695, %593 : vector<15x15xf32>
    %697 = arith.addf %693, %696 : vector<15x15xf32>
    %c26_149 = arith.constant 26 : index
    %698 = memref.load %arg1[%c26_149] : memref<81xf32, #tpu.memory_space<smem>>
    %699 = vector.broadcast %698 : f32 to vector<15x15xf32>
    %700 = arith.mulf %699, %591 : vector<15x15xf32>
    %701 = arith.addf %697, %700 : vector<15x15xf32>
    %c4_150 = arith.constant 4 : index
    %c0_151 = arith.constant 0 : index
    %c0_152 = arith.constant 0 : index
    %702 = vector.load %arg0[%c4_150, %c0_151, %c0_152] : memref<6x16x16xf32, #tpu.memory_space<vmem>>, vector<1x16x16xf32>
    %703 = vector.shape_cast %702 : vector<1x16x16xf32> to vector<16x16xf32>
    %704 = vector.extract_strided_slice %703 {offsets = [0, 1], sizes = [16, 15], strides = [1, 1]} : vector<16x16xf32> to vector<16x15xf32>
    %705 = vector.extract_strided_slice %703 {offsets = [1, 0], sizes = [15, 16], strides = [1, 1]} : vector<16x16xf32> to vector<15x16xf32>
    %706 = vector.extract_strided_slice %703 {offsets = [1, 1], sizes = [15, 15], strides = [1, 1]} : vector<16x16xf32> to vector<15x15xf32>
    %707 = vector.extract_strided_slice %703 {offsets = [0, 0], sizes = [16, 15], strides = [1, 1]} : vector<16x16xf32> to vector<16x15xf32>
    %708 = vector.extract_strided_slice %703 {offsets = [0, 0], sizes = [15, 16], strides = [1, 1]} : vector<16x16xf32> to vector<15x16xf32>
    %709 = vector.extract_strided_slice %703 {offsets = [0, 0], sizes = [15, 15], strides = [1, 1]} : vector<16x16xf32> to vector<15x15xf32>
    %710 = vector.extract_strided_slice %703 {offsets = [1, 0], sizes = [15, 15], strides = [1, 1]} : vector<16x16xf32> to vector<15x15xf32>
    %711 = vector.extract_strided_slice %703 {offsets = [0, 1], sizes = [15, 15], strides = [1, 1]} : vector<16x16xf32> to vector<15x15xf32>
    %c31_153 = arith.constant 31 : index
    %712 = memref.load %arg1[%c31_153] : memref<81xf32, #tpu.memory_space<smem>>
    %713 = vector.broadcast %712 : f32 to vector<16x16xf32>
    %714 = arith.mulf %713, %703 : vector<16x16xf32>
    %715 = arith.addf %597, %714 : vector<16x16xf32>
    %c30_154 = arith.constant 30 : index
    %716 = memref.load %arg1[%c30_154] : memref<81xf32, #tpu.memory_space<smem>>
    %717 = vector.broadcast %716 : f32 to vector<16x15xf32>
    %718 = arith.mulf %717, %704 : vector<16x15xf32>
    %719 = arith.addf %605, %718 : vector<16x15xf32>
    %c32_155 = arith.constant 32 : index
    %720 = memref.load %arg1[%c32_155] : memref<81xf32, #tpu.memory_space<smem>>
    %721 = vector.broadcast %720 : f32 to vector<16x15xf32>
    %722 = arith.mulf %721, %707 : vector<16x15xf32>
    %723 = arith.addf %719, %722 : vector<16x15xf32>
    %c28_156 = arith.constant 28 : index
    %724 = memref.load %arg1[%c28_156] : memref<81xf32, #tpu.memory_space<smem>>
    %725 = vector.broadcast %724 : f32 to vector<15x16xf32>
    %726 = arith.mulf %725, %705 : vector<15x16xf32>
    %727 = arith.addf %613, %726 : vector<15x16xf32>
    %c34_157 = arith.constant 34 : index
    %728 = memref.load %arg1[%c34_157] : memref<81xf32, #tpu.memory_space<smem>>
    %729 = vector.broadcast %728 : f32 to vector<15x16xf32>
    %730 = arith.mulf %729, %708 : vector<15x16xf32>
    %731 = arith.addf %727, %730 : vector<15x16xf32>
    %c27_158 = arith.constant 27 : index
    %732 = memref.load %arg1[%c27_158] : memref<81xf32, #tpu.memory_space<smem>>
    %733 = vector.broadcast %732 : f32 to vector<15x15xf32>
    %734 = arith.mulf %733, %706 : vector<15x15xf32>
    %735 = arith.addf %629, %734 : vector<15x15xf32>
    %c29_159 = arith.constant 29 : index
    %736 = memref.load %arg1[%c29_159] : memref<81xf32, #tpu.memory_space<smem>>
    %737 = vector.broadcast %736 : f32 to vector<15x15xf32>
    %738 = arith.mulf %737, %710 : vector<15x15xf32>
    %739 = arith.addf %735, %738 : vector<15x15xf32>
    %c33_160 = arith.constant 33 : index
    %740 = memref.load %arg1[%c33_160] : memref<81xf32, #tpu.memory_space<smem>>
    %741 = vector.broadcast %740 : f32 to vector<15x15xf32>
    %742 = arith.mulf %741, %711 : vector<15x15xf32>
    %743 = arith.addf %739, %742 : vector<15x15xf32>
    %c35_161 = arith.constant 35 : index
    %744 = memref.load %arg1[%c35_161] : memref<81xf32, #tpu.memory_space<smem>>
    %745 = vector.broadcast %744 : f32 to vector<15x15xf32>
    %746 = arith.mulf %745, %709 : vector<15x15xf32>
    %747 = arith.addf %743, %746 : vector<15x15xf32>
    %c40_162 = arith.constant 40 : index
    %748 = memref.load %arg1[%c40_162] : memref<81xf32, #tpu.memory_space<smem>>
    %749 = vector.broadcast %748 : f32 to vector<16x16xf32>
    %750 = arith.mulf %749, %703 : vector<16x16xf32>
    %751 = arith.addf %633, %750 : vector<16x16xf32>
    %c39_163 = arith.constant 39 : index
    %752 = memref.load %arg1[%c39_163] : memref<81xf32, #tpu.memory_space<smem>>
    %753 = vector.broadcast %752 : f32 to vector<16x15xf32>
    %754 = arith.mulf %753, %704 : vector<16x15xf32>
    %755 = arith.addf %641, %754 : vector<16x15xf32>
    %c41_164 = arith.constant 41 : index
    %756 = memref.load %arg1[%c41_164] : memref<81xf32, #tpu.memory_space<smem>>
    %757 = vector.broadcast %756 : f32 to vector<16x15xf32>
    %758 = arith.mulf %757, %707 : vector<16x15xf32>
    %759 = arith.addf %755, %758 : vector<16x15xf32>
    %c37_165 = arith.constant 37 : index
    %760 = memref.load %arg1[%c37_165] : memref<81xf32, #tpu.memory_space<smem>>
    %761 = vector.broadcast %760 : f32 to vector<15x16xf32>
    %762 = arith.mulf %761, %705 : vector<15x16xf32>
    %763 = arith.addf %649, %762 : vector<15x16xf32>
    %c43_166 = arith.constant 43 : index
    %764 = memref.load %arg1[%c43_166] : memref<81xf32, #tpu.memory_space<smem>>
    %765 = vector.broadcast %764 : f32 to vector<15x16xf32>
    %766 = arith.mulf %765, %708 : vector<15x16xf32>
    %767 = arith.addf %763, %766 : vector<15x16xf32>
    %c36_167 = arith.constant 36 : index
    %768 = memref.load %arg1[%c36_167] : memref<81xf32, #tpu.memory_space<smem>>
    %769 = vector.broadcast %768 : f32 to vector<15x15xf32>
    %770 = arith.mulf %769, %706 : vector<15x15xf32>
    %771 = arith.addf %665, %770 : vector<15x15xf32>
    %c38_168 = arith.constant 38 : index
    %772 = memref.load %arg1[%c38_168] : memref<81xf32, #tpu.memory_space<smem>>
    %773 = vector.broadcast %772 : f32 to vector<15x15xf32>
    %774 = arith.mulf %773, %710 : vector<15x15xf32>
    %775 = arith.addf %771, %774 : vector<15x15xf32>
    %c42_169 = arith.constant 42 : index
    %776 = memref.load %arg1[%c42_169] : memref<81xf32, #tpu.memory_space<smem>>
    %777 = vector.broadcast %776 : f32 to vector<15x15xf32>
    %778 = arith.mulf %777, %711 : vector<15x15xf32>
    %779 = arith.addf %775, %778 : vector<15x15xf32>
    %c44_170 = arith.constant 44 : index
    %780 = memref.load %arg1[%c44_170] : memref<81xf32, #tpu.memory_space<smem>>
    %781 = vector.broadcast %780 : f32 to vector<15x15xf32>
    %782 = arith.mulf %781, %709 : vector<15x15xf32>
    %783 = arith.addf %779, %782 : vector<15x15xf32>
    %c49_171 = arith.constant 49 : index
    %784 = memref.load %arg1[%c49_171] : memref<81xf32, #tpu.memory_space<smem>>
    %785 = vector.broadcast %784 : f32 to vector<16x16xf32>
    %786 = arith.mulf %785, %703 : vector<16x16xf32>
    %787 = arith.addf %669, %786 : vector<16x16xf32>
    %c48_172 = arith.constant 48 : index
    %788 = memref.load %arg1[%c48_172] : memref<81xf32, #tpu.memory_space<smem>>
    %789 = vector.broadcast %788 : f32 to vector<16x15xf32>
    %790 = arith.mulf %789, %704 : vector<16x15xf32>
    %791 = arith.addf %677, %790 : vector<16x15xf32>
    %c50_173 = arith.constant 50 : index
    %792 = memref.load %arg1[%c50_173] : memref<81xf32, #tpu.memory_space<smem>>
    %793 = vector.broadcast %792 : f32 to vector<16x15xf32>
    %794 = arith.mulf %793, %707 : vector<16x15xf32>
    %795 = arith.addf %791, %794 : vector<16x15xf32>
    %c46_174 = arith.constant 46 : index
    %796 = memref.load %arg1[%c46_174] : memref<81xf32, #tpu.memory_space<smem>>
    %797 = vector.broadcast %796 : f32 to vector<15x16xf32>
    %798 = arith.mulf %797, %705 : vector<15x16xf32>
    %799 = arith.addf %685, %798 : vector<15x16xf32>
    %c52_175 = arith.constant 52 : index
    %800 = memref.load %arg1[%c52_175] : memref<81xf32, #tpu.memory_space<smem>>
    %801 = vector.broadcast %800 : f32 to vector<15x16xf32>
    %802 = arith.mulf %801, %708 : vector<15x16xf32>
    %803 = arith.addf %799, %802 : vector<15x16xf32>
    %c45_176 = arith.constant 45 : index
    %804 = memref.load %arg1[%c45_176] : memref<81xf32, #tpu.memory_space<smem>>
    %805 = vector.broadcast %804 : f32 to vector<15x15xf32>
    %806 = arith.mulf %805, %706 : vector<15x15xf32>
    %807 = arith.addf %701, %806 : vector<15x15xf32>
    %c47_177 = arith.constant 47 : index
    %808 = memref.load %arg1[%c47_177] : memref<81xf32, #tpu.memory_space<smem>>
    %809 = vector.broadcast %808 : f32 to vector<15x15xf32>
    %810 = arith.mulf %809, %710 : vector<15x15xf32>
    %811 = arith.addf %807, %810 : vector<15x15xf32>
    %c51_178 = arith.constant 51 : index
    %812 = memref.load %arg1[%c51_178] : memref<81xf32, #tpu.memory_space<smem>>
    %813 = vector.broadcast %812 : f32 to vector<15x15xf32>
    %814 = arith.mulf %813, %711 : vector<15x15xf32>
    %815 = arith.addf %811, %814 : vector<15x15xf32>
    %c53_179 = arith.constant 53 : index
    %816 = memref.load %arg1[%c53_179] : memref<81xf32, #tpu.memory_space<smem>>
    %817 = vector.broadcast %816 : f32 to vector<15x15xf32>
    %818 = arith.mulf %817, %709 : vector<15x15xf32>
    %819 = arith.addf %815, %818 : vector<15x15xf32>
    %c5_180 = arith.constant 5 : index
    %c0_181 = arith.constant 0 : index
    %c0_182 = arith.constant 0 : index
    %820 = vector.load %arg0[%c5_180, %c0_181, %c0_182] : memref<6x16x16xf32, #tpu.memory_space<vmem>>, vector<1x16x16xf32>
    %821 = vector.shape_cast %820 : vector<1x16x16xf32> to vector<16x16xf32>
    %822 = vector.extract_strided_slice %821 {offsets = [0, 1], sizes = [16, 15], strides = [1, 1]} : vector<16x16xf32> to vector<16x15xf32>
    %823 = vector.extract_strided_slice %821 {offsets = [1, 0], sizes = [15, 16], strides = [1, 1]} : vector<16x16xf32> to vector<15x16xf32>
    %824 = vector.extract_strided_slice %821 {offsets = [1, 1], sizes = [15, 15], strides = [1, 1]} : vector<16x16xf32> to vector<15x15xf32>
    %825 = vector.extract_strided_slice %821 {offsets = [0, 0], sizes = [16, 15], strides = [1, 1]} : vector<16x16xf32> to vector<16x15xf32>
    %826 = vector.extract_strided_slice %821 {offsets = [0, 0], sizes = [15, 16], strides = [1, 1]} : vector<16x16xf32> to vector<15x16xf32>
    %827 = vector.extract_strided_slice %821 {offsets = [0, 0], sizes = [15, 15], strides = [1, 1]} : vector<16x16xf32> to vector<15x15xf32>
    %828 = vector.extract_strided_slice %821 {offsets = [1, 0], sizes = [15, 15], strides = [1, 1]} : vector<16x16xf32> to vector<15x15xf32>
    %829 = vector.extract_strided_slice %821 {offsets = [0, 1], sizes = [15, 15], strides = [1, 1]} : vector<16x16xf32> to vector<15x15xf32>
    %c58_183 = arith.constant 58 : index
    %830 = memref.load %arg1[%c58_183] : memref<81xf32, #tpu.memory_space<smem>>
    %831 = vector.broadcast %830 : f32 to vector<16x16xf32>
    %832 = arith.mulf %831, %821 : vector<16x16xf32>
    %833 = arith.addf %715, %832 : vector<16x16xf32>
    %c57_184 = arith.constant 57 : index
    %834 = memref.load %arg1[%c57_184] : memref<81xf32, #tpu.memory_space<smem>>
    %835 = vector.broadcast %834 : f32 to vector<16x15xf32>
    %836 = arith.mulf %835, %822 : vector<16x15xf32>
    %837 = arith.addf %723, %836 : vector<16x15xf32>
    %c59_185 = arith.constant 59 : index
    %838 = memref.load %arg1[%c59_185] : memref<81xf32, #tpu.memory_space<smem>>
    %839 = vector.broadcast %838 : f32 to vector<16x15xf32>
    %840 = arith.mulf %839, %825 : vector<16x15xf32>
    %841 = arith.addf %837, %840 : vector<16x15xf32>
    %c55_186 = arith.constant 55 : index
    %842 = memref.load %arg1[%c55_186] : memref<81xf32, #tpu.memory_space<smem>>
    %843 = vector.broadcast %842 : f32 to vector<15x16xf32>
    %844 = arith.mulf %843, %823 : vector<15x16xf32>
    %845 = arith.addf %731, %844 : vector<15x16xf32>
    %c61_187 = arith.constant 61 : index
    %846 = memref.load %arg1[%c61_187] : memref<81xf32, #tpu.memory_space<smem>>
    %847 = vector.broadcast %846 : f32 to vector<15x16xf32>
    %848 = arith.mulf %847, %826 : vector<15x16xf32>
    %849 = arith.addf %845, %848 : vector<15x16xf32>
    %c54_188 = arith.constant 54 : index
    %850 = memref.load %arg1[%c54_188] : memref<81xf32, #tpu.memory_space<smem>>
    %851 = vector.broadcast %850 : f32 to vector<15x15xf32>
    %852 = arith.mulf %851, %824 : vector<15x15xf32>
    %853 = arith.addf %747, %852 : vector<15x15xf32>
    %c56_189 = arith.constant 56 : index
    %854 = memref.load %arg1[%c56_189] : memref<81xf32, #tpu.memory_space<smem>>
    %855 = vector.broadcast %854 : f32 to vector<15x15xf32>
    %856 = arith.mulf %855, %828 : vector<15x15xf32>
    %857 = arith.addf %853, %856 : vector<15x15xf32>
    %c60_190 = arith.constant 60 : index
    %858 = memref.load %arg1[%c60_190] : memref<81xf32, #tpu.memory_space<smem>>
    %859 = vector.broadcast %858 : f32 to vector<15x15xf32>
    %860 = arith.mulf %859, %829 : vector<15x15xf32>
    %861 = arith.addf %857, %860 : vector<15x15xf32>
    %c62_191 = arith.constant 62 : index
    %862 = memref.load %arg1[%c62_191] : memref<81xf32, #tpu.memory_space<smem>>
    %863 = vector.broadcast %862 : f32 to vector<15x15xf32>
    %864 = arith.mulf %863, %827 : vector<15x15xf32>
    %865 = arith.addf %861, %864 : vector<15x15xf32>
    %c67_192 = arith.constant 67 : index
    %866 = memref.load %arg1[%c67_192] : memref<81xf32, #tpu.memory_space<smem>>
    %867 = vector.broadcast %866 : f32 to vector<16x16xf32>
    %868 = arith.mulf %867, %821 : vector<16x16xf32>
    %869 = arith.addf %751, %868 : vector<16x16xf32>
    %c66_193 = arith.constant 66 : index
    %870 = memref.load %arg1[%c66_193] : memref<81xf32, #tpu.memory_space<smem>>
    %871 = vector.broadcast %870 : f32 to vector<16x15xf32>
    %872 = arith.mulf %871, %822 : vector<16x15xf32>
    %873 = arith.addf %759, %872 : vector<16x15xf32>
    %c68_194 = arith.constant 68 : index
    %874 = memref.load %arg1[%c68_194] : memref<81xf32, #tpu.memory_space<smem>>
    %875 = vector.broadcast %874 : f32 to vector<16x15xf32>
    %876 = arith.mulf %875, %825 : vector<16x15xf32>
    %877 = arith.addf %873, %876 : vector<16x15xf32>
    %c64_195 = arith.constant 64 : index
    %878 = memref.load %arg1[%c64_195] : memref<81xf32, #tpu.memory_space<smem>>
    %879 = vector.broadcast %878 : f32 to vector<15x16xf32>
    %880 = arith.mulf %879, %823 : vector<15x16xf32>
    %881 = arith.addf %767, %880 : vector<15x16xf32>
    %c70_196 = arith.constant 70 : index
    %882 = memref.load %arg1[%c70_196] : memref<81xf32, #tpu.memory_space<smem>>
    %883 = vector.broadcast %882 : f32 to vector<15x16xf32>
    %884 = arith.mulf %883, %826 : vector<15x16xf32>
    %885 = arith.addf %881, %884 : vector<15x16xf32>
    %c63_197 = arith.constant 63 : index
    %886 = memref.load %arg1[%c63_197] : memref<81xf32, #tpu.memory_space<smem>>
    %887 = vector.broadcast %886 : f32 to vector<15x15xf32>
    %888 = arith.mulf %887, %824 : vector<15x15xf32>
    %889 = arith.addf %783, %888 : vector<15x15xf32>
    %c65_198 = arith.constant 65 : index
    %890 = memref.load %arg1[%c65_198] : memref<81xf32, #tpu.memory_space<smem>>
    %891 = vector.broadcast %890 : f32 to vector<15x15xf32>
    %892 = arith.mulf %891, %828 : vector<15x15xf32>
    %893 = arith.addf %889, %892 : vector<15x15xf32>
    %c69_199 = arith.constant 69 : index
    %894 = memref.load %arg1[%c69_199] : memref<81xf32, #tpu.memory_space<smem>>
    %895 = vector.broadcast %894 : f32 to vector<15x15xf32>
    %896 = arith.mulf %895, %829 : vector<15x15xf32>
    %897 = arith.addf %893, %896 : vector<15x15xf32>
    %c71_200 = arith.constant 71 : index
    %898 = memref.load %arg1[%c71_200] : memref<81xf32, #tpu.memory_space<smem>>
    %899 = vector.broadcast %898 : f32 to vector<15x15xf32>
    %900 = arith.mulf %899, %827 : vector<15x15xf32>
    %901 = arith.addf %897, %900 : vector<15x15xf32>
    %c76_201 = arith.constant 76 : index
    %902 = memref.load %arg1[%c76_201] : memref<81xf32, #tpu.memory_space<smem>>
    %903 = vector.broadcast %902 : f32 to vector<16x16xf32>
    %904 = arith.mulf %903, %821 : vector<16x16xf32>
    %905 = arith.addf %787, %904 : vector<16x16xf32>
    %c75_202 = arith.constant 75 : index
    %906 = memref.load %arg1[%c75_202] : memref<81xf32, #tpu.memory_space<smem>>
    %907 = vector.broadcast %906 : f32 to vector<16x15xf32>
    %908 = arith.mulf %907, %822 : vector<16x15xf32>
    %909 = arith.addf %795, %908 : vector<16x15xf32>
    %c77_203 = arith.constant 77 : index
    %910 = memref.load %arg1[%c77_203] : memref<81xf32, #tpu.memory_space<smem>>
    %911 = vector.broadcast %910 : f32 to vector<16x15xf32>
    %912 = arith.mulf %911, %825 : vector<16x15xf32>
    %913 = arith.addf %909, %912 : vector<16x15xf32>
    %c73_204 = arith.constant 73 : index
    %914 = memref.load %arg1[%c73_204] : memref<81xf32, #tpu.memory_space<smem>>
    %915 = vector.broadcast %914 : f32 to vector<15x16xf32>
    %916 = arith.mulf %915, %823 : vector<15x16xf32>
    %917 = arith.addf %803, %916 : vector<15x16xf32>
    %c79_205 = arith.constant 79 : index
    %918 = memref.load %arg1[%c79_205] : memref<81xf32, #tpu.memory_space<smem>>
    %919 = vector.broadcast %918 : f32 to vector<15x16xf32>
    %920 = arith.mulf %919, %826 : vector<15x16xf32>
    %921 = arith.addf %917, %920 : vector<15x16xf32>
    %c72_206 = arith.constant 72 : index
    %922 = memref.load %arg1[%c72_206] : memref<81xf32, #tpu.memory_space<smem>>
    %923 = vector.broadcast %922 : f32 to vector<15x15xf32>
    %924 = arith.mulf %923, %824 : vector<15x15xf32>
    %925 = arith.addf %819, %924 : vector<15x15xf32>
    %c74_207 = arith.constant 74 : index
    %926 = memref.load %arg1[%c74_207] : memref<81xf32, #tpu.memory_space<smem>>
    %927 = vector.broadcast %926 : f32 to vector<15x15xf32>
    %928 = arith.mulf %927, %828 : vector<15x15xf32>
    %929 = arith.addf %925, %928 : vector<15x15xf32>
    %c78_208 = arith.constant 78 : index
    %930 = memref.load %arg1[%c78_208] : memref<81xf32, #tpu.memory_space<smem>>
    %931 = vector.broadcast %930 : f32 to vector<15x15xf32>
    %932 = arith.mulf %931, %829 : vector<15x15xf32>
    %933 = arith.addf %929, %932 : vector<15x15xf32>
    %c80_209 = arith.constant 80 : index
    %934 = memref.load %arg1[%c80_209] : memref<81xf32, #tpu.memory_space<smem>>
    %935 = vector.broadcast %934 : f32 to vector<15x15xf32>
    %936 = arith.mulf %935, %827 : vector<15x15xf32>
    %937 = arith.addf %933, %936 : vector<15x15xf32>
    %cst_210 = arith.constant 0.000000e+00 : f32
    %938 = vector.broadcast %cst_210 : f32 to vector<16x16xf32>
    %939 = arith.maximumf %833, %938 : vector<16x16xf32>
    %cst_211 = arith.constant 0.000000e+00 : f32
    %940 = vector.broadcast %cst_211 : f32 to vector<16x16xf32>
    %941 = arith.subf %940, %939 : vector<16x16xf32>
    %942 = math.exp %941 : vector<16x16xf32>
    %cst_212 = arith.constant 1.000000e+00 : f32
    %943 = vector.broadcast %cst_212 : f32 to vector<16x16xf32>
    %944 = arith.addf %943, %942 : vector<16x16xf32>
    %945 = tpu.reciprocal %944 {approx = true} : vector<16x16xf32> -> vector<16x16xf32>
    %946 = arith.mulf %944, %945 : vector<16x16xf32>
    %cst_213 = arith.constant 2.000000e+00 : f32
    %947 = vector.broadcast %cst_213 : f32 to vector<16x16xf32>
    %948 = arith.subf %947, %946 : vector<16x16xf32>
    %949 = arith.mulf %945, %948 : vector<16x16xf32>
    %c12_214 = arith.constant 12 : index
    %c0_215 = arith.constant 0 : index
    %c0_216 = arith.constant 0 : index
    %950 = vector.load %arg3[%c12_214, %c0_215, %c0_216] : memref<24x16x16xf32, #tpu.memory_space<vmem>>, vector<1x16x16xf32>
    %951 = vector.shape_cast %950 : vector<1x16x16xf32> to vector<16x16xf32>
    %952 = vector.shape_cast %949 : vector<16x16xf32> to vector<1x16x16xf32>
    tpu.vector_store %arg3[%c12_214, %c0_215, %c0_216], %952 {strides = array<i32>} : memref<24x16x16xf32, #tpu.memory_space<vmem>>, vector<1x16x16xf32>,
    %cst_217 = arith.constant 0.000000e+00 : f32
    %953 = vector.broadcast %cst_217 : f32 to vector<16x15xf32>
    %954 = arith.maximumf %841, %953 : vector<16x15xf32>
    %cst_218 = arith.constant 0.000000e+00 : f32
    %955 = vector.broadcast %cst_218 : f32 to vector<16x15xf32>
    %956 = arith.subf %955, %954 : vector<16x15xf32>
    %957 = math.exp %956 : vector<16x15xf32>
    %cst_219 = arith.constant 1.000000e+00 : f32
    %958 = vector.broadcast %cst_219 : f32 to vector<16x15xf32>
    %959 = arith.addf %958, %957 : vector<16x15xf32>
    %960 = tpu.reciprocal %959 {approx = true} : vector<16x15xf32> -> vector<16x15xf32>
    %961 = arith.mulf %959, %960 : vector<16x15xf32>
    %cst_220 = arith.constant 2.000000e+00 : f32
    %962 = vector.broadcast %cst_220 : f32 to vector<16x15xf32>
    %963 = arith.subf %962, %961 : vector<16x15xf32>
    %964 = arith.mulf %960, %963 : vector<16x15xf32>
    %c13_221 = arith.constant 13 : index
    %c0_222 = arith.constant 0 : index
    %c0_223 = arith.constant 0 : index
    %965 = vector.load %arg3[%c13_221, %c0_222, %c0_223] : memref<24x16x16xf32, #tpu.memory_space<vmem>>, vector<1x16x15xf32>
    %966 = vector.shape_cast %965 : vector<1x16x15xf32> to vector<16x15xf32>
    %967 = vector.shape_cast %964 : vector<16x15xf32> to vector<1x16x15xf32>
    tpu.vector_store %arg3[%c13_221, %c0_222, %c0_223], %967 {strides = array<i32>} : memref<24x16x16xf32, #tpu.memory_space<vmem>>, vector<1x16x15xf32>,
    %cst_224 = arith.constant 0.000000e+00 : f32
    %968 = vector.broadcast %cst_224 : f32 to vector<15x16xf32>
    %969 = arith.maximumf %849, %968 : vector<15x16xf32>
    %cst_225 = arith.constant 0.000000e+00 : f32
    %970 = vector.broadcast %cst_225 : f32 to vector<15x16xf32>
    %971 = arith.subf %970, %969 : vector<15x16xf32>
    %972 = math.exp %971 : vector<15x16xf32>
    %cst_226 = arith.constant 1.000000e+00 : f32
    %973 = vector.broadcast %cst_226 : f32 to vector<15x16xf32>
    %974 = arith.addf %973, %972 : vector<15x16xf32>
    %975 = tpu.reciprocal %974 {approx = true} : vector<15x16xf32> -> vector<15x16xf32>
    %976 = arith.mulf %974, %975 : vector<15x16xf32>
    %cst_227 = arith.constant 2.000000e+00 : f32
    %977 = vector.broadcast %cst_227 : f32 to vector<15x16xf32>
    %978 = arith.subf %977, %976 : vector<15x16xf32>
    %979 = arith.mulf %975, %978 : vector<15x16xf32>
    %c14_228 = arith.constant 14 : index
    %c0_229 = arith.constant 0 : index
    %c0_230 = arith.constant 0 : index
    %980 = vector.load %arg3[%c14_228, %c0_229, %c0_230] : memref<24x16x16xf32, #tpu.memory_space<vmem>>, vector<1x15x16xf32>
    %981 = vector.shape_cast %980 : vector<1x15x16xf32> to vector<15x16xf32>
    %982 = vector.shape_cast %979 : vector<15x16xf32> to vector<1x15x16xf32>
    tpu.vector_store %arg3[%c14_228, %c0_229, %c0_230], %982 {strides = array<i32>} : memref<24x16x16xf32, #tpu.memory_space<vmem>>, vector<1x15x16xf32>,
    %cst_231 = arith.constant 0.000000e+00 : f32
    %983 = vector.broadcast %cst_231 : f32 to vector<15x15xf32>
    %984 = arith.maximumf %865, %983 : vector<15x15xf32>
    %cst_232 = arith.constant 0.000000e+00 : f32
    %985 = vector.broadcast %cst_232 : f32 to vector<15x15xf32>
    %986 = arith.subf %985, %984 : vector<15x15xf32>
    %987 = math.exp %986 : vector<15x15xf32>
    %cst_233 = arith.constant 1.000000e+00 : f32
    %988 = vector.broadcast %cst_233 : f32 to vector<15x15xf32>
    %989 = arith.addf %988, %987 : vector<15x15xf32>
    %990 = tpu.reciprocal %989 {approx = true} : vector<15x15xf32> -> vector<15x15xf32>
    %991 = arith.mulf %989, %990 : vector<15x15xf32>
    %cst_234 = arith.constant 2.000000e+00 : f32
    %992 = vector.broadcast %cst_234 : f32 to vector<15x15xf32>
    %993 = arith.subf %992, %991 : vector<15x15xf32>
    %994 = arith.mulf %990, %993 : vector<15x15xf32>
    %c15_235 = arith.constant 15 : index
    %c0_236 = arith.constant 0 : index
    %c0_237 = arith.constant 0 : index
    %995 = vector.load %arg3[%c15_235, %c0_236, %c0_237] : memref<24x16x16xf32, #tpu.memory_space<vmem>>, vector<1x15x15xf32>
    %996 = vector.shape_cast %995 : vector<1x15x15xf32> to vector<15x15xf32>
    %997 = vector.shape_cast %994 : vector<15x15xf32> to vector<1x15x15xf32>
    tpu.vector_store %arg3[%c15_235, %c0_236, %c0_237], %997 {strides = array<i32>} : memref<24x16x16xf32, #tpu.memory_space<vmem>>, vector<1x15x15xf32>,
    %cst_238 = arith.constant 0.000000e+00 : f32
    %998 = vector.broadcast %cst_238 : f32 to vector<16x16xf32>
    %999 = arith.maximumf %869, %998 : vector<16x16xf32>
    %cst_239 = arith.constant 0.000000e+00 : f32
    %1000 = vector.broadcast %cst_239 : f32 to vector<16x16xf32>
    %1001 = arith.subf %1000, %999 : vector<16x16xf32>
    %1002 = math.exp %1001 : vector<16x16xf32>
    %cst_240 = arith.constant 1.000000e+00 : f32
    %1003 = vector.broadcast %cst_240 : f32 to vector<16x16xf32>
    %1004 = arith.addf %1003, %1002 : vector<16x16xf32>
    %1005 = tpu.reciprocal %1004 {approx = true} : vector<16x16xf32> -> vector<16x16xf32>
    %1006 = arith.mulf %1004, %1005 : vector<16x16xf32>
    %cst_241 = arith.constant 2.000000e+00 : f32
    %1007 = vector.broadcast %cst_241 : f32 to vector<16x16xf32>
    %1008 = arith.subf %1007, %1006 : vector<16x16xf32>
    %1009 = arith.mulf %1005, %1008 : vector<16x16xf32>
    %c16_242 = arith.constant 16 : index
    %c0_243 = arith.constant 0 : index
    %c0_244 = arith.constant 0 : index
    %1010 = vector.load %arg3[%c16_242, %c0_243, %c0_244] : memref<24x16x16xf32, #tpu.memory_space<vmem>>, vector<1x16x16xf32>
    %1011 = vector.shape_cast %1010 : vector<1x16x16xf32> to vector<16x16xf32>
    %1012 = vector.shape_cast %1009 : vector<16x16xf32> to vector<1x16x16xf32>
    tpu.vector_store %arg3[%c16_242, %c0_243, %c0_244], %1012 {strides = array<i32>} : memref<24x16x16xf32, #tpu.memory_space<vmem>>, vector<1x16x16xf32>,
    %cst_245 = arith.constant 0.000000e+00 : f32
    %1013 = vector.broadcast %cst_245 : f32 to vector<16x15xf32>
    %1014 = arith.maximumf %877, %1013 : vector<16x15xf32>
    %cst_246 = arith.constant 0.000000e+00 : f32
    %1015 = vector.broadcast %cst_246 : f32 to vector<16x15xf32>
    %1016 = arith.subf %1015, %1014 : vector<16x15xf32>
    %1017 = math.exp %1016 : vector<16x15xf32>
    %cst_247 = arith.constant 1.000000e+00 : f32
    %1018 = vector.broadcast %cst_247 : f32 to vector<16x15xf32>
    %1019 = arith.addf %1018, %1017 : vector<16x15xf32>
    %1020 = tpu.reciprocal %1019 {approx = true} : vector<16x15xf32> -> vector<16x15xf32>
    %1021 = arith.mulf %1019, %1020 : vector<16x15xf32>
    %cst_248 = arith.constant 2.000000e+00 : f32
    %1022 = vector.broadcast %cst_248 : f32 to vector<16x15xf32>
    %1023 = arith.subf %1022, %1021 : vector<16x15xf32>
    %1024 = arith.mulf %1020, %1023 : vector<16x15xf32>
    %c17_249 = arith.constant 17 : index
    %c0_250 = arith.constant 0 : index
    %c0_251 = arith.constant 0 : index
    %1025 = vector.load %arg3[%c17_249, %c0_250, %c0_251] : memref<24x16x16xf32, #tpu.memory_space<vmem>>, vector<1x16x15xf32>
    %1026 = vector.shape_cast %1025 : vector<1x16x15xf32> to vector<16x15xf32>
    %1027 = vector.shape_cast %1024 : vector<16x15xf32> to vector<1x16x15xf32>
    tpu.vector_store %arg3[%c17_249, %c0_250, %c0_251], %1027 {strides = array<i32>} : memref<24x16x16xf32, #tpu.memory_space<vmem>>, vector<1x16x15xf32>,
    %cst_252 = arith.constant 0.000000e+00 : f32
    %1028 = vector.broadcast %cst_252 : f32 to vector<15x16xf32>
    %1029 = arith.maximumf %885, %1028 : vector<15x16xf32>
    %cst_253 = arith.constant 0.000000e+00 : f32
    %1030 = vector.broadcast %cst_253 : f32 to vector<15x16xf32>
    %1031 = arith.subf %1030, %1029 : vector<15x16xf32>
    %1032 = math.exp %1031 : vector<15x16xf32>
    %cst_254 = arith.constant 1.000000e+00 : f32
    %1033 = vector.broadcast %cst_254 : f32 to vector<15x16xf32>
    %1034 = arith.addf %1033, %1032 : vector<15x16xf32>
    %1035 = tpu.reciprocal %1034 {approx = true} : vector<15x16xf32> -> vector<15x16xf32>
    %1036 = arith.mulf %1034, %1035 : vector<15x16xf32>
    %cst_255 = arith.constant 2.000000e+00 : f32
    %1037 = vector.broadcast %cst_255 : f32 to vector<15x16xf32>
    %1038 = arith.subf %1037, %1036 : vector<15x16xf32>
    %1039 = arith.mulf %1035, %1038 : vector<15x16xf32>
    %c18_256 = arith.constant 18 : index
    %c0_257 = arith.constant 0 : index
    %c0_258 = arith.constant 0 : index
    %1040 = vector.load %arg3[%c18_256, %c0_257, %c0_258] : memref<24x16x16xf32, #tpu.memory_space<vmem>>, vector<1x15x16xf32>
    %1041 = vector.shape_cast %1040 : vector<1x15x16xf32> to vector<15x16xf32>
    %1042 = vector.shape_cast %1039 : vector<15x16xf32> to vector<1x15x16xf32>
    tpu.vector_store %arg3[%c18_256, %c0_257, %c0_258], %1042 {strides = array<i32>} : memref<24x16x16xf32, #tpu.memory_space<vmem>>, vector<1x15x16xf32>,
    %cst_259 = arith.constant 0.000000e+00 : f32
    %1043 = vector.broadcast %cst_259 : f32 to vector<15x15xf32>
    %1044 = arith.maximumf %901, %1043 : vector<15x15xf32>
    %cst_260 = arith.constant 0.000000e+00 : f32
    %1045 = vector.broadcast %cst_260 : f32 to vector<15x15xf32>
    %1046 = arith.subf %1045, %1044 : vector<15x15xf32>
    %1047 = math.exp %1046 : vector<15x15xf32>
    %cst_261 = arith.constant 1.000000e+00 : f32
    %1048 = vector.broadcast %cst_261 : f32 to vector<15x15xf32>
    %1049 = arith.addf %1048, %1047 : vector<15x15xf32>
    %1050 = tpu.reciprocal %1049 {approx = true} : vector<15x15xf32> -> vector<15x15xf32>
    %1051 = arith.mulf %1049, %1050 : vector<15x15xf32>
    %cst_262 = arith.constant 2.000000e+00 : f32
    %1052 = vector.broadcast %cst_262 : f32 to vector<15x15xf32>
    %1053 = arith.subf %1052, %1051 : vector<15x15xf32>
    %1054 = arith.mulf %1050, %1053 : vector<15x15xf32>
    %c19_263 = arith.constant 19 : index
    %c0_264 = arith.constant 0 : index
    %c0_265 = arith.constant 0 : index
    %1055 = vector.load %arg3[%c19_263, %c0_264, %c0_265] : memref<24x16x16xf32, #tpu.memory_space<vmem>>, vector<1x15x15xf32>
    %1056 = vector.shape_cast %1055 : vector<1x15x15xf32> to vector<15x15xf32>
    %1057 = vector.shape_cast %1054 : vector<15x15xf32> to vector<1x15x15xf32>
    tpu.vector_store %arg3[%c19_263, %c0_264, %c0_265], %1057 {strides = array<i32>} : memref<24x16x16xf32, #tpu.memory_space<vmem>>, vector<1x15x15xf32>,
    %cst_266 = arith.constant 0.000000e+00 : f32
    %1058 = vector.broadcast %cst_266 : f32 to vector<16x16xf32>
    %1059 = arith.maximumf %905, %1058 : vector<16x16xf32>
    %cst_267 = arith.constant 0.000000e+00 : f32
    %1060 = vector.broadcast %cst_267 : f32 to vector<16x16xf32>
    %1061 = arith.subf %1060, %1059 : vector<16x16xf32>
    %1062 = math.exp %1061 : vector<16x16xf32>
    %cst_268 = arith.constant 1.000000e+00 : f32
    %1063 = vector.broadcast %cst_268 : f32 to vector<16x16xf32>
    %1064 = arith.addf %1063, %1062 : vector<16x16xf32>
    %1065 = tpu.reciprocal %1064 {approx = true} : vector<16x16xf32> -> vector<16x16xf32>
    %1066 = arith.mulf %1064, %1065 : vector<16x16xf32>
    %cst_269 = arith.constant 2.000000e+00 : f32
    %1067 = vector.broadcast %cst_269 : f32 to vector<16x16xf32>
    %1068 = arith.subf %1067, %1066 : vector<16x16xf32>
    %1069 = arith.mulf %1065, %1068 : vector<16x16xf32>
    %c20_270 = arith.constant 20 : index
    %c0_271 = arith.constant 0 : index
    %c0_272 = arith.constant 0 : index
    %1070 = vector.load %arg3[%c20_270, %c0_271, %c0_272] : memref<24x16x16xf32, #tpu.memory_space<vmem>>, vector<1x16x16xf32>
    %1071 = vector.shape_cast %1070 : vector<1x16x16xf32> to vector<16x16xf32>
    %1072 = vector.shape_cast %1069 : vector<16x16xf32> to vector<1x16x16xf32>
    tpu.vector_store %arg3[%c20_270, %c0_271, %c0_272], %1072 {strides = array<i32>} : memref<24x16x16xf32, #tpu.memory_space<vmem>>, vector<1x16x16xf32>,
    %cst_273 = arith.constant 0.000000e+00 : f32
    %1073 = vector.broadcast %cst_273 : f32 to vector<16x15xf32>
    %1074 = arith.maximumf %913, %1073 : vector<16x15xf32>
    %cst_274 = arith.constant 0.000000e+00 : f32
    %1075 = vector.broadcast %cst_274 : f32 to vector<16x15xf32>
    %1076 = arith.subf %1075, %1074 : vector<16x15xf32>
    %1077 = math.exp %1076 : vector<16x15xf32>
    %cst_275 = arith.constant 1.000000e+00 : f32
    %1078 = vector.broadcast %cst_275 : f32 to vector<16x15xf32>
    %1079 = arith.addf %1078, %1077 : vector<16x15xf32>
    %1080 = tpu.reciprocal %1079 {approx = true} : vector<16x15xf32> -> vector<16x15xf32>
    %1081 = arith.mulf %1079, %1080 : vector<16x15xf32>
    %cst_276 = arith.constant 2.000000e+00 : f32
    %1082 = vector.broadcast %cst_276 : f32 to vector<16x15xf32>
    %1083 = arith.subf %1082, %1081 : vector<16x15xf32>
    %1084 = arith.mulf %1080, %1083 : vector<16x15xf32>
    %c21_277 = arith.constant 21 : index
    %c0_278 = arith.constant 0 : index
    %c0_279 = arith.constant 0 : index
    %1085 = vector.load %arg3[%c21_277, %c0_278, %c0_279] : memref<24x16x16xf32, #tpu.memory_space<vmem>>, vector<1x16x15xf32>
    %1086 = vector.shape_cast %1085 : vector<1x16x15xf32> to vector<16x15xf32>
    %1087 = vector.shape_cast %1084 : vector<16x15xf32> to vector<1x16x15xf32>
    tpu.vector_store %arg3[%c21_277, %c0_278, %c0_279], %1087 {strides = array<i32>} : memref<24x16x16xf32, #tpu.memory_space<vmem>>, vector<1x16x15xf32>,
    %cst_280 = arith.constant 0.000000e+00 : f32
    %1088 = vector.broadcast %cst_280 : f32 to vector<15x16xf32>
    %1089 = arith.maximumf %921, %1088 : vector<15x16xf32>
    %cst_281 = arith.constant 0.000000e+00 : f32
    %1090 = vector.broadcast %cst_281 : f32 to vector<15x16xf32>
    %1091 = arith.subf %1090, %1089 : vector<15x16xf32>
    %1092 = math.exp %1091 : vector<15x16xf32>
    %cst_282 = arith.constant 1.000000e+00 : f32
    %1093 = vector.broadcast %cst_282 : f32 to vector<15x16xf32>
    %1094 = arith.addf %1093, %1092 : vector<15x16xf32>
    %1095 = tpu.reciprocal %1094 {approx = true} : vector<15x16xf32> -> vector<15x16xf32>
    %1096 = arith.mulf %1094, %1095 : vector<15x16xf32>
    %cst_283 = arith.constant 2.000000e+00 : f32
    %1097 = vector.broadcast %cst_283 : f32 to vector<15x16xf32>
    %1098 = arith.subf %1097, %1096 : vector<15x16xf32>
    %1099 = arith.mulf %1095, %1098 : vector<15x16xf32>
    %c22_284 = arith.constant 22 : index
    %c0_285 = arith.constant 0 : index
    %c0_286 = arith.constant 0 : index
    %1100 = vector.load %arg3[%c22_284, %c0_285, %c0_286] : memref<24x16x16xf32, #tpu.memory_space<vmem>>, vector<1x15x16xf32>
    %1101 = vector.shape_cast %1100 : vector<1x15x16xf32> to vector<15x16xf32>
    %1102 = vector.shape_cast %1099 : vector<15x16xf32> to vector<1x15x16xf32>
    tpu.vector_store %arg3[%c22_284, %c0_285, %c0_286], %1102 {strides = array<i32>} : memref<24x16x16xf32, #tpu.memory_space<vmem>>, vector<1x15x16xf32>,
    %cst_287 = arith.constant 0.000000e+00 : f32
    %1103 = vector.broadcast %cst_287 : f32 to vector<15x15xf32>
    %1104 = arith.maximumf %937, %1103 : vector<15x15xf32>
    %cst_288 = arith.constant 0.000000e+00 : f32
    %1105 = vector.broadcast %cst_288 : f32 to vector<15x15xf32>
    %1106 = arith.subf %1105, %1104 : vector<15x15xf32>
    %1107 = math.exp %1106 : vector<15x15xf32>
    %cst_289 = arith.constant 1.000000e+00 : f32
    %1108 = vector.broadcast %cst_289 : f32 to vector<15x15xf32>
    %1109 = arith.addf %1108, %1107 : vector<15x15xf32>
    %1110 = tpu.reciprocal %1109 {approx = true} : vector<15x15xf32> -> vector<15x15xf32>
    %1111 = arith.mulf %1109, %1110 : vector<15x15xf32>
    %cst_290 = arith.constant 2.000000e+00 : f32
    %1112 = vector.broadcast %cst_290 : f32 to vector<15x15xf32>
    %1113 = arith.subf %1112, %1111 : vector<15x15xf32>
    %1114 = arith.mulf %1110, %1113 : vector<15x15xf32>
    %c23_291 = arith.constant 23 : index
    %c0_292 = arith.constant 0 : index
    %c0_293 = arith.constant 0 : index
    %1115 = vector.load %arg3[%c23_291, %c0_292, %c0_293] : memref<24x16x16xf32, #tpu.memory_space<vmem>>, vector<1x15x15xf32>
    %1116 = vector.shape_cast %1115 : vector<1x15x15xf32> to vector<15x15xf32>
    %1117 = vector.shape_cast %1114 : vector<15x15xf32> to vector<1x15x15xf32>
    tpu.vector_store %arg3[%c23_291, %c0_292, %c0_293], %1117 {strides = array<i32>} : memref<24x16x16xf32, #tpu.memory_space<vmem>>, vector<1x15x15xf32>,
    return
  }
}

</mosaic_0001>

<llo_original>
// kernel: conv_transpose_relu_sigmoid.1
$region0: #{conv_transpose_relu_sigmoid.1}
  #allocation0 [shape = 'u32[]', space=smem, size = 0x4, offset = 0x4, fixed_abs, tag = 'smem constant byte address 0x4 - core index']
  #allocation1 [shape = 'u32[72,128]{1,0:T(1,128)}', space=vmem, size = 0x9000, scoped, tag = 'internal scratch']
  %s0 = inlined_call_operand.hbm [shape: f32[6,16,16], index: 0, kind: input, shape index: {}]
  %s1 = inlined_call_operand.vmem [shape: f32[81], index: 1, kind: input, shape index: {}]
  %s2 = inlined_call_operand.hbm [shape: f32[3], index: 2, kind: input, shape index: {}]
  %s3 = inlined_call_operand.vmem [shape: f32[24,16,16], index: 3, kind: output, shape index: {}]
  %s4 = sld [smem:[#allocation0]]
  $region34: #{conv_transpose_relu_sigmoid.1} parent=0
    _
  %s6 = ssub.s32 1, %s4
  %s7 = scalar_select 0, %s6, %s4
  $region1: #{conv_transpose_relu_sigmoid.1} parent=0
    #allocation2 [shape = 'u8[49152]{0}', space=vmem, size = 0xc000, scoped, tag = 'input window, operand 0, single buffered']
    #allocation3 [shape = 's32[1]{0}', space=sflag, size = 0x4, scoped, tag = 'scoped memory for conv_transpose_relu_sigmoid.1']
    #allocation4 [shape = 's32[1]{0}', space=sflag, size = 0x4, scoped, tag = 'scoped memory for conv_transpose_relu_sigmoid.1']
    #allocation5 [shape = 's32[1]{0}', space=sflag, size = 0x4, scoped, tag = 'scoped memory for conv_transpose_relu_sigmoid.1']
    #allocation6 [shape = 'u8[512]{0}', space=smem, size = 0x200, scoped, tag = 'input window, operand 1, single buffered']
    #allocation7 [shape = 'u8[512]{0}', space=smem, size = 0x200, scoped, tag = 'input window, operand 2, single buffered']
    %8 = vsyncpa [#allocation3], 0
    %9 = vsyncpa [#allocation5], 0
    %10 = vsyncpa [#allocation4], 0
    // Predicated region
    $region2: #{conv_transpose_relu_sigmoid.1} parent=1 // pred_check
      _
    $region3: #{conv_transpose_relu_sigmoid.1} parent=1 // pred_check_branch
      %12 = sbr.rel (0) target = $region5
    $region4: #{conv_transpose_relu_sigmoid.1} parent=1 // pred_region
      %14 = vsyncadd [#allocation3], 0
      %s15 = sshll.u32 %s0, 4
      %s16 = int_to_ptr.hbm [resolvable:$true] %s15
      %s17 = sshll.u32 [#allocation2], 4
      %s18 = int_to_ptr.vmem [resolvable:$true] %s17
      %23 = dma.hbm_to_vmem [thread:$0]  %s16, 1536, %s18, [#allocation3], 128, 128, 8
    $region5: #{conv_transpose_relu_sigmoid.1} parent=1 // pred_fallthru
      _
    // Predicated region
    $region6: #{conv_transpose_relu_sigmoid.1} parent=1 // pred_check
      _
    $region7: #{conv_transpose_relu_sigmoid.1} parent=1 // pred_check_branch
      %25 = sbr.rel (0) target = $region9
    $region8: #{conv_transpose_relu_sigmoid.1} parent=1 // pred_region
      %27 = vsyncadd [#allocation5], 0
      %s29 = sshll.u32 %s1, 4
      %s30 = int_to_ptr.vmem [resolvable:$true] %s29
      %32 = dma.vmem_to_smem %s30, 16, [#allocation6], [#allocation5]
    $region9: #{conv_transpose_relu_sigmoid.1} parent=1 // pred_fallthru
      _
    // Predicated region
    $region10: #{conv_transpose_relu_sigmoid.1} parent=1 // pred_check
      _
    $region11: #{conv_transpose_relu_sigmoid.1} parent=1 // pred_check_branch
      %34 = sbr.rel (0) target = $region13
    $region12: #{conv_transpose_relu_sigmoid.1} parent=1 // pred_region
      %36 = vsyncadd [#allocation4], 0
      %s38 = sshll.u32 %s2, 4
      %s39 = int_to_ptr.hbm [resolvable:$true] %s38
      %41 = dma.hbm_to_smem %s39, 16, [#allocation7], [#allocation4]
    $region13: #{conv_transpose_relu_sigmoid.1} parent=1 // pred_fallthru
      _
    // Predicated region
    $region14: #{conv_transpose_relu_sigmoid.1} parent=1 // pred_check
      _
    $region15: #{conv_transpose_relu_sigmoid.1} parent=1 // pred_check_branch
      %43 = sbr.rel (0) target = $region17
    $region16: #{conv_transpose_relu_sigmoid.1} parent=1 // pred_region
      %45 = dma.done [#allocation3], 1536
    $region17: #{conv_transpose_relu_sigmoid.1} parent=1 // pred_fallthru
      _
    // Predicated region
    $region18: #{conv_transpose_relu_sigmoid.1} parent=1 // pred_check
      _
    $region19: #{conv_transpose_relu_sigmoid.1} parent=1 // pred_check_branch
      %47 = sbr.rel (0) target = $region21
    $region20: #{conv_transpose_relu_sigmoid.1} parent=1 // pred_region
      %49 = dma.done [#allocation5], 16
    $region21: #{conv_transpose_relu_sigmoid.1} parent=1 // pred_fallthru
      _
    // Predicated region
    $region22: #{conv_transpose_relu_sigmoid.1} parent=1 // pred_check
      _
    $region23: #{conv_transpose_relu_sigmoid.1} parent=1 // pred_check_branch
      %51 = sbr.rel (0) target = $region25
    $region24: #{conv_transpose_relu_sigmoid.1} parent=1 // pred_region
      %53 = dma.done [#allocation4], 16
    $region25: #{conv_transpose_relu_sigmoid.1} parent=1 // pred_fallthru
      _
    %54 = sfence
    %vm55 = vcmask 130048
    %56 = vst.msk [vmem:[%s3] sm:$0xff] %vm55, 0.0
    %57 = vst.msk [vmem:[%s3 + $0x8] sm:$0xff] %vm55, 0.0
    %58 = vst.msk [vmem:[%s3 + $0x10] sm:$0xff] %vm55, 0.0
    %59 = vst.msk [vmem:[%s3 + $0x18] sm:$0xff] %vm55, 0.0
    %60 = vst.msk [vmem:[%s3 + $0x20] sm:$0xff] %vm55, 0.0
    %61 = vst.msk [vmem:[%s3 + $0x28] sm:$0xff] %vm55, 0.0
    %62 = vst.msk [vmem:[%s3 + $0x30] sm:$0xff] %vm55, 0.0
    %63 = vst.msk [vmem:[%s3 + $0x38] sm:$0xff] %vm55, 0.0
    %64 = vst.msk [vmem:[%s3 + $0x40] sm:$0xff] %vm55, 0.0
    %65 = vst.msk [vmem:[%s3 + $0x48] sm:$0xff] %vm55, 0.0
    %66 = vst.msk [vmem:[%s3 + $0x50] sm:$0xff] %vm55, 0.0
    %67 = vst.msk [vmem:[%s3 + $0x58] sm:$0xff] %vm55, 0.0
    %68 = vst.msk [vmem:[%s3 + $0x60] sm:$0xff] %vm55, 0.0
    %69 = vst.msk [vmem:[%s3 + $0x68] sm:$0xff] %vm55, 0.0
    %70 = vst.msk [vmem:[%s3 + $0x70] sm:$0xff] %vm55, 0.0
    %71 = vst.msk [vmem:[%s3 + $0x78] sm:$0xff] %vm55, 0.0
    %72 = vst.msk [vmem:[%s3 + $0x80] sm:$0xff] %vm55, 0.0
    %73 = vst.msk [vmem:[%s3 + $0x88] sm:$0xff] %vm55, 0.0
    %74 = vst.msk [vmem:[%s3 + $0x90] sm:$0xff] %vm55, 0.0
    %75 = vst.msk [vmem:[%s3 + $0x98] sm:$0xff] %vm55, 0.0
    %76 = vst.msk [vmem:[%s3 + $0xa0] sm:$0xff] %vm55, 0.0
    %77 = vst.msk [vmem:[%s3 + $0xa8] sm:$0xff] %vm55, 0.0
    %78 = vst.msk [vmem:[%s3 + $0xb0] sm:$0xff] %vm55, 0.0
    %79 = vst.msk [vmem:[%s3 + $0xb8] sm:$0xff] %vm55, 0.0
    %80 = vst.msk [vmem:[%s3 + $0xc0] sm:$0xff] %vm55, 0.0
    %81 = vst.msk [vmem:[%s3 + $0xc8] sm:$0xff] %vm55, 0.0
    %82 = vst.msk [vmem:[%s3 + $0xd0] sm:$0xff] %vm55, 0.0
    %83 = vst.msk [vmem:[%s3 + $0xd8] sm:$0xff] %vm55, 0.0
    %84 = vst.msk [vmem:[%s3 + $0xe0] sm:$0xff] %vm55, 0.0
    %85 = vst.msk [vmem:[%s3 + $0xe8] sm:$0xff] %vm55, 0.0
    %86 = vst.msk [vmem:[%s3 + $0xf0] sm:$0xff] %vm55, 0.0
    %87 = vst.msk [vmem:[%s3 + $0xf8] sm:$0xff] %vm55, 0.0
    %88 = vst.msk [vmem:[%s3 + $0x100] sm:$0xff] %vm55, 0.0
    %89 = vst.msk [vmem:[%s3 + $0x108] sm:$0xff] %vm55, 0.0
    %90 = vst.msk [vmem:[%s3 + $0x110] sm:$0xff] %vm55, 0.0
    %91 = vst.msk [vmem:[%s3 + $0x118] sm:$0xff] %vm55, 0.0
    %92 = vst.msk [vmem:[%s3 + $0x120] sm:$0xff] %vm55, 0.0
    %93 = vst.msk [vmem:[%s3 + $0x128] sm:$0xff] %vm55, 0.0
    %94 = vst.msk [vmem:[%s3 + $0x130] sm:$0xff] %vm55, 0.0
    %95 = vst.msk [vmem:[%s3 + $0x138] sm:$0xff] %vm55, 0.0
    %96 = vst.msk [vmem:[%s3 + $0x140] sm:$0xff] %vm55, 0.0
    %97 = vst.msk [vmem:[%s3 + $0x148] sm:$0xff] %vm55, 0.0
    %98 = vst.msk [vmem:[%s3 + $0x150] sm:$0xff] %vm55, 0.0
    %99 = vst.msk [vmem:[%s3 + $0x158] sm:$0xff] %vm55, 0.0
    %100 = vst.msk [vmem:[%s3 + $0x160] sm:$0xff] %vm55, 0.0
    %101 = vst.msk [vmem:[%s3 + $0x168] sm:$0xff] %vm55, 0.0
    %102 = vst.msk [vmem:[%s3 + $0x170] sm:$0xff] %vm55, 0.0
    %103 = vst.msk [vmem:[%s3 + $0x178] sm:$0xff] %vm55, 0.0
    %s104 = sld [smem:[#allocation7]]
    %v105 = vstv %s104
    %s106 = sld [smem:[#allocation7 + $0x1]]
    %v107 = vstv %s106
    %s108 = sld [smem:[#allocation7 + $0x2]]
    %v109 = vstv %s108
    %v110 = vld [vmem:[#allocation2] sm:$0xff]
    %v111 = vld [vmem:[#allocation2 + $0x8] sm:$0xff]
    %s112 = sld [smem:[#allocation6 + $0x4]]
    %v113 = vstv %s112
    %v114 = vmul.f32 %v113, %v110
    %v115 = vmul.f32 %v113, %v111
    %v116 = vadd.f32 %v105, %v114
    %v117 = vadd.f32 %v105, %v115
    %s118 = sld [smem:[#allocation6 + $0x3]]
    %v119 = vstv %s118
    %v120 = vmul.f32 %v119, %v110
    %v121 = vmul.f32 %v119, %v111
    %v122 = vadd.f32 %v105, %v120
    %v123 = vadd.f32 %v105, %v121
    %s124 = sld [smem:[#allocation6 + $0x5]]
    %v125 = vstv %s124
    %v126 = vmul.f32 %v125, %v110
    %v127 = vmul.f32 %v125, %v111
    %130 = vrot.lane.b32.xlu0 %v126, 1
    %v131 = vpop.permute.xlu0 %130
    %132 = vrot.lane.b32.xlu0 %v127, 1
    %v133 = vpop.permute.xlu0 %132
    %v136 = vadd.f32 %v122, %v131
    %v137 = vadd.f32 %v123, %v133
    %s138 = sld [smem:[#allocation6 + $0x1]]
    %v139 = vstv %s138
    %v140 = vmul.f32 %v139, %v110
    %v141 = vmul.f32 %v139, %v111
    %v142 = vadd.f32 %v105, %v140
    %v143 = vadd.f32 %v105, %v141
    %s144 = sld [smem:[#allocation6 + $0x7]]
    %v145 = vstv %s144
    %v146 = vmul.f32 %v145, %v110
    %v147 = vmul.f32 %v145, %v111
    %vm150 = vcmask 1040384
    %v151 = vrot.slane %v146, 7
    %v152 = vrot.slane %v147, 7
    %v153 = vsel %vm150, %v151, %v152
    %v156 = vadd.f32 %v142, %v151
    %v157 = vadd.f32 %v143, %v153
    %s158 = sld [smem:[#allocation6]]
    %v159 = vstv %s158
    %v160 = vmul.f32 %v159, %v110
    %v161 = vmul.f32 %v159, %v111
    %v162 = vadd.f32 %v105, %v160
    %v163 = vadd.f32 %v105, %v161
    %s164 = sld [smem:[#allocation6 + $0x2]]
    %v165 = vstv %s164
    %v166 = vmul.f32 %v165, %v110
    %v167 = vmul.f32 %v165, %v111
    %170 = vrot.lane.b32.xlu0 %v166, 1
    %v171 = vpop.permute.xlu0 %170
    %172 = vrot.lane.b32.xlu0 %v167, 1
    %v173 = vpop.permute.xlu0 %172
    %v176 = vadd.f32 %v162, %v171
    %v177 = vadd.f32 %v163, %v173
    %s178 = sld [smem:[#allocation6 + $0x6]]
    %v179 = vstv %s178
    %v180 = vmul.f32 %v179, %v110
    %v181 = vmul.f32 %v179, %v111
    %v184 = vrot.slane %v180, 7
    %v185 = vrot.slane %v181, 7
    %v186 = vsel %vm150, %v184, %v185
    %v189 = vadd.f32 %v176, %v184
    %v190 = vadd.f32 %v177, %v186
    %s191 = sld [smem:[#allocation6 + $0x8]]
    %v192 = vstv %s191
    %v193 = vmul.f32 %v192, %v110
    %v194 = vmul.f32 %v192, %v111
    %v197 = vrot.slane %v193, 7
    %v198 = vrot.slane %v194, 7
    %v199 = vsel %vm150, %v197, %v198
    %200 = vrot.lane.b32.xlu0 %v197, 1
    %v201 = vpop.permute.xlu0 %200
    %202 = vrot.lane.b32.xlu0 %v199, 1
    %v203 = vpop.permute.xlu0 %202
    %v206 = vadd.f32 %v189, %v201
    %v207 = vadd.f32 %v190, %v203
    %s208 = sld [smem:[#allocation6 + $0xd]]
    %v209 = vstv %s208
    %v210 = vmul.f32 %v209, %v110
    %v211 = vmul.f32 %v209, %v111
    %v212 = vadd.f32 %v107, %v210
    %v213 = vadd.f32 %v107, %v211
    %s214 = sld [smem:[#allocation6 + $0xc]]
    %v215 = vstv %s214
    %v216 = vmul.f32 %v215, %v110
    %v217 = vmul.f32 %v215, %v111
    %v218 = vadd.f32 %v107, %v216
    %v219 = vadd.f32 %v107, %v217
    %s220 = sld [smem:[#allocation6 + $0xe]]
    %v221 = vstv %s220
    %v222 = vmul.f32 %v221, %v110
    %v223 = vmul.f32 %v221, %v111
    %226 = vrot.lane.b32.xlu0 %v222, 1
    %v227 = vpop.permute.xlu0 %226
    %228 = vrot.lane.b32.xlu0 %v223, 1
    %v229 = vpop.permute.xlu0 %228
    %v232 = vadd.f32 %v218, %v227
    %v233 = vadd.f32 %v219, %v229
    %s234 = sld [smem:[#allocation6 + $0xa]]
    %v235 = vstv %s234
    %v236 = vmul.f32 %v235, %v110
    %v237 = vmul.f32 %v235, %v111
    %v238 = vadd.f32 %v107, %v236
    %v239 = vadd.f32 %v107, %v237
    %s240 = sld [smem:[#allocation6 + $0x10]]
    %v241 = vstv %s240
    %v242 = vmul.f32 %v241, %v110
    %v243 = vmul.f32 %v241, %v111
    %v246 = vrot.slane %v242, 7
    %v247 = vrot.slane %v243, 7
    %v248 = vsel %vm150, %v246, %v247
    %v251 = vadd.f32 %v238, %v246
    %v252 = vadd.f32 %v239, %v248
    %s253 = sld [smem:[#allocation6 + $0x9]]
    %v254 = vstv %s253
    %v255 = vmul.f32 %v254, %v110
    %v256 = vmul.f32 %v254, %v111
    %v257 = vadd.f32 %v107, %v255
    %v258 = vadd.f32 %v107, %v256
    %s259 = sld [smem:[#allocation6 + $0xb]]
    %v260 = vstv %s259
    %v261 = vmul.f32 %v260, %v110
    %v262 = vmul.f32 %v260, %v111
    %265 = vrot.lane.b32.xlu0 %v261, 1
    %v266 = vpop.permute.xlu0 %265
    %267 = vrot.lane.b32.xlu0 %v262, 1
    %v268 = vpop.permute.xlu0 %267
    %v271 = vadd.f32 %v257, %v266
    %v272 = vadd.f32 %v258, %v268
    %s273 = sld [smem:[#allocation6 + $0xf]]
    %v274 = vstv %s273
    %v275 = vmul.f32 %v274, %v110
    %v276 = vmul.f32 %v274, %v111
    %v279 = vrot.slane %v275, 7
    %v280 = vrot.slane %v276, 7
    %v281 = vsel %vm150, %v279, %v280
    %v284 = vadd.f32 %v271, %v279
    %v285 = vadd.f32 %v272, %v281
    %s286 = sld [smem:[#allocation6 + $0x11]]
    %v287 = vstv %s286
    %v288 = vmul.f32 %v287, %v110
    %v289 = vmul.f32 %v287, %v111
    %v292 = vrot.slane %v288, 7
    %v293 = vrot.slane %v289, 7
    %v294 = vsel %vm150, %v292, %v293
    %295 = vrot.lane.b32.xlu0 %v292, 1
    %v296 = vpop.permute.xlu0 %295
    %297 = vrot.lane.b32.xlu0 %v294, 1
    %v298 = vpop.permute.xlu0 %297
    %v301 = vadd.f32 %v284, %v296
    %v302 = vadd.f32 %v285, %v298
    %s303 = sld [smem:[#allocation6 + $0x16]]
    %v304 = vstv %s303
    %v305 = vmul.f32 %v304, %v110
    %v306 = vmul.f32 %v304, %v111
    %v307 = vadd.f32 %v109, %v305
    %v308 = vadd.f32 %v109, %v306
    %s309 = sld [smem:[#allocation6 + $0x15]]
    %v310 = vstv %s309
    %v311 = vmul.f32 %v310, %v110
    %v312 = vmul.f32 %v310, %v111
    %v313 = vadd.f32 %v109, %v311
    %v314 = vadd.f32 %v109, %v312
    %s315 = sld [smem:[#allocation6 + $0x17]]
    %v316 = vstv %s315
    %v317 = vmul.f32 %v316, %v110
    %v318 = vmul.f32 %v316, %v111
    %321 = vrot.lane.b32.xlu0 %v317, 1
    %v322 = vpop.permute.xlu0 %321
    %323 = vrot.lane.b32.xlu0 %v318, 1
    %v324 = vpop.permute.xlu0 %323
    %v327 = vadd.f32 %v313, %v322
    %v328 = vadd.f32 %v314, %v324
    %s329 = sld [smem:[#allocation6 + $0x13]]
    %v330 = vstv %s329
    %v331 = vmul.f32 %v330, %v110
    %v332 = vmul.f32 %v330, %v111
    %v333 = vadd.f32 %v109, %v331
    %v334 = vadd.f32 %v109, %v332
    %s335 = sld [smem:[#allocation6 + $0x19]]
    %v336 = vstv %s335
    %v337 = vmul.f32 %v336, %v110
    %v338 = vmul.f32 %v336, %v111
    %v341 = vrot.slane %v337, 7
    %v342 = vrot.slane %v338, 7
    %v343 = vsel %vm150, %v341, %v342
    %v346 = vadd.f32 %v333, %v341
    %v347 = vadd.f32 %v334, %v343
    %s348 = sld [smem:[#allocation6 + $0x12]]
    %v349 = vstv %s348
    %v350 = vmul.f32 %v349, %v110
    %v351 = vmul.f32 %v349, %v111
    %v352 = vadd.f32 %v109, %v350
    %v353 = vadd.f32 %v109, %v351
    %s354 = sld [smem:[#allocation6 + $0x14]]
    %v355 = vstv %s354
    %v356 = vmul.f32 %v355, %v110
    %v357 = vmul.f32 %v355, %v111
    %360 = vrot.lane.b32.xlu0 %v356, 1
    %v361 = vpop.permute.xlu0 %360
    %362 = vrot.lane.b32.xlu0 %v357, 1
    %v363 = vpop.permute.xlu0 %362
    %v366 = vadd.f32 %v352, %v361
    %v367 = vadd.f32 %v353, %v363
    %s368 = sld [smem:[#allocation6 + $0x18]]
    %v369 = vstv %s368
    %v370 = vmul.f32 %v369, %v110
    %v371 = vmul.f32 %v369, %v111
    %v374 = vrot.slane %v370, 7
    %v375 = vrot.slane %v371, 7
    %v376 = vsel %vm150, %v374, %v375
    %v379 = vadd.f32 %v366, %v374
    %v380 = vadd.f32 %v367, %v376
    %s381 = sld [smem:[#allocation6 + $0x1a]]
    %v382 = vstv %s381
    %v383 = vmul.f32 %v382, %v110
    %v384 = vmul.f32 %v382, %v111
    %v387 = vrot.slane %v383, 7
    %v388 = vrot.slane %v384, 7
    %v389 = vsel %vm150, %v387, %v388
    %390 = vrot.lane.b32.xlu0 %v387, 1
    %v391 = vpop.permute.xlu0 %390
    %392 = vrot.lane.b32.xlu0 %v389, 1
    %v393 = vpop.permute.xlu0 %392
    %v396 = vadd.f32 %v379, %v391
    %v397 = vadd.f32 %v380, %v393
    %s398 = scalar_lea.vmem [#allocation2], 16
    %v399 = vld [vmem:[%s398] sm:$0xff]
    %v400 = vld [vmem:[%s398 + $0x8] sm:$0xff]
    %s401 = sld [smem:[#allocation6 + $0x1f]]
    %v402 = vstv %s401
    %v403 = vmul.f32 %v402, %v399
    %v404 = vmul.f32 %v402, %v400
    %v405 = vadd.f32 %v116, %v403
    %v406 = vadd.f32 %v117, %v404
    %s407 = sld [smem:[#allocation6 + $0x1e]]
    %v408 = vstv %s407
    %v409 = vmul.f32 %v408, %v399
    %v410 = vmul.f32 %v408, %v400
    %v411 = vadd.f32 %v136, %v409
    %v412 = vadd.f32 %v137, %v410
    %s413 = sld [smem:[#allocation6 + $0x20]]
    %v414 = vstv %s413
    %v415 = vmul.f32 %v414, %v399
    %v416 = vmul.f32 %v414, %v400
    %419 = vrot.lane.b32.xlu0 %v415, 1
    %v420 = vpop.permute.xlu0 %419
    %421 = vrot.lane.b32.xlu0 %v416, 1
    %v422 = vpop.permute.xlu0 %421
    %v425 = vadd.f32 %v411, %v420
    %v426 = vadd.f32 %v412, %v422
    %s427 = sld [smem:[#allocation6 + $0x1c]]
    %v428 = vstv %s427
    %v429 = vmul.f32 %v428, %v399
    %v430 = vmul.f32 %v428, %v400
    %v431 = vadd.f32 %v156, %v429
    %v432 = vadd.f32 %v157, %v430
    %s433 = sld [smem:[#allocation6 + $0x22]]
    %v434 = vstv %s433
    %v435 = vmul.f32 %v434, %v399
    %v436 = vmul.f32 %v434, %v400
    %v439 = vrot.slane %v435, 7
    %v440 = vrot.slane %v436, 7
    %v441 = vsel %vm150, %v439, %v440
    %v444 = vadd.f32 %v431, %v439
    %v445 = vadd.f32 %v432, %v441
    %s446 = sld [smem:[#allocation6 + $0x1b]]
    %v447 = vstv %s446
    %v448 = vmul.f32 %v447, %v399
    %v449 = vmul.f32 %v447, %v400
    %v450 = vadd.f32 %v206, %v448
    %v451 = vadd.f32 %v207, %v449
    %s452 = sld [smem:[#allocation6 + $0x1d]]
    %v453 = vstv %s452
    %v454 = vmul.f32 %v453, %v399
    %v455 = vmul.f32 %v453, %v400
    %458 = vrot.lane.b32.xlu0 %v454, 1
    %v459 = vpop.permute.xlu0 %458
    %460 = vrot.lane.b32.xlu0 %v455, 1
    %v461 = vpop.permute.xlu0 %460
    %v464 = vadd.f32 %v450, %v459
    %v465 = vadd.f32 %v451, %v461
    %s466 = sld [smem:[#allocation6 + $0x21]]
    %v467 = vstv %s466
    %v468 = vmul.f32 %v467, %v399
    %v469 = vmul.f32 %v467, %v400
    %v472 = vrot.slane %v468, 7
    %v473 = vrot.slane %v469, 7
    %v474 = vsel %vm150, %v472, %v473
    %v477 = vadd.f32 %v464, %v472
    %v478 = vadd.f32 %v465, %v474
    %s479 = sld [smem:[#allocation6 + $0x23]]
    %v480 = vstv %s479
    %v481 = vmul.f32 %v480, %v399
    %v482 = vmul.f32 %v480, %v400
    %v485 = vrot.slane %v481, 7
    %v486 = vrot.slane %v482, 7
    %v487 = vsel %vm150, %v485, %v486
    %488 = vrot.lane.b32.xlu0 %v485, 1
    %v489 = vpop.permute.xlu0 %488
    %490 = vrot.lane.b32.xlu0 %v487, 1
    %v491 = vpop.permute.xlu0 %490
    %v494 = vadd.f32 %v477, %v489
    %v495 = vadd.f32 %v478, %v491
    %s496 = sld [smem:[#allocation6 + $0x28]]
    %v497 = vstv %s496
    %v498 = vmul.f32 %v497, %v399
    %v499 = vmul.f32 %v497, %v400
    %v500 = vadd.f32 %v212, %v498
    %v501 = vadd.f32 %v213, %v499
    %s502 = sld [smem:[#allocation6 + $0x27]]
    %v503 = vstv %s502
    %v504 = vmul.f32 %v503, %v399
    %v505 = vmul.f32 %v503, %v400
    %v506 = vadd.f32 %v232, %v504
    %v507 = vadd.f32 %v233, %v505
    %s508 = sld [smem:[#allocation6 + $0x29]]
    %v509 = vstv %s508
    %v510 = vmul.f32 %v509, %v399
    %v511 = vmul.f32 %v509, %v400
    %514 = vrot.lane.b32.xlu0 %v510, 1
    %v515 = vpop.permute.xlu0 %514
    %516 = vrot.lane.b32.xlu0 %v511, 1
    %v517 = vpop.permute.xlu0 %516
    %v520 = vadd.f32 %v506, %v515
    %v521 = vadd.f32 %v507, %v517
    %s522 = sld [smem:[#allocation6 + $0x25]]
    %v523 = vstv %s522
    %v524 = vmul.f32 %v523, %v399
    %v525 = vmul.f32 %v523, %v400
    %v526 = vadd.f32 %v251, %v524
    %v527 = vadd.f32 %v252, %v525
    %s528 = sld [smem:[#allocation6 + $0x2b]]
    %v529 = vstv %s528
    %v530 = vmul.f32 %v529, %v399
    %v531 = vmul.f32 %v529, %v400
    %v534 = vrot.slane %v530, 7
    %v535 = vrot.slane %v531, 7
    %v536 = vsel %vm150, %v534, %v535
    %v539 = vadd.f32 %v526, %v534
    %v540 = vadd.f32 %v527, %v536
    %s541 = sld [smem:[#allocation6 + $0x24]]
    %v542 = vstv %s541
    %v543 = vmul.f32 %v542, %v399
    %v544 = vmul.f32 %v542, %v400
    %v545 = vadd.f32 %v301, %v543
    %v546 = vadd.f32 %v302, %v544
    %s547 = sld [smem:[#allocation6 + $0x26]]
    %v548 = vstv %s547
    %v549 = vmul.f32 %v548, %v399
    %v550 = vmul.f32 %v548, %v400
    %553 = vrot.lane.b32.xlu0 %v549, 1
    %v554 = vpop.permute.xlu0 %553
    %555 = vrot.lane.b32.xlu0 %v550, 1
    %v556 = vpop.permute.xlu0 %555
    %v559 = vadd.f32 %v545, %v554
    %v560 = vadd.f32 %v546, %v556
    %s561 = sld [smem:[#allocation6 + $0x2a]]
    %v562 = vstv %s561
    %v563 = vmul.f32 %v562, %v399
    %v564 = vmul.f32 %v562, %v400
    %v567 = vrot.slane %v563, 7
    %v568 = vrot.slane %v564, 7
    %v569 = vsel %vm150, %v567, %v568
    %v572 = vadd.f32 %v559, %v567
    %v573 = vadd.f32 %v560, %v569
    %s574 = sld [smem:[#allocation6 + $0x2c]]
    %v575 = vstv %s574
    %v576 = vmul.f32 %v575, %v399
    %v577 = vmul.f32 %v575, %v400
    %v580 = vrot.slane %v576, 7
    %v581 = vrot.slane %v577, 7
    %v582 = vsel %vm150, %v580, %v581
    %583 = vrot.lane.b32.xlu0 %v580, 1
    %v584 = vpop.permute.xlu0 %583
    %585 = vrot.lane.b32.xlu0 %v582, 1
    %v586 = vpop.permute.xlu0 %585
    %v589 = vadd.f32 %v572, %v584
    %v590 = vadd.f32 %v573, %v586
    %s591 = sld [smem:[#allocation6 + $0x31]]
    %v592 = vstv %s591
    %v593 = vmul.f32 %v592, %v399
    %v594 = vmul.f32 %v592, %v400
    %v595 = vadd.f32 %v307, %v593
    %v596 = vadd.f32 %v308, %v594
    %s597 = sld [smem:[#allocation6 + $0x30]]
    %v598 = vstv %s597
    %v599 = vmul.f32 %v598, %v399
    %v600 = vmul.f32 %v598, %v400
    %v601 = vadd.f32 %v327, %v599
    %v602 = vadd.f32 %v328, %v600
    %s603 = sld [smem:[#allocation6 + $0x32]]
    %v604 = vstv %s603
    %v605 = vmul.f32 %v604, %v399
    %v606 = vmul.f32 %v604, %v400
    %609 = vrot.lane.b32.xlu0 %v605, 1
    %v610 = vpop.permute.xlu0 %609
    %611 = vrot.lane.b32.xlu0 %v606, 1
    %v612 = vpop.permute.xlu0 %611
    %v615 = vadd.f32 %v601, %v610
    %v616 = vadd.f32 %v602, %v612
    %s617 = sld [smem:[#allocation6 + $0x2e]]
    %v618 = vstv %s617
    %v619 = vmul.f32 %v618, %v399
    %v620 = vmul.f32 %v618, %v400
    %v621 = vadd.f32 %v346, %v619
    %v622 = vadd.f32 %v347, %v620
    %s623 = sld [smem:[#allocation6 + $0x34]]
    %v624 = vstv %s623
    %v625 = vmul.f32 %v624, %v399
    %v626 = vmul.f32 %v624, %v400
    %v629 = vrot.slane %v625, 7
    %v630 = vrot.slane %v626, 7
    %v631 = vsel %vm150, %v629, %v630
    %v634 = vadd.f32 %v621, %v629
    %v635 = vadd.f32 %v622, %v631
    %s636 = sld [smem:[#allocation6 + $0x2d]]
    %v637 = vstv %s636
    %v638 = vmul.f32 %v637, %v399
    %v639 = vmul.f32 %v637, %v400
    %v640 = vadd.f32 %v396, %v638
    %v641 = vadd.f32 %v397, %v639
    %s642 = sld [smem:[#allocation6 + $0x2f]]
    %v643 = vstv %s642
    %v644 = vmul.f32 %v643, %v399
    %v645 = vmul.f32 %v643, %v400
    %648 = vrot.lane.b32.xlu0 %v644, 1
    %v649 = vpop.permute.xlu0 %648
    %650 = vrot.lane.b32.xlu0 %v645, 1
    %v651 = vpop.permute.xlu0 %650
    %v654 = vadd.f32 %v640, %v649
    %v655 = vadd.f32 %v641, %v651
    %s656 = sld [smem:[#allocation6 + $0x33]]
    %v657 = vstv %s656
    %v658 = vmul.f32 %v657, %v399
    %v659 = vmul.f32 %v657, %v400
    %v662 = vrot.slane %v658, 7
    %v663 = vrot.slane %v659, 7
    %v664 = vsel %vm150, %v662, %v663
    %v667 = vadd.f32 %v654, %v662
    %v668 = vadd.f32 %v655, %v664
    %s669 = sld [smem:[#allocation6 + $0x35]]
    %v670 = vstv %s669
    %v671 = vmul.f32 %v670, %v399
    %v672 = vmul.f32 %v670, %v400
    %v675 = vrot.slane %v671, 7
    %v676 = vrot.slane %v672, 7
    %v677 = vsel %vm150, %v675, %v676
    %678 = vrot.lane.b32.xlu0 %v675, 1
    %v679 = vpop.permute.xlu0 %678
    %680 = vrot.lane.b32.xlu0 %v677, 1
    %v681 = vpop.permute.xlu0 %680
    %v684 = vadd.f32 %v667, %v679
    %v685 = vadd.f32 %v668, %v681
    %s686 = scalar_lea.vmem [#allocation2], 32
    %v687 = vld [vmem:[%s686] sm:$0xff]
    %v688 = vld [vmem:[%s686 + $0x8] sm:$0xff]
    %s689 = sld [smem:[#allocation6 + $0x3a]]
    %v690 = vstv %s689
    %v691 = vmul.f32 %v690, %v687
    %v692 = vmul.f32 %v690, %v688
    %v693 = vadd.f32 %v405, %v691
    %v694 = vadd.f32 %v406, %v692
    %s695 = sld [smem:[#allocation6 + $0x39]]
    %v696 = vstv %s695
    %v697 = vmul.f32 %v696, %v687
    %v698 = vmul.f32 %v696, %v688
    %v699 = vadd.f32 %v425, %v697
    %v700 = vadd.f32 %v426, %v698
    %s701 = sld [smem:[#allocation6 + $0x3b]]
    %v702 = vstv %s701
    %v703 = vmul.f32 %v702, %v687
    %v704 = vmul.f32 %v702, %v688
    %707 = vrot.lane.b32.xlu0 %v703, 1
    %v708 = vpop.permute.xlu0 %707
    %709 = vrot.lane.b32.xlu0 %v704, 1
    %v710 = vpop.permute.xlu0 %709
    %v713 = vadd.f32 %v699, %v708
    %v714 = vadd.f32 %v700, %v710
    %s715 = sld [smem:[#allocation6 + $0x37]]
    %v716 = vstv %s715
    %v717 = vmul.f32 %v716, %v687
    %v718 = vmul.f32 %v716, %v688
    %v719 = vadd.f32 %v444, %v717
    %v720 = vadd.f32 %v445, %v718
    %s721 = sld [smem:[#allocation6 + $0x3d]]
    %v722 = vstv %s721
    %v723 = vmul.f32 %v722, %v687
    %v724 = vmul.f32 %v722, %v688
    %v727 = vrot.slane %v723, 7
    %v728 = vrot.slane %v724, 7
    %v729 = vsel %vm150, %v727, %v728
    %v732 = vadd.f32 %v719, %v727
    %v733 = vadd.f32 %v720, %v729
    %s734 = sld [smem:[#allocation6 + $0x36]]
    %v735 = vstv %s734
    %v736 = vmul.f32 %v735, %v687
    %v737 = vmul.f32 %v735, %v688
    %v738 = vadd.f32 %v494, %v736
    %v739 = vadd.f32 %v495, %v737
    %s740 = sld [smem:[#allocation6 + $0x38]]
    %v741 = vstv %s740
    %v742 = vmul.f32 %v741, %v687
    %v743 = vmul.f32 %v741, %v688
    %746 = vrot.lane.b32.xlu0 %v742, 1
    %v747 = vpop.permute.xlu0 %746
    %748 = vrot.lane.b32.xlu0 %v743, 1
    %v749 = vpop.permute.xlu0 %748
    %v752 = vadd.f32 %v738, %v747
    %v753 = vadd.f32 %v739, %v749
    %s754 = sld [smem:[#allocation6 + $0x3c]]
    %v755 = vstv %s754
    %v756 = vmul.f32 %v755, %v687
    %v757 = vmul.f32 %v755, %v688
    %v760 = vrot.slane %v756, 7
    %v761 = vrot.slane %v757, 7
    %v762 = vsel %vm150, %v760, %v761
    %v765 = vadd.f32 %v752, %v760
    %v766 = vadd.f32 %v753, %v762
    %s767 = sld [smem:[#allocation6 + $0x3e]]
    %v768 = vstv %s767
    %v769 = vmul.f32 %v768, %v687
    %v770 = vmul.f32 %v768, %v688
    %v773 = vrot.slane %v769, 7
    %v774 = vrot.slane %v770, 7
    %v775 = vsel %vm150, %v773, %v774
    %776 = vrot.lane.b32.xlu0 %v773, 1
    %v777 = vpop.permute.xlu0 %776
    %778 = vrot.lane.b32.xlu0 %v775, 1
    %v779 = vpop.permute.xlu0 %778
    %v782 = vadd.f32 %v765, %v777
    %v783 = vadd.f32 %v766, %v779
    %s784 = sld [smem:[#allocation6 + $0x43]]
    %v785 = vstv %s784
    %v786 = vmul.f32 %v785, %v687
    %v787 = vmul.f32 %v785, %v688
    %v788 = vadd.f32 %v500, %v786
    %v789 = vadd.f32 %v501, %v787
    %s790 = sld [smem:[#allocation6 + $0x42]]
    %v791 = vstv %s790
    %v792 = vmul.f32 %v791, %v687
    %v793 = vmul.f32 %v791, %v688
    %v794 = vadd.f32 %v520, %v792
    %v795 = vadd.f32 %v521, %v793
    %s796 = sld [smem:[#allocation6 + $0x44]]
    %v797 = vstv %s796
    %v798 = vmul.f32 %v797, %v687
    %v799 = vmul.f32 %v797, %v688
    %802 = vrot.lane.b32.xlu0 %v798, 1
    %v803 = vpop.permute.xlu0 %802
    %804 = vrot.lane.b32.xlu0 %v799, 1
    %v805 = vpop.permute.xlu0 %804
    %v808 = vadd.f32 %v794, %v803
    %v809 = vadd.f32 %v795, %v805
    %s810 = sld [smem:[#allocation6 + $0x40]]
    %v811 = vstv %s810
    %v812 = vmul.f32 %v811, %v687
    %v813 = vmul.f32 %v811, %v688
    %v814 = vadd.f32 %v539, %v812
    %v815 = vadd.f32 %v540, %v813
    %s816 = sld [smem:[#allocation6 + $0x46]]
    %v817 = vstv %s816
    %v818 = vmul.f32 %v817, %v687
    %v819 = vmul.f32 %v817, %v688
    %v822 = vrot.slane %v818, 7
    %v823 = vrot.slane %v819, 7
    %v824 = vsel %vm150, %v822, %v823
    %v827 = vadd.f32 %v814, %v822
    %v828 = vadd.f32 %v815, %v824
    %s829 = sld [smem:[#allocation6 + $0x3f]]
    %v830 = vstv %s829
    %v831 = vmul.f32 %v830, %v687
    %v832 = vmul.f32 %v830, %v688
    %v833 = vadd.f32 %v589, %v831
    %v834 = vadd.f32 %v590, %v832
    %s835 = sld [smem:[#allocation6 + $0x41]]
    %v836 = vstv %s835
    %v837 = vmul.f32 %v836, %v687
    %v838 = vmul.f32 %v836, %v688
    %841 = vrot.lane.b32.xlu0 %v837, 1
    %v842 = vpop.permute.xlu0 %841
    %843 = vrot.lane.b32.xlu0 %v838, 1
    %v844 = vpop.permute.xlu0 %843
    %v847 = vadd.f32 %v833, %v842
    %v848 = vadd.f32 %v834, %v844
    %s849 = sld [smem:[#allocation6 + $0x45]]
    %v850 = vstv %s849
    %v851 = vmul.f32 %v850, %v687
    %v852 = vmul.f32 %v850, %v688
    %v855 = vrot.slane %v851, 7
    %v856 = vrot.slane %v852, 7
    %v857 = vsel %vm150, %v855, %v856
    %v860 = vadd.f32 %v847, %v855
    %v861 = vadd.f32 %v848, %v857
    %s862 = sld [smem:[#allocation6 + $0x47]]
    %v863 = vstv %s862
    %v864 = vmul.f32 %v863, %v687
    %v865 = vmul.f32 %v863, %v688
    %v868 = vrot.slane %v864, 7
    %v869 = vrot.slane %v865, 7
    %v870 = vsel %vm150, %v868, %v869
    %871 = vrot.lane.b32.xlu0 %v868, 1
    %v872 = vpop.permute.xlu0 %871
    %873 = vrot.lane.b32.xlu0 %v870, 1
    %v874 = vpop.permute.xlu0 %873
    %v877 = vadd.f32 %v860, %v872
    %v878 = vadd.f32 %v861, %v874
    %s879 = sld [smem:[#allocation6 + $0x4c]]
    %v880 = vstv %s879
    %v881 = vmul.f32 %v880, %v687
    %v882 = vmul.f32 %v880, %v688
    %v883 = vadd.f32 %v595, %v881
    %v884 = vadd.f32 %v596, %v882
    %s885 = sld [smem:[#allocation6 + $0x4b]]
    %v886 = vstv %s885
    %v887 = vmul.f32 %v886, %v687
    %v888 = vmul.f32 %v886, %v688
    %v889 = vadd.f32 %v615, %v887
    %v890 = vadd.f32 %v616, %v888
    %s891 = sld [smem:[#allocation6 + $0x4d]]
    %v892 = vstv %s891
    %v893 = vmul.f32 %v892, %v687
    %v894 = vmul.f32 %v892, %v688
    %897 = vrot.lane.b32.xlu0 %v893, 1
    %v898 = vpop.permute.xlu0 %897
    %899 = vrot.lane.b32.xlu0 %v894, 1
    %v900 = vpop.permute.xlu0 %899
    %v903 = vadd.f32 %v889, %v898
    %v904 = vadd.f32 %v890, %v900
    %s905 = sld [smem:[#allocation6 + $0x49]]
    %v906 = vstv %s905
    %v907 = vmul.f32 %v906, %v687
    %v908 = vmul.f32 %v906, %v688
    %v909 = vadd.f32 %v634, %v907
    %v910 = vadd.f32 %v635, %v908
    %s911 = sld [smem:[#allocation6 + $0x4f]]
    %v912 = vstv %s911
    %v913 = vmul.f32 %v912, %v687
    %v914 = vmul.f32 %v912, %v688
    %v917 = vrot.slane %v913, 7
    %v918 = vrot.slane %v914, 7
    %v919 = vsel %vm150, %v917, %v918
    %v922 = vadd.f32 %v909, %v917
    %v923 = vadd.f32 %v910, %v919
    %s924 = sld [smem:[#allocation6 + $0x48]]
    %v925 = vstv %s924
    %v926 = vmul.f32 %v925, %v687
    %v927 = vmul.f32 %v925, %v688
    %v928 = vadd.f32 %v684, %v926
    %v929 = vadd.f32 %v685, %v927
    %s930 = sld [smem:[#allocation6 + $0x4a]]
    %v931 = vstv %s930
    %v932 = vmul.f32 %v931, %v687
    %v933 = vmul.f32 %v931, %v688
    %936 = vrot.lane.b32.xlu0 %v932, 1
    %v937 = vpop.permute.xlu0 %936
    %938 = vrot.lane.b32.xlu0 %v933, 1
    %v939 = vpop.permute.xlu0 %938
    %v942 = vadd.f32 %v928, %v937
    %v943 = vadd.f32 %v929, %v939
    %s944 = sld [smem:[#allocation6 + $0x4e]]
    %v945 = vstv %s944
    %v946 = vmul.f32 %v945, %v687
    %v947 = vmul.f32 %v945, %v688
    %v950 = vrot.slane %v946, 7
    %v951 = vrot.slane %v947, 7
    %v952 = vsel %vm150, %v950, %v951
    %v955 = vadd.f32 %v942, %v950
    %v956 = vadd.f32 %v943, %v952
    %s957 = sld [smem:[#allocation6 + $0x50]]
    %v958 = vstv %s957
    %v959 = vmul.f32 %v958, %v687
    %v960 = vmul.f32 %v958, %v688
    %v963 = vrot.slane %v959, 7
    %v964 = vrot.slane %v960, 7
    %v965 = vsel %vm150, %v963, %v964
    %966 = vrot.lane.b32.xlu0 %v963, 1
    %v967 = vpop.permute.xlu0 %966
    %968 = vrot.lane.b32.xlu0 %v965, 1
    %v969 = vpop.permute.xlu0 %968
    %v972 = vadd.f32 %v955, %v967
    %v973 = vadd.f32 %v956, %v969
    %v974 = vmax.f32 %v693, 0.0
    %v975 = vmax.f32 %v694, 0.0
    %v976 = vsub.f32 0.0, %v974
    %v977 = vsub.f32 0.0, %v975
    %v978 = vmul.f32 %v976, 1.442695
    %v979 = vpow.pop %v978
    %v980 = vmul.f32 %v977, 1.442695
    %v981 = vpow.pop %v980
    %v982 = vadd.f32 %v979, 1.0
    %v983 = vadd.f32 %v981, 1.0
    %v984 = vrcp.pop %v982
    %v985 = vrcp.pop %v983
    %v986 = vmul.f32 %v982, %v984
    %v987 = vmul.f32 %v983, %v985
    %v988 = vsub.f32 2.0, %v986
    %v989 = vsub.f32 2.0, %v987
    %v990 = vmul.f32 %v984, %v988
    %v991 = vmul.f32 %v985, %v989
    %992 = vst.msk [vmem:[%s3] sm:$0xff] %vm55, %v990
    %993 = vst.msk [vmem:[%s3 + $0x8] sm:$0xff] %vm55, %v991
    %v994 = vmax.f32 %v713, 0.0
    %v995 = vmax.f32 %v714, 0.0
    %v996 = vsub.f32 0.0, %v994
    %v997 = vsub.f32 0.0, %v995
    %v998 = vmul.f32 %v996, 1.442695
    %v999 = vpow.pop %v998
    %v1000 = vmul.f32 %v997, 1.442695
    %v1001 = vpow.pop %v1000
    %v1002 = vadd.f32 %v999, 1.0
    %v1003 = vadd.f32 %v1001, 1.0
    %v1004 = vrcp.pop %v1002
    %v1005 = vrcp.pop %v1003
    %v1006 = vmul.f32 %v1002, %v1004
    %v1007 = vmul.f32 %v1003, %v1005
    %v1008 = vsub.f32 2.0, %v1006
    %v1009 = vsub.f32 2.0, %v1007
    %v1010 = vmul.f32 %v1004, %v1008
    %v1011 = vmul.f32 %v1005, %v1009
    %1014 = vrot.lane.b32.xlu0 %v1010, 127
    %v1015 = vpop.permute.xlu0 %1014
    %1016 = vrot.lane.b32.xlu0 %v1011, 127
    %v1017 = vpop.permute.xlu0 %1016
    %s1020 = scalar_lea.vmem %s3, 16
    %vm1021 = vcmask 121856
    %1022 = vst.msk [vmem:[%s1020] sm:$0xff] %vm1021, %v1015
    %1023 = vst.msk [vmem:[%s1020 + $0x8] sm:$0xff] %vm1021, %v1017
    %v1024 = vmax.f32 %v732, 0.0
    %v1025 = vmax.f32 %v733, 0.0
    %v1026 = vsub.f32 0.0, %v1024
    %v1027 = vsub.f32 0.0, %v1025
    %v1028 = vmul.f32 %v1026, 1.442695
    %v1029 = vpow.pop %v1028
    %v1030 = vmul.f32 %v1027, 1.442695
    %v1031 = vpow.pop %v1030
    %v1032 = vadd.f32 %v1029, 1.0
    %v1033 = vadd.f32 %v1031, 1.0
    %v1034 = vrcp.pop %v1032
    %v1035 = vrcp.pop %v1033
    %v1036 = vmul.f32 %v1032, %v1034
    %v1037 = vmul.f32 %v1033, %v1035
    %v1038 = vsub.f32 2.0, %v1036
    %v1039 = vsub.f32 2.0, %v1037
    %v1040 = vmul.f32 %v1034, %v1038
    %v1041 = vmul.f32 %v1035, %v1039
    %s1042 = scalar_lea.vmem %s3, 32
    %vm1043 = vcmask 130049
    %1044 = vst.msk [vmem:[%s1042 - $0x1] sm:$0xfe] %vm1043, %v1040
    %1045 = vst.msk [vmem:[%s1042 + $0x7] sm:$0xff] %vm55, %v1041
    %v1046 = vmax.f32 %v782, 0.0
    %v1047 = vmax.f32 %v783, 0.0
    %v1048 = vsub.f32 0.0, %v1046
    %v1049 = vsub.f32 0.0, %v1047
    %v1050 = vmul.f32 %v1048, 1.442695
    %v1051 = vpow.pop %v1050
    %v1052 = vmul.f32 %v1049, 1.442695
    %v1053 = vpow.pop %v1052
    %v1054 = vadd.f32 %v1051, 1.0
    %v1055 = vadd.f32 %v1053, 1.0
    %v1056 = vrcp.pop %v1054
    %v1057 = vrcp.pop %v1055
    %v1058 = vmul.f32 %v1054, %v1056
    %v1059 = vmul.f32 %v1055, %v1057
    %v1060 = vsub.f32 2.0, %v1058
    %v1061 = vsub.f32 2.0, %v1059
    %v1062 = vmul.f32 %v1056, %v1060
    %v1063 = vmul.f32 %v1057, %v1061
    %1066 = vrot.lane.b32.xlu0 %v1062, 127
    %v1067 = vpop.permute.xlu0 %1066
    %1068 = vrot.lane.b32.xlu0 %v1063, 127
    %v1069 = vpop.permute.xlu0 %1068
    %s1072 = scalar_lea.vmem %s3, 48
    %vm1073 = vcmask 121857
    %1074 = vst.msk [vmem:[%s1072 - $0x1] sm:$0xfe] %vm1073, %v1067
    %1075 = vst.msk [vmem:[%s1072 + $0x7] sm:$0xff] %vm1021, %v1069
    %v1076 = vmax.f32 %v788, 0.0
    %v1077 = vmax.f32 %v789, 0.0
    %v1078 = vsub.f32 0.0, %v1076
    %v1079 = vsub.f32 0.0, %v1077
    %v1080 = vmul.f32 %v1078, 1.442695
    %v1081 = vpow.pop %v1080
    %v1082 = vmul.f32 %v1079, 1.442695
    %v1083 = vpow.pop %v1082
    %v1084 = vadd.f32 %v1081, 1.0
    %v1085 = vadd.f32 %v1083, 1.0
    %v1086 = vrcp.pop %v1084
    %v1087 = vrcp.pop %v1085
    %v1088 = vmul.f32 %v1084, %v1086
    %v1089 = vmul.f32 %v1085, %v1087
    %v1090 = vsub.f32 2.0, %v1088
    %v1091 = vsub.f32 2.0, %v1089
    %v1092 = vmul.f32 %v1086, %v1090
    %v1093 = vmul.f32 %v1087, %v1091
    %s1094 = scalar_lea.vmem %s3, 64
    %1095 = vst.msk [vmem:[%s1094] sm:$0xff] %vm55, %v1092
    %1096 = vst.msk [vmem:[%s1094 + $0x8] sm:$0xff] %vm55, %v1093
    %v1097 = vmax.f32 %v808, 0.0
    %v1098 = vmax.f32 %v809, 0.0
    %v1099 = vsub.f32 0.0, %v1097
    %v1100 = vsub.f32 0.0, %v1098
    %v1101 = vmul.f32 %v1099, 1.442695
    %v1102 = vpow.pop %v1101
    %v1103 = vmul.f32 %v1100, 1.442695
    %v1104 = vpow.pop %v1103
    %v1105 = vadd.f32 %v1102, 1.0
    %v1106 = vadd.f32 %v1104, 1.0
    %v1107 = vrcp.pop %v1105
    %v1108 = vrcp.pop %v1106
    %v1109 = vmul.f32 %v1105, %v1107
    %v1110 = vmul.f32 %v1106, %v1108
    %v1111 = vsub.f32 2.0, %v1109
    %v1112 = vsub.f32 2.0, %v1110
    %v1113 = vmul.f32 %v1107, %v1111
    %v1114 = vmul.f32 %v1108, %v1112
    %1117 = vrot.lane.b32.xlu0 %v1113, 127
    %v1118 = vpop.permute.xlu0 %1117
    %1119 = vrot.lane.b32.xlu0 %v1114, 127
    %v1120 = vpop.permute.xlu0 %1119
    %s1123 = scalar_lea.vmem %s3, 80
    %1124 = vst.msk [vmem:[%s1123] sm:$0xff] %vm1021, %v1118
    %1125 = vst.msk [vmem:[%s1123 + $0x8] sm:$0xff] %vm1021, %v1120
    %v1126 = vmax.f32 %v827, 0.0
    %v1127 = vmax.f32 %v828, 0.0
    %v1128 = vsub.f32 0.0, %v1126
    %v1129 = vsub.f32 0.0, %v1127
    %v1130 = vmul.f32 %v1128, 1.442695
    %v1131 = vpow.pop %v1130
    %v1132 = vmul.f32 %v1129, 1.442695
    %v1133 = vpow.pop %v1132
    %v1134 = vadd.f32 %v1131, 1.0
    %v1135 = vadd.f32 %v1133, 1.0
    %v1136 = vrcp.pop %v1134
    %v1137 = vrcp.pop %v1135
    %v1138 = vmul.f32 %v1134, %v1136
    %v1139 = vmul.f32 %v1135, %v1137
    %v1140 = vsub.f32 2.0, %v1138
    %v1141 = vsub.f32 2.0, %v1139
    %v1142 = vmul.f32 %v1136, %v1140
    %v1143 = vmul.f32 %v1137, %v1141
    %s1144 = scalar_lea.vmem %s3, 96
    %1145 = vst.msk [vmem:[%s1144 - $0x1] sm:$0xfe] %vm1043, %v1142
    %1146 = vst.msk [vmem:[%s1144 + $0x7] sm:$0xff] %vm55, %v1143
    %v1147 = vmax.f32 %v877, 0.0
    %v1148 = vmax.f32 %v878, 0.0
    %v1149 = vsub.f32 0.0, %v1147
    %v1150 = vsub.f32 0.0, %v1148
    %v1151 = vmul.f32 %v1149, 1.442695
    %v1152 = vpow.pop %v1151
    %v1153 = vmul.f32 %v1150, 1.442695
    %v1154 = vpow.pop %v1153
    %v1155 = vadd.f32 %v1152, 1.0
    %v1156 = vadd.f32 %v1154, 1.0
    %v1157 = vrcp.pop %v1155
    %v1158 = vrcp.pop %v1156
    %v1159 = vmul.f32 %v1155, %v1157
    %v1160 = vmul.f32 %v1156, %v1158
    %v1161 = vsub.f32 2.0, %v1159
    %v1162 = vsub.f32 2.0, %v1160
    %v1163 = vmul.f32 %v1157, %v1161
    %v1164 = vmul.f32 %v1158, %v1162
    %1167 = vrot.lane.b32.xlu0 %v1163, 127
    %v1168 = vpop.permute.xlu0 %1167
    %1169 = vrot.lane.b32.xlu0 %v1164, 127
    %v1170 = vpop.permute.xlu0 %1169
    %s1173 = scalar_lea.vmem %s3, 112
    %1174 = vst.msk [vmem:[%s1173 - $0x1] sm:$0xfe] %vm1073, %v1168
    %1175 = vst.msk [vmem:[%s1173 + $0x7] sm:$0xff] %vm1021, %v1170
    %v1176 = vmax.f32 %v883, 0.0
    %v1177 = vmax.f32 %v884, 0.0
    %v1178 = vsub.f32 0.0, %v1176
    %v1179 = vsub.f32 0.0, %v1177
    %v1180 = vmul.f32 %v1178, 1.442695
    %v1181 = vpow.pop %v1180
    %v1182 = vmul.f32 %v1179, 1.442695
    %v1183 = vpow.pop %v1182
    %v1184 = vadd.f32 %v1181, 1.0
    %v1185 = vadd.f32 %v1183, 1.0
    %v1186 = vrcp.pop %v1184
    %v1187 = vrcp.pop %v1185
    %v1188 = vmul.f32 %v1184, %v1186
    %v1189 = vmul.f32 %v1185, %v1187
    %v1190 = vsub.f32 2.0, %v1188
    %v1191 = vsub.f32 2.0, %v1189
    %v1192 = vmul.f32 %v1186, %v1190
    %v1193 = vmul.f32 %v1187, %v1191
    %s1194 = scalar_lea.vmem %s3, 128
    %1195 = vst.msk [vmem:[%s1194] sm:$0xff] %vm55, %v1192
    %1196 = vst.msk [vmem:[%s1194 + $0x8] sm:$0xff] %vm55, %v1193
    %v1197 = vmax.f32 %v903, 0.0
    %v1198 = vmax.f32 %v904, 0.0
    %v1199 = vsub.f32 0.0, %v1197
    %v1200 = vsub.f32 0.0, %v1198
    %v1201 = vmul.f32 %v1199, 1.442695
    %v1202 = vpow.pop %v1201
    %v1203 = vmul.f32 %v1200, 1.442695
    %v1204 = vpow.pop %v1203
    %v1205 = vadd.f32 %v1202, 1.0
    %v1206 = vadd.f32 %v1204, 1.0
    %v1207 = vrcp.pop %v1205
    %v1208 = vrcp.pop %v1206
    %v1209 = vmul.f32 %v1205, %v1207
    %v1210 = vmul.f32 %v1206, %v1208
    %v1211 = vsub.f32 2.0, %v1209
    %v1212 = vsub.f32 2.0, %v1210
    %v1213 = vmul.f32 %v1207, %v1211
    %v1214 = vmul.f32 %v1208, %v1212
    %1217 = vrot.lane.b32.xlu0 %v1213, 127
    %v1218 = vpop.permute.xlu0 %1217
    %1219 = vrot.lane.b32.xlu0 %v1214, 127
    %v1220 = vpop.permute.xlu0 %1219
    %s1223 = scalar_lea.vmem %s3, 144
    %1224 = vst.msk [vmem:[%s1223] sm:$0xff] %vm1021, %v1218
    %1225 = vst.msk [vmem:[%s1223 + $0x8] sm:$0xff] %vm1021, %v1220
    %v1226 = vmax.f32 %v922, 0.0
    %v1227 = vmax.f32 %v923, 0.0
    %v1228 = vsub.f32 0.0, %v1226
    %v1229 = vsub.f32 0.0, %v1227
    %v1230 = vmul.f32 %v1228, 1.442695
    %v1231 = vpow.pop %v1230
    %v1232 = vmul.f32 %v1229, 1.442695
    %v1233 = vpow.pop %v1232
    %v1234 = vadd.f32 %v1231, 1.0
    %v1235 = vadd.f32 %v1233, 1.0
    %v1236 = vrcp.pop %v1234
    %v1237 = vrcp.pop %v1235
    %v1238 = vmul.f32 %v1234, %v1236
    %v1239 = vmul.f32 %v1235, %v1237
    %v1240 = vsub.f32 2.0, %v1238
    %v1241 = vsub.f32 2.0, %v1239
    %v1242 = vmul.f32 %v1236, %v1240
    %v1243 = vmul.f32 %v1237, %v1241
    %s1244 = scalar_lea.vmem %s3, 160
    %1245 = vst.msk [vmem:[%s1244 - $0x1] sm:$0xfe] %vm1043, %v1242
    %1246 = vst.msk [vmem:[%s1244 + $0x7] sm:$0xff] %vm55, %v1243
    %v1247 = vmax.f32 %v972, 0.0
    %v1248 = vmax.f32 %v973, 0.0
    %v1249 = vsub.f32 0.0, %v1247
    %v1250 = vsub.f32 0.0, %v1248
    %v1251 = vmul.f32 %v1249, 1.442695
    %v1252 = vpow.pop %v1251
    %v1253 = vmul.f32 %v1250, 1.442695
    %v1254 = vpow.pop %v1253
    %v1255 = vadd.f32 %v1252, 1.0
    %v1256 = vadd.f32 %v1254, 1.0
    %v1257 = vrcp.pop %v1255
    %v1258 = vrcp.pop %v1256
    %v1259 = vmul.f32 %v1255, %v1257
    %v1260 = vmul.f32 %v1256, %v1258
    %v1261 = vsub.f32 2.0, %v1259
    %v1262 = vsub.f32 2.0, %v1260
    %v1263 = vmul.f32 %v1257, %v1261
    %v1264 = vmul.f32 %v1258, %v1262
    %1267 = vrot.lane.b32.xlu0 %v1263, 127
    %v1268 = vpop.permute.xlu0 %1267
    %1269 = vrot.lane.b32.xlu0 %v1264, 127
    %v1270 = vpop.permute.xlu0 %1269
    %s1273 = scalar_lea.vmem %s3, 176
    %1274 = vst.msk [vmem:[%s1273 - $0x1] sm:$0xfe] %vm1073, %v1268
    %1275 = vst.msk [vmem:[%s1273 + $0x7] sm:$0xff] %vm1021, %v1270
    %s1276 = sld [smem:[#allocation7]]
    %v1277 = vstv %s1276
    %s1278 = sld [smem:[#allocation7 + $0x1]]
    %v1279 = vstv %s1278
    %s1280 = sld [smem:[#allocation7 + $0x2]]
    %v1281 = vstv %s1280
    %s1282 = scalar_lea.vmem [#allocation2], 48
    %v1283 = vld [vmem:[%s1282] sm:$0xff]
    %v1284 = vld [vmem:[%s1282 + $0x8] sm:$0xff]
    %s1285 = sld [smem:[#allocation6 + $0x4]]
    %v1286 = vstv %s1285
    %v1287 = vmul.f32 %v1286, %v1283
    %v1288 = vmul.f32 %v1286, %v1284
    %v1289 = vadd.f32 %v1277, %v1287
    %v1290 = vadd.f32 %v1277, %v1288
    %s1291 = sld [smem:[#allocation6 + $0x3]]
    %v1292 = vstv %s1291
    %v1293 = vmul.f32 %v1292, %v1283
    %v1294 = vmul.f32 %v1292, %v1284
    %v1295 = vadd.f32 %v1277, %v1293
    %v1296 = vadd.f32 %v1277, %v1294
    %s1297 = sld [smem:[#allocation6 + $0x5]]
    %v1298 = vstv %s1297
    %v1299 = vmul.f32 %v1298, %v1283
    %v1300 = vmul.f32 %v1298, %v1284
    %1303 = vrot.lane.b32.xlu0 %v1299, 1
    %v1304 = vpop.permute.xlu0 %1303
    %1305 = vrot.lane.b32.xlu0 %v1300, 1
    %v1306 = vpop.permute.xlu0 %1305
    %v1309 = vadd.f32 %v1295, %v1304
    %v1310 = vadd.f32 %v1296, %v1306
    %s1311 = sld [smem:[#allocation6 + $0x1]]
    %v1312 = vstv %s1311
    %v1313 = vmul.f32 %v1312, %v1283
    %v1314 = vmul.f32 %v1312, %v1284
    %v1315 = vadd.f32 %v1277, %v1313
    %v1316 = vadd.f32 %v1277, %v1314
    %s1317 = sld [smem:[#allocation6 + $0x7]]
    %v1318 = vstv %s1317
    %v1319 = vmul.f32 %v1318, %v1283
    %v1320 = vmul.f32 %v1318, %v1284
    %v1323 = vrot.slane %v1319, 7
    %v1324 = vrot.slane %v1320, 7
    %v1325 = vsel %vm150, %v1323, %v1324
    %v1328 = vadd.f32 %v1315, %v1323
    %v1329 = vadd.f32 %v1316, %v1325
    %s1330 = sld [smem:[#allocation6]]
    %v1331 = vstv %s1330
    %v1332 = vmul.f32 %v1331, %v1283
    %v1333 = vmul.f32 %v1331, %v1284
    %v1334 = vadd.f32 %v1277, %v1332
    %v1335 = vadd.f32 %v1277, %v1333
    %s1336 = sld [smem:[#allocation6 + $0x2]]
    %v1337 = vstv %s1336
    %v1338 = vmul.f32 %v1337, %v1283
    %v1339 = vmul.f32 %v1337, %v1284
    %1342 = vrot.lane.b32.xlu0 %v1338, 1
    %v1343 = vpop.permute.xlu0 %1342
    %1344 = vrot.lane.b32.xlu0 %v1339, 1
    %v1345 = vpop.permute.xlu0 %1344
    %v1348 = vadd.f32 %v1334, %v1343
    %v1349 = vadd.f32 %v1335, %v1345
    %s1350 = sld [smem:[#allocation6 + $0x6]]
    %v1351 = vstv %s1350
    %v1352 = vmul.f32 %v1351, %v1283
    %v1353 = vmul.f32 %v1351, %v1284
    %v1356 = vrot.slane %v1352, 7
    %v1357 = vrot.slane %v1353, 7
    %v1358 = vsel %vm150, %v1356, %v1357
    %v1361 = vadd.f32 %v1348, %v1356
    %v1362 = vadd.f32 %v1349, %v1358
    %s1363 = sld [smem:[#allocation6 + $0x8]]
    %v1364 = vstv %s1363
    %v1365 = vmul.f32 %v1364, %v1283
    %v1366 = vmul.f32 %v1364, %v1284
    %v1369 = vrot.slane %v1365, 7
    %v1370 = vrot.slane %v1366, 7
    %v1371 = vsel %vm150, %v1369, %v1370
    %1372 = vrot.lane.b32.xlu0 %v1369, 1
    %v1373 = vpop.permute.xlu0 %1372
    %1374 = vrot.lane.b32.xlu0 %v1371, 1
    %v1375 = vpop.permute.xlu0 %1374
    %v1378 = vadd.f32 %v1361, %v1373
    %v1379 = vadd.f32 %v1362, %v1375
    %s1380 = sld [smem:[#allocation6 + $0xd]]
    %v1381 = vstv %s1380
    %v1382 = vmul.f32 %v1381, %v1283
    %v1383 = vmul.f32 %v1381, %v1284
    %v1384 = vadd.f32 %v1279, %v1382
    %v1385 = vadd.f32 %v1279, %v1383
    %s1386 = sld [smem:[#allocation6 + $0xc]]
    %v1387 = vstv %s1386
    %v1388 = vmul.f32 %v1387, %v1283
    %v1389 = vmul.f32 %v1387, %v1284
    %v1390 = vadd.f32 %v1279, %v1388
    %v1391 = vadd.f32 %v1279, %v1389
    %s1392 = sld [smem:[#allocation6 + $0xe]]
    %v1393 = vstv %s1392
    %v1394 = vmul.f32 %v1393, %v1283
    %v1395 = vmul.f32 %v1393, %v1284
    %1398 = vrot.lane.b32.xlu0 %v1394, 1
    %v1399 = vpop.permute.xlu0 %1398
    %1400 = vrot.lane.b32.xlu0 %v1395, 1
    %v1401 = vpop.permute.xlu0 %1400
    %v1404 = vadd.f32 %v1390, %v1399
    %v1405 = vadd.f32 %v1391, %v1401
    %s1406 = sld [smem:[#allocation6 + $0xa]]
    %v1407 = vstv %s1406
    %v1408 = vmul.f32 %v1407, %v1283
    %v1409 = vmul.f32 %v1407, %v1284
    %v1410 = vadd.f32 %v1279, %v1408
    %v1411 = vadd.f32 %v1279, %v1409
    %s1412 = sld [smem:[#allocation6 + $0x10]]
    %v1413 = vstv %s1412
    %v1414 = vmul.f32 %v1413, %v1283
    %v1415 = vmul.f32 %v1413, %v1284
    %v1418 = vrot.slane %v1414, 7
    %v1419 = vrot.slane %v1415, 7
    %v1420 = vsel %vm150, %v1418, %v1419
    %v1423 = vadd.f32 %v1410, %v1418
    %v1424 = vadd.f32 %v1411, %v1420
    %s1425 = sld [smem:[#allocation6 + $0x9]]
    %v1426 = vstv %s1425
    %v1427 = vmul.f32 %v1426, %v1283
    %v1428 = vmul.f32 %v1426, %v1284
    %v1429 = vadd.f32 %v1279, %v1427
    %v1430 = vadd.f32 %v1279, %v1428
    %s1431 = sld [smem:[#allocation6 + $0xb]]
    %v1432 = vstv %s1431
    %v1433 = vmul.f32 %v1432, %v1283
    %v1434 = vmul.f32 %v1432, %v1284
    %1437 = vrot.lane.b32.xlu0 %v1433, 1
    %v1438 = vpop.permute.xlu0 %1437
    %1439 = vrot.lane.b32.xlu0 %v1434, 1
    %v1440 = vpop.permute.xlu0 %1439
    %v1443 = vadd.f32 %v1429, %v1438
    %v1444 = vadd.f32 %v1430, %v1440
    %s1445 = sld [smem:[#allocation6 + $0xf]]
    %v1446 = vstv %s1445
    %v1447 = vmul.f32 %v1446, %v1283
    %v1448 = vmul.f32 %v1446, %v1284
    %v1451 = vrot.slane %v1447, 7
    %v1452 = vrot.slane %v1448, 7
    %v1453 = vsel %vm150, %v1451, %v1452
    %v1456 = vadd.f32 %v1443, %v1451
    %v1457 = vadd.f32 %v1444, %v1453
    %s1458 = sld [smem:[#allocation6 + $0x11]]
    %v1459 = vstv %s1458
    %v1460 = vmul.f32 %v1459, %v1283
    %v1461 = vmul.f32 %v1459, %v1284
    %v1464 = vrot.slane %v1460, 7
    %v1465 = vrot.slane %v1461, 7
    %v1466 = vsel %vm150, %v1464, %v1465
    %1467 = vrot.lane.b32.xlu0 %v1464, 1
    %v1468 = vpop.permute.xlu0 %1467
    %1469 = vrot.lane.b32.xlu0 %v1466, 1
    %v1470 = vpop.permute.xlu0 %1469
    %v1473 = vadd.f32 %v1456, %v1468
    %v1474 = vadd.f32 %v1457, %v1470
    %s1475 = sld [smem:[#allocation6 + $0x16]]
    %v1476 = vstv %s1475
    %v1477 = vmul.f32 %v1476, %v1283
    %v1478 = vmul.f32 %v1476, %v1284
    %v1479 = vadd.f32 %v1281, %v1477
    %v1480 = vadd.f32 %v1281, %v1478
    %s1481 = sld [smem:[#allocation6 + $0x15]]
    %v1482 = vstv %s1481
    %v1483 = vmul.f32 %v1482, %v1283
    %v1484 = vmul.f32 %v1482, %v1284
    %v1485 = vadd.f32 %v1281, %v1483
    %v1486 = vadd.f32 %v1281, %v1484
    %s1487 = sld [smem:[#allocation6 + $0x17]]
    %v1488 = vstv %s1487
    %v1489 = vmul.f32 %v1488, %v1283
    %v1490 = vmul.f32 %v1488, %v1284
    %1493 = vrot.lane.b32.xlu0 %v1489, 1
    %v1494 = vpop.permute.xlu0 %1493
    %1495 = vrot.lane.b32.xlu0 %v1490, 1
    %v1496 = vpop.permute.xlu0 %1495
    %v1499 = vadd.f32 %v1485, %v1494
    %v1500 = vadd.f32 %v1486, %v1496
    %s1501 = sld [smem:[#allocation6 + $0x13]]
    %v1502 = vstv %s1501
    %v1503 = vmul.f32 %v1502, %v1283
    %v1504 = vmul.f32 %v1502, %v1284
    %v1505 = vadd.f32 %v1281, %v1503
    %v1506 = vadd.f32 %v1281, %v1504
    %s1507 = sld [smem:[#allocation6 + $0x19]]
    %v1508 = vstv %s1507
    %v1509 = vmul.f32 %v1508, %v1283
    %v1510 = vmul.f32 %v1508, %v1284
    %v1513 = vrot.slane %v1509, 7
    %v1514 = vrot.slane %v1510, 7
    %v1515 = vsel %vm150, %v1513, %v1514
    %v1518 = vadd.f32 %v1505, %v1513
    %v1519 = vadd.f32 %v1506, %v1515
    %s1520 = sld [smem:[#allocation6 + $0x12]]
    %v1521 = vstv %s1520
    %v1522 = vmul.f32 %v1521, %v1283
    %v1523 = vmul.f32 %v1521, %v1284
    %v1524 = vadd.f32 %v1281, %v1522
    %v1525 = vadd.f32 %v1281, %v1523
    %s1526 = sld [smem:[#allocation6 + $0x14]]
    %v1527 = vstv %s1526
    %v1528 = vmul.f32 %v1527, %v1283
    %v1529 = vmul.f32 %v1527, %v1284
    %1532 = vrot.lane.b32.xlu0 %v1528, 1
    %v1533 = vpop.permute.xlu0 %1532
    %1534 = vrot.lane.b32.xlu0 %v1529, 1
    %v1535 = vpop.permute.xlu0 %1534
    %v1538 = vadd.f32 %v1524, %v1533
    %v1539 = vadd.f32 %v1525, %v1535
    %s1540 = sld [smem:[#allocation6 + $0x18]]
    %v1541 = vstv %s1540
    %v1542 = vmul.f32 %v1541, %v1283
    %v1543 = vmul.f32 %v1541, %v1284
    %v1546 = vrot.slane %v1542, 7
    %v1547 = vrot.slane %v1543, 7
    %v1548 = vsel %vm150, %v1546, %v1547
    %v1551 = vadd.f32 %v1538, %v1546
    %v1552 = vadd.f32 %v1539, %v1548
    %s1553 = sld [smem:[#allocation6 + $0x1a]]
    %v1554 = vstv %s1553
    %v1555 = vmul.f32 %v1554, %v1283
    %v1556 = vmul.f32 %v1554, %v1284
    %v1559 = vrot.slane %v1555, 7
    %v1560 = vrot.slane %v1556, 7
    %v1561 = vsel %vm150, %v1559, %v1560
    %1562 = vrot.lane.b32.xlu0 %v1559, 1
    %v1563 = vpop.permute.xlu0 %1562
    %1564 = vrot.lane.b32.xlu0 %v1561, 1
    %v1565 = vpop.permute.xlu0 %1564
    %v1568 = vadd.f32 %v1551, %v1563
    %v1569 = vadd.f32 %v1552, %v1565
    %s1570 = scalar_lea.vmem [#allocation2], 64
    %v1571 = vld [vmem:[%s1570] sm:$0xff]
    %v1572 = vld [vmem:[%s1570 + $0x8] sm:$0xff]
    %s1573 = sld [smem:[#allocation6 + $0x1f]]
    %v1574 = vstv %s1573
    %v1575 = vmul.f32 %v1574, %v1571
    %v1576 = vmul.f32 %v1574, %v1572
    %v1577 = vadd.f32 %v1289, %v1575
    %v1578 = vadd.f32 %v1290, %v1576
    %s1579 = sld [smem:[#allocation6 + $0x1e]]
    %v1580 = vstv %s1579
    %v1581 = vmul.f32 %v1580, %v1571
    %v1582 = vmul.f32 %v1580, %v1572
    %v1583 = vadd.f32 %v1309, %v1581
    %v1584 = vadd.f32 %v1310, %v1582
    %s1585 = sld [smem:[#allocation6 + $0x20]]
    %v1586 = vstv %s1585
    %v1587 = vmul.f32 %v1586, %v1571
    %v1588 = vmul.f32 %v1586, %v1572
    %1591 = vrot.lane.b32.xlu0 %v1587, 1
    %v1592 = vpop.permute.xlu0 %1591
    %1593 = vrot.lane.b32.xlu0 %v1588, 1
    %v1594 = vpop.permute.xlu0 %1593
    %v1597 = vadd.f32 %v1583, %v1592
    %v1598 = vadd.f32 %v1584, %v1594
    %s1599 = sld [smem:[#allocation6 + $0x1c]]
    %v1600 = vstv %s1599
    %v1601 = vmul.f32 %v1600, %v1571
    %v1602 = vmul.f32 %v1600, %v1572
    %v1603 = vadd.f32 %v1328, %v1601
    %v1604 = vadd.f32 %v1329, %v1602
    %s1605 = sld [smem:[#allocation6 + $0x22]]
    %v1606 = vstv %s1605
    %v1607 = vmul.f32 %v1606, %v1571
    %v1608 = vmul.f32 %v1606, %v1572
    %v1611 = vrot.slane %v1607, 7
    %v1612 = vrot.slane %v1608, 7
    %v1613 = vsel %vm150, %v1611, %v1612
    %v1616 = vadd.f32 %v1603, %v1611
    %v1617 = vadd.f32 %v1604, %v1613
    %s1618 = sld [smem:[#allocation6 + $0x1b]]
    %v1619 = vstv %s1618
    %v1620 = vmul.f32 %v1619, %v1571
    %v1621 = vmul.f32 %v1619, %v1572
    %v1622 = vadd.f32 %v1378, %v1620
    %v1623 = vadd.f32 %v1379, %v1621
    %s1624 = sld [smem:[#allocation6 + $0x1d]]
    %v1625 = vstv %s1624
    %v1626 = vmul.f32 %v1625, %v1571
    %v1627 = vmul.f32 %v1625, %v1572
    %1630 = vrot.lane.b32.xlu0 %v1626, 1
    %v1631 = vpop.permute.xlu0 %1630
    %1632 = vrot.lane.b32.xlu0 %v1627, 1
    %v1633 = vpop.permute.xlu0 %1632
    %v1636 = vadd.f32 %v1622, %v1631
    %v1637 = vadd.f32 %v1623, %v1633
    %s1638 = sld [smem:[#allocation6 + $0x21]]
    %v1639 = vstv %s1638
    %v1640 = vmul.f32 %v1639, %v1571
    %v1641 = vmul.f32 %v1639, %v1572
    %v1644 = vrot.slane %v1640, 7
    %v1645 = vrot.slane %v1641, 7
    %v1646 = vsel %vm150, %v1644, %v1645
    %v1649 = vadd.f32 %v1636, %v1644
    %v1650 = vadd.f32 %v1637, %v1646
    %s1651 = sld [smem:[#allocation6 + $0x23]]
    %v1652 = vstv %s1651
    %v1653 = vmul.f32 %v1652, %v1571
    %v1654 = vmul.f32 %v1652, %v1572
    %v1657 = vrot.slane %v1653, 7
    %v1658 = vrot.slane %v1654, 7
    %v1659 = vsel %vm150, %v1657, %v1658
    %1660 = vrot.lane.b32.xlu0 %v1657, 1
    %v1661 = vpop.permute.xlu0 %1660
    %1662 = vrot.lane.b32.xlu0 %v1659, 1
    %v1663 = vpop.permute.xlu0 %1662
    %v1666 = vadd.f32 %v1649, %v1661
    %v1667 = vadd.f32 %v1650, %v1663
    %s1668 = sld [smem:[#allocation6 + $0x28]]
    %v1669 = vstv %s1668
    %v1670 = vmul.f32 %v1669, %v1571
    %v1671 = vmul.f32 %v1669, %v1572
    %v1672 = vadd.f32 %v1384, %v1670
    %v1673 = vadd.f32 %v1385, %v1671
    %s1674 = sld [smem:[#allocation6 + $0x27]]
    %v1675 = vstv %s1674
    %v1676 = vmul.f32 %v1675, %v1571
    %v1677 = vmul.f32 %v1675, %v1572
    %v1678 = vadd.f32 %v1404, %v1676
    %v1679 = vadd.f32 %v1405, %v1677
    %s1680 = sld [smem:[#allocation6 + $0x29]]
    %v1681 = vstv %s1680
    %v1682 = vmul.f32 %v1681, %v1571
    %v1683 = vmul.f32 %v1681, %v1572
    %1686 = vrot.lane.b32.xlu0 %v1682, 1
    %v1687 = vpop.permute.xlu0 %1686
    %1688 = vrot.lane.b32.xlu0 %v1683, 1
    %v1689 = vpop.permute.xlu0 %1688
    %v1692 = vadd.f32 %v1678, %v1687
    %v1693 = vadd.f32 %v1679, %v1689
    %s1694 = sld [smem:[#allocation6 + $0x25]]
    %v1695 = vstv %s1694
    %v1696 = vmul.f32 %v1695, %v1571
    %v1697 = vmul.f32 %v1695, %v1572
    %v1698 = vadd.f32 %v1423, %v1696
    %v1699 = vadd.f32 %v1424, %v1697
    %s1700 = sld [smem:[#allocation6 + $0x2b]]
    %v1701 = vstv %s1700
    %v1702 = vmul.f32 %v1701, %v1571
    %v1703 = vmul.f32 %v1701, %v1572
    %v1706 = vrot.slane %v1702, 7
    %v1707 = vrot.slane %v1703, 7
    %v1708 = vsel %vm150, %v1706, %v1707
    %v1711 = vadd.f32 %v1698, %v1706
    %v1712 = vadd.f32 %v1699, %v1708
    %s1713 = sld [smem:[#allocation6 + $0x24]]
    %v1714 = vstv %s1713
    %v1715 = vmul.f32 %v1714, %v1571
    %v1716 = vmul.f32 %v1714, %v1572
    %v1717 = vadd.f32 %v1473, %v1715
    %v1718 = vadd.f32 %v1474, %v1716
    %s1719 = sld [smem:[#allocation6 + $0x26]]
    %v1720 = vstv %s1719
    %v1721 = vmul.f32 %v1720, %v1571
    %v1722 = vmul.f32 %v1720, %v1572
    %1725 = vrot.lane.b32.xlu0 %v1721, 1
    %v1726 = vpop.permute.xlu0 %1725
    %1727 = vrot.lane.b32.xlu0 %v1722, 1
    %v1728 = vpop.permute.xlu0 %1727
    %v1731 = vadd.f32 %v1717, %v1726
    %v1732 = vadd.f32 %v1718, %v1728
    %s1733 = sld [smem:[#allocation6 + $0x2a]]
    %v1734 = vstv %s1733
    %v1735 = vmul.f32 %v1734, %v1571
    %v1736 = vmul.f32 %v1734, %v1572
    %v1739 = vrot.slane %v1735, 7
    %v1740 = vrot.slane %v1736, 7
    %v1741 = vsel %vm150, %v1739, %v1740
    %v1744 = vadd.f32 %v1731, %v1739
    %v1745 = vadd.f32 %v1732, %v1741
    %s1746 = sld [smem:[#allocation6 + $0x2c]]
    %v1747 = vstv %s1746
    %v1748 = vmul.f32 %v1747, %v1571
    %v1749 = vmul.f32 %v1747, %v1572
    %v1752 = vrot.slane %v1748, 7
    %v1753 = vrot.slane %v1749, 7
    %v1754 = vsel %vm150, %v1752, %v1753
    %1755 = vrot.lane.b32.xlu0 %v1752, 1
    %v1756 = vpop.permute.xlu0 %1755
    %1757 = vrot.lane.b32.xlu0 %v1754, 1
    %v1758 = vpop.permute.xlu0 %1757
    %v1761 = vadd.f32 %v1744, %v1756
    %v1762 = vadd.f32 %v1745, %v1758
    %s1763 = sld [smem:[#allocation6 + $0x31]]
    %v1764 = vstv %s1763
    %v1765 = vmul.f32 %v1764, %v1571
    %v1766 = vmul.f32 %v1764, %v1572
    %v1767 = vadd.f32 %v1479, %v1765
    %v1768 = vadd.f32 %v1480, %v1766
    %s1769 = sld [smem:[#allocation6 + $0x30]]
    %v1770 = vstv %s1769
    %v1771 = vmul.f32 %v1770, %v1571
    %v1772 = vmul.f32 %v1770, %v1572
    %v1773 = vadd.f32 %v1499, %v1771
    %v1774 = vadd.f32 %v1500, %v1772
    %s1775 = sld [smem:[#allocation6 + $0x32]]
    %v1776 = vstv %s1775
    %v1777 = vmul.f32 %v1776, %v1571
    %v1778 = vmul.f32 %v1776, %v1572
    %1781 = vrot.lane.b32.xlu0 %v1777, 1
    %v1782 = vpop.permute.xlu0 %1781
    %1783 = vrot.lane.b32.xlu0 %v1778, 1
    %v1784 = vpop.permute.xlu0 %1783
    %v1787 = vadd.f32 %v1773, %v1782
    %v1788 = vadd.f32 %v1774, %v1784
    %s1789 = sld [smem:[#allocation6 + $0x2e]]
    %v1790 = vstv %s1789
    %v1791 = vmul.f32 %v1790, %v1571
    %v1792 = vmul.f32 %v1790, %v1572
    %v1793 = vadd.f32 %v1518, %v1791
    %v1794 = vadd.f32 %v1519, %v1792
    %s1795 = sld [smem:[#allocation6 + $0x34]]
    %v1796 = vstv %s1795
    %v1797 = vmul.f32 %v1796, %v1571
    %v1798 = vmul.f32 %v1796, %v1572
    %v1801 = vrot.slane %v1797, 7
    %v1802 = vrot.slane %v1798, 7
    %v1803 = vsel %vm150, %v1801, %v1802
    %v1806 = vadd.f32 %v1793, %v1801
    %v1807 = vadd.f32 %v1794, %v1803
    %s1808 = sld [smem:[#allocation6 + $0x2d]]
    %v1809 = vstv %s1808
    %v1810 = vmul.f32 %v1809, %v1571
    %v1811 = vmul.f32 %v1809, %v1572
    %v1812 = vadd.f32 %v1568, %v1810
    %v1813 = vadd.f32 %v1569, %v1811
    %s1814 = sld [smem:[#allocation6 + $0x2f]]
    %v1815 = vstv %s1814
    %v1816 = vmul.f32 %v1815, %v1571
    %v1817 = vmul.f32 %v1815, %v1572
    %1820 = vrot.lane.b32.xlu0 %v1816, 1
    %v1821 = vpop.permute.xlu0 %1820
    %1822 = vrot.lane.b32.xlu0 %v1817, 1
    %v1823 = vpop.permute.xlu0 %1822
    %v1826 = vadd.f32 %v1812, %v1821
    %v1827 = vadd.f32 %v1813, %v1823
    %s1828 = sld [smem:[#allocation6 + $0x33]]
    %v1829 = vstv %s1828
    %v1830 = vmul.f32 %v1829, %v1571
    %v1831 = vmul.f32 %v1829, %v1572
    %v1834 = vrot.slane %v1830, 7
    %v1835 = vrot.slane %v1831, 7
    %v1836 = vsel %vm150, %v1834, %v1835
    %v1839 = vadd.f32 %v1826, %v1834
    %v1840 = vadd.f32 %v1827, %v1836
    %s1841 = sld [smem:[#allocation6 + $0x35]]
    %v1842 = vstv %s1841
    %v1843 = vmul.f32 %v1842, %v1571
    %v1844 = vmul.f32 %v1842, %v1572
    %v1847 = vrot.slane %v1843, 7
    %v1848 = vrot.slane %v1844, 7
    %v1849 = vsel %vm150, %v1847, %v1848
    %1850 = vrot.lane.b32.xlu0 %v1847, 1
    %v1851 = vpop.permute.xlu0 %1850
    %1852 = vrot.lane.b32.xlu0 %v1849, 1
    %v1853 = vpop.permute.xlu0 %1852
    %v1856 = vadd.f32 %v1839, %v1851
    %v1857 = vadd.f32 %v1840, %v1853
    %s1858 = scalar_lea.vmem [#allocation2], 80
    %v1859 = vld [vmem:[%s1858] sm:$0xff]
    %v1860 = vld [vmem:[%s1858 + $0x8] sm:$0xff]
    %s1861 = sld [smem:[#allocation6 + $0x3a]]
    %v1862 = vstv %s1861
    %v1863 = vmul.f32 %v1862, %v1859
    %v1864 = vmul.f32 %v1862, %v1860
    %v1865 = vadd.f32 %v1577, %v1863
    %v1866 = vadd.f32 %v1578, %v1864
    %s1867 = sld [smem:[#allocation6 + $0x39]]
    %v1868 = vstv %s1867
    %v1869 = vmul.f32 %v1868, %v1859
    %v1870 = vmul.f32 %v1868, %v1860
    %v1871 = vadd.f32 %v1597, %v1869
    %v1872 = vadd.f32 %v1598, %v1870
    %s1873 = sld [smem:[#allocation6 + $0x3b]]
    %v1874 = vstv %s1873
    %v1875 = vmul.f32 %v1874, %v1859
    %v1876 = vmul.f32 %v1874, %v1860
    %1879 = vrot.lane.b32.xlu0 %v1875, 1
    %v1880 = vpop.permute.xlu0 %1879
    %1881 = vrot.lane.b32.xlu0 %v1876, 1
    %v1882 = vpop.permute.xlu0 %1881
    %v1885 = vadd.f32 %v1871, %v1880
    %v1886 = vadd.f32 %v1872, %v1882
    %s1887 = sld [smem:[#allocation6 + $0x37]]
    %v1888 = vstv %s1887
    %v1889 = vmul.f32 %v1888, %v1859
    %v1890 = vmul.f32 %v1888, %v1860
    %v1891 = vadd.f32 %v1616, %v1889
    %v1892 = vadd.f32 %v1617, %v1890
    %s1893 = sld [smem:[#allocation6 + $0x3d]]
    %v1894 = vstv %s1893
    %v1895 = vmul.f32 %v1894, %v1859
    %v1896 = vmul.f32 %v1894, %v1860
    %v1899 = vrot.slane %v1895, 7
    %v1900 = vrot.slane %v1896, 7
    %v1901 = vsel %vm150, %v1899, %v1900
    %v1904 = vadd.f32 %v1891, %v1899
    %v1905 = vadd.f32 %v1892, %v1901
    %s1906 = sld [smem:[#allocation6 + $0x36]]
    %v1907 = vstv %s1906
    %v1908 = vmul.f32 %v1907, %v1859
    %v1909 = vmul.f32 %v1907, %v1860
    %v1910 = vadd.f32 %v1666, %v1908
    %v1911 = vadd.f32 %v1667, %v1909
    %s1912 = sld [smem:[#allocation6 + $0x38]]
    %v1913 = vstv %s1912
    %v1914 = vmul.f32 %v1913, %v1859
    %v1915 = vmul.f32 %v1913, %v1860
    %1918 = vrot.lane.b32.xlu0 %v1914, 1
    %v1919 = vpop.permute.xlu0 %1918
    %1920 = vrot.lane.b32.xlu0 %v1915, 1
    %v1921 = vpop.permute.xlu0 %1920
    %v1924 = vadd.f32 %v1910, %v1919
    %v1925 = vadd.f32 %v1911, %v1921
    %s1926 = sld [smem:[#allocation6 + $0x3c]]
    %v1927 = vstv %s1926
    %v1928 = vmul.f32 %v1927, %v1859
    %v1929 = vmul.f32 %v1927, %v1860
    %v1932 = vrot.slane %v1928, 7
    %v1933 = vrot.slane %v1929, 7
    %v1934 = vsel %vm150, %v1932, %v1933
    %v1937 = vadd.f32 %v1924, %v1932
    %v1938 = vadd.f32 %v1925, %v1934
    %s1939 = sld [smem:[#allocation6 + $0x3e]]
    %v1940 = vstv %s1939
    %v1941 = vmul.f32 %v1940, %v1859
    %v1942 = vmul.f32 %v1940, %v1860
    %v1945 = vrot.slane %v1941, 7
    %v1946 = vrot.slane %v1942, 7
    %v1947 = vsel %vm150, %v1945, %v1946
    %1948 = vrot.lane.b32.xlu0 %v1945, 1
    %v1949 = vpop.permute.xlu0 %1948
    %1950 = vrot.lane.b32.xlu0 %v1947, 1
    %v1951 = vpop.permute.xlu0 %1950
    %v1954 = vadd.f32 %v1937, %v1949
    %v1955 = vadd.f32 %v1938, %v1951
    %s1956 = sld [smem:[#allocation6 + $0x43]]
    %v1957 = vstv %s1956
    %v1958 = vmul.f32 %v1957, %v1859
    %v1959 = vmul.f32 %v1957, %v1860
    %v1960 = vadd.f32 %v1672, %v1958
    %v1961 = vadd.f32 %v1673, %v1959
    %s1962 = sld [smem:[#allocation6 + $0x42]]
    %v1963 = vstv %s1962
    %v1964 = vmul.f32 %v1963, %v1859
    %v1965 = vmul.f32 %v1963, %v1860
    %v1966 = vadd.f32 %v1692, %v1964
    %v1967 = vadd.f32 %v1693, %v1965
    %s1968 = sld [smem:[#allocation6 + $0x44]]
    %v1969 = vstv %s1968
    %v1970 = vmul.f32 %v1969, %v1859
    %v1971 = vmul.f32 %v1969, %v1860
    %1974 = vrot.lane.b32.xlu0 %v1970, 1
    %v1975 = vpop.permute.xlu0 %1974
    %1976 = vrot.lane.b32.xlu0 %v1971, 1
    %v1977 = vpop.permute.xlu0 %1976
    %v1980 = vadd.f32 %v1966, %v1975
    %v1981 = vadd.f32 %v1967, %v1977
    %s1982 = sld [smem:[#allocation6 + $0x40]]
    %v1983 = vstv %s1982
    %v1984 = vmul.f32 %v1983, %v1859
    %v1985 = vmul.f32 %v1983, %v1860
    %v1986 = vadd.f32 %v1711, %v1984
    %v1987 = vadd.f32 %v1712, %v1985
    %s1988 = sld [smem:[#allocation6 + $0x46]]
    %v1989 = vstv %s1988
    %v1990 = vmul.f32 %v1989, %v1859
    %v1991 = vmul.f32 %v1989, %v1860
    %v1994 = vrot.slane %v1990, 7
    %v1995 = vrot.slane %v1991, 7
    %v1996 = vsel %vm150, %v1994, %v1995
    %v1999 = vadd.f32 %v1986, %v1994
    %v2000 = vadd.f32 %v1987, %v1996
    %s2001 = sld [smem:[#allocation6 + $0x3f]]
    %v2002 = vstv %s2001
    %v2003 = vmul.f32 %v2002, %v1859
    %v2004 = vmul.f32 %v2002, %v1860
    %v2005 = vadd.f32 %v1761, %v2003
    %v2006 = vadd.f32 %v1762, %v2004
    %s2007 = sld [smem:[#allocation6 + $0x41]]
    %v2008 = vstv %s2007
    %v2009 = vmul.f32 %v2008, %v1859
    %v2010 = vmul.f32 %v2008, %v1860
    %2013 = vrot.lane.b32.xlu0 %v2009, 1
    %v2014 = vpop.permute.xlu0 %2013
    %2015 = vrot.lane.b32.xlu0 %v2010, 1
    %v2016 = vpop.permute.xlu0 %2015
    %v2019 = vadd.f32 %v2005, %v2014
    %v2020 = vadd.f32 %v2006, %v2016
    %s2021 = sld [smem:[#allocation6 + $0x45]]
    %v2022 = vstv %s2021
    %v2023 = vmul.f32 %v2022, %v1859
    %v2024 = vmul.f32 %v2022, %v1860
    %v2027 = vrot.slane %v2023, 7
    %v2028 = vrot.slane %v2024, 7
    %v2029 = vsel %vm150, %v2027, %v2028
    %v2032 = vadd.f32 %v2019, %v2027
    %v2033 = vadd.f32 %v2020, %v2029
    %s2034 = sld [smem:[#allocation6 + $0x47]]
    %v2035 = vstv %s2034
    %v2036 = vmul.f32 %v2035, %v1859
    %v2037 = vmul.f32 %v2035, %v1860
    %v2040 = vrot.slane %v2036, 7
    %v2041 = vrot.slane %v2037, 7
    %v2042 = vsel %vm150, %v2040, %v2041
    %2043 = vrot.lane.b32.xlu0 %v2040, 1
    %v2044 = vpop.permute.xlu0 %2043
    %2045 = vrot.lane.b32.xlu0 %v2042, 1
    %v2046 = vpop.permute.xlu0 %2045
    %v2049 = vadd.f32 %v2032, %v2044
    %v2050 = vadd.f32 %v2033, %v2046
    %s2051 = sld [smem:[#allocation6 + $0x4c]]
    %v2052 = vstv %s2051
    %v2053 = vmul.f32 %v2052, %v1859
    %v2054 = vmul.f32 %v2052, %v1860
    %v2055 = vadd.f32 %v1767, %v2053
    %v2056 = vadd.f32 %v1768, %v2054
    %s2057 = sld [smem:[#allocation6 + $0x4b]]
    %v2058 = vstv %s2057
    %v2059 = vmul.f32 %v2058, %v1859
    %v2060 = vmul.f32 %v2058, %v1860
    %v2061 = vadd.f32 %v1787, %v2059
    %v2062 = vadd.f32 %v1788, %v2060
    %s2063 = sld [smem:[#allocation6 + $0x4d]]
    %v2064 = vstv %s2063
    %v2065 = vmul.f32 %v2064, %v1859
    %v2066 = vmul.f32 %v2064, %v1860
    %2069 = vrot.lane.b32.xlu0 %v2065, 1
    %v2070 = vpop.permute.xlu0 %2069
    %2071 = vrot.lane.b32.xlu0 %v2066, 1
    %v2072 = vpop.permute.xlu0 %2071
    %v2075 = vadd.f32 %v2061, %v2070
    %v2076 = vadd.f32 %v2062, %v2072
    %s2077 = sld [smem:[#allocation6 + $0x49]]
    %v2078 = vstv %s2077
    %v2079 = vmul.f32 %v2078, %v1859
    %v2080 = vmul.f32 %v2078, %v1860
    %v2081 = vadd.f32 %v1806, %v2079
    %v2082 = vadd.f32 %v1807, %v2080
    %s2083 = sld [smem:[#allocation6 + $0x4f]]
    %v2084 = vstv %s2083
    %v2085 = vmul.f32 %v2084, %v1859
    %v2086 = vmul.f32 %v2084, %v1860
    %v2089 = vrot.slane %v2085, 7
    %v2090 = vrot.slane %v2086, 7
    %v2091 = vsel %vm150, %v2089, %v2090
    %v2094 = vadd.f32 %v2081, %v2089
    %v2095 = vadd.f32 %v2082, %v2091
    %s2096 = sld [smem:[#allocation6 + $0x48]]
    %v2097 = vstv %s2096
    %v2098 = vmul.f32 %v2097, %v1859
    %v2099 = vmul.f32 %v2097, %v1860
    %v2100 = vadd.f32 %v1856, %v2098
    %v2101 = vadd.f32 %v1857, %v2099
    %s2102 = sld [smem:[#allocation6 + $0x4a]]
    %v2103 = vstv %s2102
    %v2104 = vmul.f32 %v2103, %v1859
    %v2105 = vmul.f32 %v2103, %v1860
    %2108 = vrot.lane.b32.xlu0 %v2104, 1
    %v2109 = vpop.permute.xlu0 %2108
    %2110 = vrot.lane.b32.xlu0 %v2105, 1
    %v2111 = vpop.permute.xlu0 %2110
    %v2114 = vadd.f32 %v2100, %v2109
    %v2115 = vadd.f32 %v2101, %v2111
    %s2116 = sld [smem:[#allocation6 + $0x4e]]
    %v2117 = vstv %s2116
    %v2118 = vmul.f32 %v2117, %v1859
    %v2119 = vmul.f32 %v2117, %v1860
    %v2122 = vrot.slane %v2118, 7
    %v2123 = vrot.slane %v2119, 7
    %v2124 = vsel %vm150, %v2122, %v2123
    %v2127 = vadd.f32 %v2114, %v2122
    %v2128 = vadd.f32 %v2115, %v2124
    %s2129 = sld [smem:[#allocation6 + $0x50]]
    %v2130 = vstv %s2129
    %v2131 = vmul.f32 %v2130, %v1859
    %v2132 = vmul.f32 %v2130, %v1860
    %v2135 = vrot.slane %v2131, 7
    %v2136 = vrot.slane %v2132, 7
    %v2137 = vsel %vm150, %v2135, %v2136
    %2138 = vrot.lane.b32.xlu0 %v2135, 1
    %v2139 = vpop.permute.xlu0 %2138
    %2140 = vrot.lane.b32.xlu0 %v2137, 1
    %v2141 = vpop.permute.xlu0 %2140
    %v2144 = vadd.f32 %v2127, %v2139
    %v2145 = vadd.f32 %v2128, %v2141
    %v2146 = vmax.f32 %v1865, 0.0
    %v2147 = vmax.f32 %v1866, 0.0
    %v2148 = vsub.f32 0.0, %v2146
    %v2149 = vsub.f32 0.0, %v2147
    %v2150 = vmul.f32 %v2148, 1.442695
    %v2151 = vpow.pop %v2150
    %v2152 = vmul.f32 %v2149, 1.442695
    %v2153 = vpow.pop %v2152
    %v2154 = vadd.f32 %v2151, 1.0
    %v2155 = vadd.f32 %v2153, 1.0
    %v2156 = vrcp.pop %v2154
    %v2157 = vrcp.pop %v2155
    %v2158 = vmul.f32 %v2154, %v2156
    %v2159 = vmul.f32 %v2155, %v2157
    %v2160 = vsub.f32 2.0, %v2158
    %v2161 = vsub.f32 2.0, %v2159
    %v2162 = vmul.f32 %v2156, %v2160
    %v2163 = vmul.f32 %v2157, %v2161
    %s2164 = scalar_lea.vmem %s3, 192
    %2165 = vst.msk [vmem:[%s2164] sm:$0xff] %vm55, %v2162
    %2166 = vst.msk [vmem:[%s2164 + $0x8] sm:$0xff] %vm55, %v2163
    %v2167 = vmax.f32 %v1885, 0.0
    %v2168 = vmax.f32 %v1886, 0.0
    %v2169 = vsub.f32 0.0, %v2167
    %v2170 = vsub.f32 0.0, %v2168
    %v2171 = vmul.f32 %v2169, 1.442695
    %v2172 = vpow.pop %v2171
    %v2173 = vmul.f32 %v2170, 1.442695
    %v2174 = vpow.pop %v2173
    %v2175 = vadd.f32 %v2172, 1.0
    %v2176 = vadd.f32 %v2174, 1.0
    %v2177 = vrcp.pop %v2175
    %v2178 = vrcp.pop %v2176
    %v2179 = vmul.f32 %v2175, %v2177
    %v2180 = vmul.f32 %v2176, %v2178
    %v2181 = vsub.f32 2.0, %v2179
    %v2182 = vsub.f32 2.0, %v2180
    %v2183 = vmul.f32 %v2177, %v2181
    %v2184 = vmul.f32 %v2178, %v2182
    %2187 = vrot.lane.b32.xlu0 %v2183, 127
    %v2188 = vpop.permute.xlu0 %2187
    %2189 = vrot.lane.b32.xlu0 %v2184, 127
    %v2190 = vpop.permute.xlu0 %2189
    %s2193 = scalar_lea.vmem %s3, 208
    %2194 = vst.msk [vmem:[%s2193] sm:$0xff] %vm1021, %v2188
    %2195 = vst.msk [vmem:[%s2193 + $0x8] sm:$0xff] %vm1021, %v2190
    %v2196 = vmax.f32 %v1904, 0.0
    %v2197 = vmax.f32 %v1905, 0.0
    %v2198 = vsub.f32 0.0, %v2196
    %v2199 = vsub.f32 0.0, %v2197
    %v2200 = vmul.f32 %v2198, 1.442695
    %v2201 = vpow.pop %v2200
    %v2202 = vmul.f32 %v2199, 1.442695
    %v2203 = vpow.pop %v2202
    %v2204 = vadd.f32 %v2201, 1.0
    %v2205 = vadd.f32 %v2203, 1.0
    %v2206 = vrcp.pop %v2204
    %v2207 = vrcp.pop %v2205
    %v2208 = vmul.f32 %v2204, %v2206
    %v2209 = vmul.f32 %v2205, %v2207
    %v2210 = vsub.f32 2.0, %v2208
    %v2211 = vsub.f32 2.0, %v2209
    %v2212 = vmul.f32 %v2206, %v2210
    %v2213 = vmul.f32 %v2207, %v2211
    %s2214 = scalar_lea.vmem %s3, 224
    %2215 = vst.msk [vmem:[%s2214 - $0x1] sm:$0xfe] %vm1043, %v2212
    %2216 = vst.msk [vmem:[%s2214 + $0x7] sm:$0xff] %vm55, %v2213
    %v2217 = vmax.f32 %v1954, 0.0
    %v2218 = vmax.f32 %v1955, 0.0
    %v2219 = vsub.f32 0.0, %v2217
    %v2220 = vsub.f32 0.0, %v2218
    %v2221 = vmul.f32 %v2219, 1.442695
    %v2222 = vpow.pop %v2221
    %v2223 = vmul.f32 %v2220, 1.442695
    %v2224 = vpow.pop %v2223
    %v2225 = vadd.f32 %v2222, 1.0
    %v2226 = vadd.f32 %v2224, 1.0
    %v2227 = vrcp.pop %v2225
    %v2228 = vrcp.pop %v2226
    %v2229 = vmul.f32 %v2225, %v2227
    %v2230 = vmul.f32 %v2226, %v2228
    %v2231 = vsub.f32 2.0, %v2229
    %v2232 = vsub.f32 2.0, %v2230
    %v2233 = vmul.f32 %v2227, %v2231
    %v2234 = vmul.f32 %v2228, %v2232
    %2237 = vrot.lane.b32.xlu0 %v2233, 127
    %v2238 = vpop.permute.xlu0 %2237
    %2239 = vrot.lane.b32.xlu0 %v2234, 127
    %v2240 = vpop.permute.xlu0 %2239
    %s2243 = scalar_lea.vmem %s3, 240
    %2244 = vst.msk [vmem:[%s2243 - $0x1] sm:$0xfe] %vm1073, %v2238
    %2245 = vst.msk [vmem:[%s2243 + $0x7] sm:$0xff] %vm1021, %v2240
    %v2246 = vmax.f32 %v1960, 0.0
    %v2247 = vmax.f32 %v1961, 0.0
    %v2248 = vsub.f32 0.0, %v2246
    %v2249 = vsub.f32 0.0, %v2247
    %v2250 = vmul.f32 %v2248, 1.442695
    %v2251 = vpow.pop %v2250
    %v2252 = vmul.f32 %v2249, 1.442695
    %v2253 = vpow.pop %v2252
    %v2254 = vadd.f32 %v2251, 1.0
    %v2255 = vadd.f32 %v2253, 1.0
    %v2256 = vrcp.pop %v2254
    %v2257 = vrcp.pop %v2255
    %v2258 = vmul.f32 %v2254, %v2256
    %v2259 = vmul.f32 %v2255, %v2257
    %v2260 = vsub.f32 2.0, %v2258
    %v2261 = vsub.f32 2.0, %v2259
    %v2262 = vmul.f32 %v2256, %v2260
    %v2263 = vmul.f32 %v2257, %v2261
    %s2264 = scalar_lea.vmem %s3, 256
    %2265 = vst.msk [vmem:[%s2264] sm:$0xff] %vm55, %v2262
    %2266 = vst.msk [vmem:[%s2264 + $0x8] sm:$0xff] %vm55, %v2263
    %v2267 = vmax.f32 %v1980, 0.0
    %v2268 = vmax.f32 %v1981, 0.0
    %v2269 = vsub.f32 0.0, %v2267
    %v2270 = vsub.f32 0.0, %v2268
    %v2271 = vmul.f32 %v2269, 1.442695
    %v2272 = vpow.pop %v2271
    %v2273 = vmul.f32 %v2270, 1.442695
    %v2274 = vpow.pop %v2273
    %v2275 = vadd.f32 %v2272, 1.0
    %v2276 = vadd.f32 %v2274, 1.0
    %v2277 = vrcp.pop %v2275
    %v2278 = vrcp.pop %v2276
    %v2279 = vmul.f32 %v2275, %v2277
    %v2280 = vmul.f32 %v2276, %v2278
    %v2281 = vsub.f32 2.0, %v2279
    %v2282 = vsub.f32 2.0, %v2280
    %v2283 = vmul.f32 %v2277, %v2281
    %v2284 = vmul.f32 %v2278, %v2282
    %2287 = vrot.lane.b32.xlu0 %v2283, 127
    %v2288 = vpop.permute.xlu0 %2287
    %2289 = vrot.lane.b32.xlu0 %v2284, 127
    %v2290 = vpop.permute.xlu0 %2289
    %s2293 = scalar_lea.vmem %s3, 272
    %2294 = vst.msk [vmem:[%s2293] sm:$0xff] %vm1021, %v2288
    %2295 = vst.msk [vmem:[%s2293 + $0x8] sm:$0xff] %vm1021, %v2290
    %v2296 = vmax.f32 %v1999, 0.0
    %v2297 = vmax.f32 %v2000, 0.0
    %v2298 = vsub.f32 0.0, %v2296
    %v2299 = vsub.f32 0.0, %v2297
    %v2300 = vmul.f32 %v2298, 1.442695
    %v2301 = vpow.pop %v2300
    %v2302 = vmul.f32 %v2299, 1.442695
    %v2303 = vpow.pop %v2302
    %v2304 = vadd.f32 %v2301, 1.0
    %v2305 = vadd.f32 %v2303, 1.0
    %v2306 = vrcp.pop %v2304
    %v2307 = vrcp.pop %v2305
    %v2308 = vmul.f32 %v2304, %v2306
    %v2309 = vmul.f32 %v2305, %v2307
    %v2310 = vsub.f32 2.0, %v2308
    %v2311 = vsub.f32 2.0, %v2309
    %v2312 = vmul.f32 %v2306, %v2310
    %v2313 = vmul.f32 %v2307, %v2311
    %s2314 = scalar_lea.vmem %s3, 288
    %2315 = vst.msk [vmem:[%s2314 - $0x1] sm:$0xfe] %vm1043, %v2312
    %2316 = vst.msk [vmem:[%s2314 + $0x7] sm:$0xff] %vm55, %v2313
    %v2317 = vmax.f32 %v2049, 0.0
    %v2318 = vmax.f32 %v2050, 0.0
    %v2319 = vsub.f32 0.0, %v2317
    %v2320 = vsub.f32 0.0, %v2318
    %v2321 = vmul.f32 %v2319, 1.442695
    %v2322 = vpow.pop %v2321
    %v2323 = vmul.f32 %v2320, 1.442695
    %v2324 = vpow.pop %v2323
    %v2325 = vadd.f32 %v2322, 1.0
    %v2326 = vadd.f32 %v2324, 1.0
    %v2327 = vrcp.pop %v2325
    %v2328 = vrcp.pop %v2326
    %v2329 = vmul.f32 %v2325, %v2327
    %v2330 = vmul.f32 %v2326, %v2328
    %v2331 = vsub.f32 2.0, %v2329
    %v2332 = vsub.f32 2.0, %v2330
    %v2333 = vmul.f32 %v2327, %v2331
    %v2334 = vmul.f32 %v2328, %v2332
    %2337 = vrot.lane.b32.xlu0 %v2333, 127
    %v2338 = vpop.permute.xlu0 %2337
    %2339 = vrot.lane.b32.xlu0 %v2334, 127
    %v2340 = vpop.permute.xlu0 %2339
    %s2343 = scalar_lea.vmem %s3, 304
    %2344 = vst.msk [vmem:[%s2343 - $0x1] sm:$0xfe] %vm1073, %v2338
    %2345 = vst.msk [vmem:[%s2343 + $0x7] sm:$0xff] %vm1021, %v2340
    %v2346 = vmax.f32 %v2055, 0.0
    %v2347 = vmax.f32 %v2056, 0.0
    %v2348 = vsub.f32 0.0, %v2346
    %v2349 = vsub.f32 0.0, %v2347
    %v2350 = vmul.f32 %v2348, 1.442695
    %v2351 = vpow.pop %v2350
    %v2352 = vmul.f32 %v2349, 1.442695
    %v2353 = vpow.pop %v2352
    %v2354 = vadd.f32 %v2351, 1.0
    %v2355 = vadd.f32 %v2353, 1.0
    %v2356 = vrcp.pop %v2354
    %v2357 = vrcp.pop %v2355
    %v2358 = vmul.f32 %v2354, %v2356
    %v2359 = vmul.f32 %v2355, %v2357
    %v2360 = vsub.f32 2.0, %v2358
    %v2361 = vsub.f32 2.0, %v2359
    %v2362 = vmul.f32 %v2356, %v2360
    %v2363 = vmul.f32 %v2357, %v2361
    %s2364 = scalar_lea.vmem %s3, 320
    %2365 = vst.msk [vmem:[%s2364] sm:$0xff] %vm55, %v2362
    %2366 = vst.msk [vmem:[%s2364 + $0x8] sm:$0xff] %vm55, %v2363
    %v2367 = vmax.f32 %v2075, 0.0
    %v2368 = vmax.f32 %v2076, 0.0
    %v2369 = vsub.f32 0.0, %v2367
    %v2370 = vsub.f32 0.0, %v2368
    %v2371 = vmul.f32 %v2369, 1.442695
    %v2372 = vpow.pop %v2371
    %v2373 = vmul.f32 %v2370, 1.442695
    %v2374 = vpow.pop %v2373
    %v2375 = vadd.f32 %v2372, 1.0
    %v2376 = vadd.f32 %v2374, 1.0
    %v2377 = vrcp.pop %v2375
    %v2378 = vrcp.pop %v2376
    %v2379 = vmul.f32 %v2375, %v2377
    %v2380 = vmul.f32 %v2376, %v2378
    %v2381 = vsub.f32 2.0, %v2379
    %v2382 = vsub.f32 2.0, %v2380
    %v2383 = vmul.f32 %v2377, %v2381
    %v2384 = vmul.f32 %v2378, %v2382
    %2387 = vrot.lane.b32.xlu0 %v2383, 127
    %v2388 = vpop.permute.xlu0 %2387
    %2389 = vrot.lane.b32.xlu0 %v2384, 127
    %v2390 = vpop.permute.xlu0 %2389
    %s2393 = scalar_lea.vmem %s3, 336
    %2394 = vst.msk [vmem:[%s2393] sm:$0xff] %vm1021, %v2388
    %2395 = vst.msk [vmem:[%s2393 + $0x8] sm:$0xff] %vm1021, %v2390
    %v2396 = vmax.f32 %v2094, 0.0
    %v2397 = vmax.f32 %v2095, 0.0
    %v2398 = vsub.f32 0.0, %v2396
    %v2399 = vsub.f32 0.0, %v2397
    %v2400 = vmul.f32 %v2398, 1.442695
    %v2401 = vpow.pop %v2400
    %v2402 = vmul.f32 %v2399, 1.442695
    %v2403 = vpow.pop %v2402
    %v2404 = vadd.f32 %v2401, 1.0
    %v2405 = vadd.f32 %v2403, 1.0
    %v2406 = vrcp.pop %v2404
    %v2407 = vrcp.pop %v2405
    %v2408 = vmul.f32 %v2404, %v2406
    %v2409 = vmul.f32 %v2405, %v2407
    %v2410 = vsub.f32 2.0, %v2408
    %v2411 = vsub.f32 2.0, %v2409
    %v2412 = vmul.f32 %v2406, %v2410
    %v2413 = vmul.f32 %v2407, %v2411
    %s2414 = scalar_lea.vmem %s3, 352
    %2415 = vst.msk [vmem:[%s2414 - $0x1] sm:$0xfe] %vm1043, %v2412
    %2416 = vst.msk [vmem:[%s2414 + $0x7] sm:$0xff] %vm55, %v2413
    %v2417 = vmax.f32 %v2144, 0.0
    %v2418 = vmax.f32 %v2145, 0.0
    %v2419 = vsub.f32 0.0, %v2417
    %v2420 = vsub.f32 0.0, %v2418
    %v2421 = vmul.f32 %v2419, 1.442695
    %v2422 = vpow.pop %v2421
    %v2423 = vmul.f32 %v2420, 1.442695
    %v2424 = vpow.pop %v2423
    %v2425 = vadd.f32 %v2422, 1.0
    %v2426 = vadd.f32 %v2424, 1.0
    %v2427 = vrcp.pop %v2425
    %v2428 = vrcp.pop %v2426
    %v2429 = vmul.f32 %v2425, %v2427
    %v2430 = vmul.f32 %v2426, %v2428
    %v2431 = vsub.f32 2.0, %v2429
    %v2432 = vsub.f32 2.0, %v2430
    %v2433 = vmul.f32 %v2427, %v2431
    %v2434 = vmul.f32 %v2428, %v2432
    %2437 = vrot.lane.b32.xlu0 %v2433, 127
    %v2438 = vpop.permute.xlu0 %2437
    %2439 = vrot.lane.b32.xlu0 %v2434, 127
    %v2440 = vpop.permute.xlu0 %2439
    %s2443 = scalar_lea.vmem %s3, 368
    %2444 = vst.msk [vmem:[%s2443 - $0x1] sm:$0xfe] %vm1073, %v2438
    %2445 = vst.msk [vmem:[%s2443 + $0x7] sm:$0xff] %vm1021, %v2440
    // Predicated region
    $region26: #{conv_transpose_relu_sigmoid.1} parent=1 // pred_check
      _
    $region27: #{conv_transpose_relu_sigmoid.1} parent=1 // pred_check_branch
      %2447 = sbr.rel (0) target = $region29
    $region28: #{conv_transpose_relu_sigmoid.1} parent=1 // pred_region
      _
    $region29: #{conv_transpose_relu_sigmoid.1} parent=1 // pred_fallthru
      _
    // Predicated region
    $region30: #{conv_transpose_relu_sigmoid.1} parent=1 // pred_check
      _
    $region31: #{conv_transpose_relu_sigmoid.1} parent=1 // pred_check_branch
      %2449 = sbr.rel (0) target = $region33
    $region32: #{conv_transpose_relu_sigmoid.1} parent=1 // pred_region
      _
    $region33: #{conv_transpose_relu_sigmoid.1} parent=1 // pred_fallthru
      _
    %2450 = vsyncpa [#allocation3], 1
    %2451 = vsyncpa [#allocation4], 1
    %2452 = vsyncpa [#allocation5], 1

</llo_original>
